<compile_context>
chip_gen: v5e
topology: v5e:2x2
jax: 0.10.0
libtpu: 0.0.40
codegen_flags: <defaults>
</compile_context>

<pallas_src>
from functools import partial

import jax
import jax.numpy as jnp
from jax import lax
from jax.experimental import pallas as pl
from jax.experimental.pallas import tpu as pltpu

LANE = 128  # lane-aligned gate slab width (>= H)


def _sigmoid(v):
    # Exact logistic via tanh: one EUP op per gate on the recurrent critical path.
    return 0.5 * jnp.tanh(0.5 * v) + 0.5


def lstm_fused_kernel(x_ref, wi_ref, wh_ref, b_ref, wfc_ref, bfc_ref,
                      out_ref, xproj_ref):
    """Fused LSTM forward (input projection + recurrence + fc + sigmoid).

    x_ref    : (B, T, D)     raw batch-first input (unpadded)
    wi_ref   : (D, 4*Hp)     W_ih^T, gate-slab padded
    wh_ref   : (Hp, 4*Hp)    W_hh^T, gate-slab padded (pad rows/lanes are zero)
    b_ref    : (1, 4*Hp)     b_ih + b_hh, gate-slab padded
    wfc_ref  : (Hp, LANE)    fc weight (column 0 real, rest zero)
    bfc_ref  : (1, LANE)     fc bias   (lane 0 real, rest zero)
    out_ref  : (B, LANE)     sigmoid(fc(h_T)) stored into a lane-dense slab
    xproj_ref: (T, B, 4*Hp)  VMEM scratch holding the hoisted input projection
    """
    B, T, D = x_ref.shape
    Hp = wh_ref.shape[0]

    # ---- Prologue: x @ W_ih^T + (b_ih + b_hh), computed once, off the recurrent path.
    #      D=4, so a handful of broadcast FMAs beats a K=4 MXU matmul (and is exact f32).
    for t in range(T):                                   # static, T is small
        acc = b_ref[...]                                 # (1, 4*Hp)
        for d in range(D):
            acc = acc + x_ref[:, t, d:d + 1] * wi_ref[d:d + 1, :]   # -> (B, 4*Hp)
        xproj_ref[t] = acc

    # ---- Recurrence: only h @ W_hh^T stays on the serial critical path.
    # TODO(synk): if a bundle dump shows the step is MXU/MRF-drain dominated, keep W_hh
    # stationary via pltpu.matmul_push_rhs/matmul_acc_lhs/matmul_pop and/or drop the Hp
    # gate padding (N 512 -> 256, recombining gates with pltpu.roll + a lane mask).
    def step(t, carry):
        h, c = carry
        # wh_ref is read inside the dot each step (not hoisted), so the (128,512) RHS is
        # streamed from VMEM instead of pinned across the unrolled loop (would be 64 vregs).
        gates = xproj_ref[t] + jnp.dot(h, wh_ref[...],
                                       preferred_element_type=jnp.float32)
        # 128-lane-aligned gate slabs (PyTorch order i, f, g, o).
        i_g = _sigmoid(gates[:, 0 * Hp:1 * Hp])
        f_g = _sigmoid(gates[:, 1 * Hp:2 * Hp])
        g_g = jnp.tanh(gates[:, 2 * Hp:3 * Hp])
        o_g = _sigmoid(gates[:, 3 * Hp:4 * Hp])
        c_new = f_g * c + i_g * g_g
        h_new = o_g * jnp.tanh(c_new)
        return h_new, c_new

    h0 = jnp.zeros((B, Hp), jnp.float32)
    c0 = jnp.zeros((B, Hp), jnp.float32)
    # Fully unrolled: lets the scheduler overlap EUP transcendentals of one step with
    # VPU/MXU work of the next.
    h_T, _ = lax.fori_loop(0, T, step, (h0, c0), unroll=True)

    # ---- Epilogue: Linear(H, 1) + sigmoid fused into the kernel; lane-dense output slab.
    logits = jnp.dot(h_T, wfc_ref[...], preferred_element_type=jnp.float32) + bfc_ref[...]
    out_ref[...] = _sigmoid(logits)


def _round_up(x, m):
    return (x + m - 1) // m * m


def prepare_params(w_ih, w_hh, b_ih, b_hh, w_fc, b_fc):
    """One-time weight preparation (static per model; NOT on the per-call path).

    Gate g occupies lanes [g*Hp, g*Hp + H); padded lanes/rows of wi/wh/b are zero so the
    padded h/c columns stay exactly 0 through the recurrence.
    """
    D = w_ih.shape[1]
    H = w_hh.shape[1]
    O = w_fc.shape[0]
    Hp = _round_up(H, LANE)  # 64 -> 128

    wi = jnp.transpose(w_ih).astype(jnp.float32).reshape(D, 4, H)
    wi_pad = jnp.pad(wi, ((0, 0), (0, 0), (0, Hp - H))).reshape(D, 4 * Hp)

    wh = jnp.transpose(w_hh).astype(jnp.float32).reshape(H, 4, H)
    wh_pad = jnp.pad(wh, ((0, Hp - H), (0, 0), (0, Hp - H))).reshape(Hp, 4 * Hp)

    b = (b_ih + b_hh).astype(jnp.float32).reshape(4, H)
    b_pad = jnp.pad(b, ((0, 0), (0, Hp - H))).reshape(1, 4 * Hp)

    wfc_pad = jnp.zeros((Hp, LANE), jnp.float32).at[:H, :O].set(
        jnp.transpose(w_fc).astype(jnp.float32))
    bfc_pad = jnp.zeros((1, LANE), jnp.float32).at[0, :O].set(b_fc.astype(jnp.float32))

    return wi_pad, wh_pad, b_pad, wfc_pad, bfc_pad


@partial(jax.jit, static_argnames=("output_size",))
def lstm_model_forward(x, wi_pad, wh_pad, b_pad, wfc_pad, bfc_pad, output_size=1):
    """x: (B, T, D); remaining args come from prepare_params (already padded/transposed)."""
    B, T, D = x.shape
    Hp = wh_pad.shape[0]

    # Single Pallas invocation; everything VMEM-resident (< 1 MiB total, fine on v5e/v6e/v7x).
    out = pl.pallas_call(
        lstm_fused_kernel,
        out_shape=jax.ShapeDtypeStruct((B, LANE), jnp.float32),
        in_specs=[pl.BlockSpec(memory_space=pltpu.MemorySpace.VMEM)] * 6,
        out_specs=pl.BlockSpec(memory_space=pltpu.MemorySpace.VMEM),
        scratch_shapes=[pltpu.VMEM((T, B, 4 * Hp), jnp.float32)],
    )(x.astype(jnp.float32), wi_pad, wh_pad, b_pad, wfc_pad, bfc_pad)

    # Only remaining per-call wrapper op: slice the (B, output_size) result out of the
    # lane-dense kernel output slab.
    return out[:, :output_size]


def reference_forward(x, w_ih, w_hh, b_ih, b_hh, w_fc, b_fc):
    """Pure-JAX reference matching torch.nn.LSTM + Linear + Sigmoid semantics."""
    B, T, D = x.shape
    H = w_hh.shape[1]
    HIGH = jax.lax.Precision.HIGHEST
    h = jnp.zeros((B, H), jnp.float32)
    c = jnp.zeros((B, H), jnp.float32)
    for t in range(T):
        gates = (jnp.dot(x[:, t, :], w_ih.T, precision=HIGH)
                 + jnp.dot(h, w_hh.T, precision=HIGH) + b_ih + b_hh)
        i_g = jax.nn.sigmoid(gates[:, 0:H])
        f_g = jax.nn.sigmoid(gates[:, H:2 * H])
        g_g = jnp.tanh(gates[:, 2 * H:3 * H])
        o_g = jax.nn.sigmoid(gates[:, 3 * H:4 * H])
        c = f_g * c + i_g * g_g
        h = o_g * jnp.tanh(c)
    return jax.nn.sigmoid(jnp.dot(h, w_fc.T, precision=HIGH) + b_fc)


if __name__ == "__main__":
    input_size = 4
    hidden_size = 64
    output_size = 1
    B, T = 2, 8

    key = jax.random.PRNGKey(0)
    keys = jax.random.split(key, 7)
    scale = 1.0 / jnp.sqrt(hidden_size)

    # Deterministic synthetic parameters (PyTorch nn.LSTM / nn.Linear shapes).
    w_ih = jax.random.uniform(keys[0], (4 * hidden_size, input_size),
                              jnp.float32, -scale, scale)
    w_hh = jax.random.uniform(keys[1], (4 * hidden_size, hidden_size),
                              jnp.float32, -scale, scale)
    b_ih = jax.random.uniform(keys[2], (4 * hidden_size,), jnp.float32, -scale, scale)
    b_hh = jax.random.uniform(keys[3], (4 * hidden_size,), jnp.float32, -scale, scale)
    w_fc = jax.random.uniform(keys[4], (output_size, hidden_size),
                              jnp.float32, -scale, scale)
    b_fc = jax.random.uniform(keys[5], (output_size,), jnp.float32, -scale, scale)

    x = jax.random.normal(keys[6], (B, T, input_size), jnp.float32)

    # One-time weight preparation (static; off the per-call path).
    wi_pad, wh_pad, b_pad, wfc_pad, bfc_pad = prepare_params(
        w_ih, w_hh, b_ih, b_hh, w_fc, b_fc)
    wi_pad, wh_pad, b_pad, wfc_pad, bfc_pad = jax.block_until_ready(
        (wi_pad, wh_pad, b_pad, wfc_pad, bfc_pad))

    out = lstm_model_forward(x, wi_pad, wh_pad, b_pad, wfc_pad, bfc_pad,
                             output_size=output_size)
    out = jax.block_until_ready(out)

    ref = reference_forward(x, w_ih, w_hh, b_ih, b_hh, w_fc, b_fc)
    assert out.shape == (B, output_size), out.shape
    assert jnp.allclose(out, ref, atol=2e-5, rtol=2e-5), (out, ref)

    print("KERNEL_OK")
</pallas_src>

<mosaic_0001>
module attributes {stable_mosaic.version = 11 : i64} {
  func.func @lstm_fused_kernel(%arg0: memref<2x8x4xf32, #tpu.memory_space<vmem>>, %arg1: memref<4x512xf32, #tpu.memory_space<vmem>>, %arg2: memref<128x512xf32, #tpu.memory_space<vmem>>, %arg3: memref<1x512xf32, #tpu.memory_space<vmem>>, %arg4: memref<128x128xf32, #tpu.memory_space<vmem>>, %arg5: memref<1x128xf32, #tpu.memory_space<vmem>>, %arg6: memref<2x128xf32, #tpu.memory_space<vmem>>, %arg7: memref<8x2x512xf32, #tpu.memory_space<vmem>>) attributes {dimension_semantics = [], scalar_prefetch = 0 : i64, scratch_operands = 1 : i64, tpu.core_type = #tpu.core_type<tc>} {
    %c0 = arith.constant 0 : index
    %c0_0 = arith.constant 0 : index
    %0 = vector.load %arg3[%c0, %c0_0] : memref<1x512xf32, #tpu.memory_space<vmem>>, vector<1x512xf32>
    %c0_1 = arith.constant 0 : index
    %c0_2 = arith.constant 0 : index
    %c0_3 = arith.constant 0 : index
    %1 = vector.load %arg0[%c0_1, %c0_2, %c0_3] : memref<2x8x4xf32, #tpu.memory_space<vmem>>, vector<2x1x1xf32>
    %2 = vector.shape_cast %1 : vector<2x1x1xf32> to vector<2x1xf32>
    %c0_4 = arith.constant 0 : index
    %c0_5 = arith.constant 0 : index
    %3 = vector.load %arg1[%c0_4, %c0_5] : memref<4x512xf32, #tpu.memory_space<vmem>>, vector<1x512xf32>
    %4 = vector.broadcast %2 : vector<2x1xf32> to vector<2x512xf32>
    %5 = vector.broadcast %3 : vector<1x512xf32> to vector<2x512xf32>
    %6 = arith.mulf %4, %5 : vector<2x512xf32>
    %7 = vector.broadcast %0 : vector<1x512xf32> to vector<2x512xf32>
    %8 = arith.addf %7, %6 : vector<2x512xf32>
    %c0_6 = arith.constant 0 : index
    %c0_7 = arith.constant 0 : index
    %c1 = arith.constant 1 : index
    %9 = vector.load %arg0[%c0_6, %c0_7, %c1] : memref<2x8x4xf32, #tpu.memory_space<vmem>>, vector<2x1x1xf32>
    %10 = vector.shape_cast %9 : vector<2x1x1xf32> to vector<2x1xf32>
    %c1_8 = arith.constant 1 : index
    %c0_9 = arith.constant 0 : index
    %11 = vector.load %arg1[%c1_8, %c0_9] : memref<4x512xf32, #tpu.memory_space<vmem>>, vector<1x512xf32>
    %12 = vector.broadcast %10 : vector<2x1xf32> to vector<2x512xf32>
    %13 = vector.broadcast %11 : vector<1x512xf32> to vector<2x512xf32>
    %14 = arith.mulf %12, %13 : vector<2x512xf32>
    %15 = arith.addf %8, %14 : vector<2x512xf32>
    %c0_10 = arith.constant 0 : index
    %c0_11 = arith.constant 0 : index
    %c2 = arith.constant 2 : index
    %16 = vector.load %arg0[%c0_10, %c0_11, %c2] : memref<2x8x4xf32, #tpu.memory_space<vmem>>, vector<2x1x1xf32>
    %17 = vector.shape_cast %16 : vector<2x1x1xf32> to vector<2x1xf32>
    %c2_12 = arith.constant 2 : index
    %c0_13 = arith.constant 0 : index
    %18 = vector.load %arg1[%c2_12, %c0_13] : memref<4x512xf32, #tpu.memory_space<vmem>>, vector<1x512xf32>
    %19 = vector.broadcast %17 : vector<2x1xf32> to vector<2x512xf32>
    %20 = vector.broadcast %18 : vector<1x512xf32> to vector<2x512xf32>
    %21 = arith.mulf %19, %20 : vector<2x512xf32>
    %22 = arith.addf %15, %21 : vector<2x512xf32>
    %c0_14 = arith.constant 0 : index
    %c0_15 = arith.constant 0 : index
    %c3 = arith.constant 3 : index
    %23 = vector.load %arg0[%c0_14, %c0_15, %c3] : memref<2x8x4xf32, #tpu.memory_space<vmem>>, vector<2x1x1xf32>
    %24 = vector.shape_cast %23 : vector<2x1x1xf32> to vector<2x1xf32>
    %c3_16 = arith.constant 3 : index
    %c0_17 = arith.constant 0 : index
    %25 = vector.load %arg1[%c3_16, %c0_17] : memref<4x512xf32, #tpu.memory_space<vmem>>, vector<1x512xf32>
    %26 = vector.broadcast %24 : vector<2x1xf32> to vector<2x512xf32>
    %27 = vector.broadcast %25 : vector<1x512xf32> to vector<2x512xf32>
    %28 = arith.mulf %26, %27 : vector<2x512xf32>
    %29 = arith.addf %22, %28 : vector<2x512xf32>
    %c0_18 = arith.constant 0 : index
    %c0_19 = arith.constant 0 : index
    %c0_20 = arith.constant 0 : index
    %30 = vector.load %arg7[%c0_18, %c0_19, %c0_20] : memref<8x2x512xf32, #tpu.memory_space<vmem>>, vector<1x2x512xf32>
    %31 = vector.shape_cast %30 : vector<1x2x512xf32> to vector<2x512xf32>
    %32 = vector.shape_cast %29 : vector<2x512xf32> to vector<1x2x512xf32>
    tpu.vector_store %arg7[%c0_18, %c0_19, %c0_20], %32 {strides = array<i32>} : memref<8x2x512xf32, #tpu.memory_space<vmem>>, vector<1x2x512xf32>,
    %c0_21 = arith.constant 0 : index
    %c0_22 = arith.constant 0 : index
    %33 = vector.load %arg3[%c0_21, %c0_22] : memref<1x512xf32, #tpu.memory_space<vmem>>, vector<1x512xf32>
    %c0_23 = arith.constant 0 : index
    %c1_24 = arith.constant 1 : index
    %c0_25 = arith.constant 0 : index
    %34 = vector.load %arg0[%c0_23, %c1_24, %c0_25] : memref<2x8x4xf32, #tpu.memory_space<vmem>>, vector<2x1x1xf32>
    %35 = vector.shape_cast %34 : vector<2x1x1xf32> to vector<2x1xf32>
    %c0_26 = arith.constant 0 : index
    %c0_27 = arith.constant 0 : index
    %36 = vector.load %arg1[%c0_26, %c0_27] : memref<4x512xf32, #tpu.memory_space<vmem>>, vector<1x512xf32>
    %37 = vector.broadcast %35 : vector<2x1xf32> to vector<2x512xf32>
    %38 = vector.broadcast %36 : vector<1x512xf32> to vector<2x512xf32>
    %39 = arith.mulf %37, %38 : vector<2x512xf32>
    %40 = vector.broadcast %33 : vector<1x512xf32> to vector<2x512xf32>
    %41 = arith.addf %40, %39 : vector<2x512xf32>
    %c0_28 = arith.constant 0 : index
    %c1_29 = arith.constant 1 : index
    %c1_30 = arith.constant 1 : index
    %42 = vector.load %arg0[%c0_28, %c1_29, %c1_30] : memref<2x8x4xf32, #tpu.memory_space<vmem>>, vector<2x1x1xf32>
    %43 = vector.shape_cast %42 : vector<2x1x1xf32> to vector<2x1xf32>
    %c1_31 = arith.constant 1 : index
    %c0_32 = arith.constant 0 : index
    %44 = vector.load %arg1[%c1_31, %c0_32] : memref<4x512xf32, #tpu.memory_space<vmem>>, vector<1x512xf32>
    %45 = vector.broadcast %43 : vector<2x1xf32> to vector<2x512xf32>
    %46 = vector.broadcast %44 : vector<1x512xf32> to vector<2x512xf32>
    %47 = arith.mulf %45, %46 : vector<2x512xf32>
    %48 = arith.addf %41, %47 : vector<2x512xf32>
    %c0_33 = arith.constant 0 : index
    %c1_34 = arith.constant 1 : index
    %c2_35 = arith.constant 2 : index
    %49 = vector.load %arg0[%c0_33, %c1_34, %c2_35] : memref<2x8x4xf32, #tpu.memory_space<vmem>>, vector<2x1x1xf32>
    %50 = vector.shape_cast %49 : vector<2x1x1xf32> to vector<2x1xf32>
    %c2_36 = arith.constant 2 : index
    %c0_37 = arith.constant 0 : index
    %51 = vector.load %arg1[%c2_36, %c0_37] : memref<4x512xf32, #tpu.memory_space<vmem>>, vector<1x512xf32>
    %52 = vector.broadcast %50 : vector<2x1xf32> to vector<2x512xf32>
    %53 = vector.broadcast %51 : vector<1x512xf32> to vector<2x512xf32>
    %54 = arith.mulf %52, %53 : vector<2x512xf32>
    %55 = arith.addf %48, %54 : vector<2x512xf32>
    %c0_38 = arith.constant 0 : index
    %c1_39 = arith.constant 1 : index
    %c3_40 = arith.constant 3 : index
    %56 = vector.load %arg0[%c0_38, %c1_39, %c3_40] : memref<2x8x4xf32, #tpu.memory_space<vmem>>, vector<2x1x1xf32>
    %57 = vector.shape_cast %56 : vector<2x1x1xf32> to vector<2x1xf32>
    %c3_41 = arith.constant 3 : index
    %c0_42 = arith.constant 0 : index
    %58 = vector.load %arg1[%c3_41, %c0_42] : memref<4x512xf32, #tpu.memory_space<vmem>>, vector<1x512xf32>
    %59 = vector.broadcast %57 : vector<2x1xf32> to vector<2x512xf32>
    %60 = vector.broadcast %58 : vector<1x512xf32> to vector<2x512xf32>
    %61 = arith.mulf %59, %60 : vector<2x512xf32>
    %62 = arith.addf %55, %61 : vector<2x512xf32>
    %c1_43 = arith.constant 1 : index
    %c0_44 = arith.constant 0 : index
    %c0_45 = arith.constant 0 : index
    %63 = vector.load %arg7[%c1_43, %c0_44, %c0_45] : memref<8x2x512xf32, #tpu.memory_space<vmem>>, vector<1x2x512xf32>
    %64 = vector.shape_cast %63 : vector<1x2x512xf32> to vector<2x512xf32>
    %65 = vector.shape_cast %62 : vector<2x512xf32> to vector<1x2x512xf32>
    tpu.vector_store %arg7[%c1_43, %c0_44, %c0_45], %65 {strides = array<i32>} : memref<8x2x512xf32, #tpu.memory_space<vmem>>, vector<1x2x512xf32>,
    %c0_46 = arith.constant 0 : index
    %c0_47 = arith.constant 0 : index
    %66 = vector.load %arg3[%c0_46, %c0_47] : memref<1x512xf32, #tpu.memory_space<vmem>>, vector<1x512xf32>
    %c0_48 = arith.constant 0 : index
    %c2_49 = arith.constant 2 : index
    %c0_50 = arith.constant 0 : index
    %67 = vector.load %arg0[%c0_48, %c2_49, %c0_50] : memref<2x8x4xf32, #tpu.memory_space<vmem>>, vector<2x1x1xf32>
    %68 = vector.shape_cast %67 : vector<2x1x1xf32> to vector<2x1xf32>
    %c0_51 = arith.constant 0 : index
    %c0_52 = arith.constant 0 : index
    %69 = vector.load %arg1[%c0_51, %c0_52] : memref<4x512xf32, #tpu.memory_space<vmem>>, vector<1x512xf32>
    %70 = vector.broadcast %68 : vector<2x1xf32> to vector<2x512xf32>
    %71 = vector.broadcast %69 : vector<1x512xf32> to vector<2x512xf32>
    %72 = arith.mulf %70, %71 : vector<2x512xf32>
    %73 = vector.broadcast %66 : vector<1x512xf32> to vector<2x512xf32>
    %74 = arith.addf %73, %72 : vector<2x512xf32>
    %c0_53 = arith.constant 0 : index
    %c2_54 = arith.constant 2 : index
    %c1_55 = arith.constant 1 : index
    %75 = vector.load %arg0[%c0_53, %c2_54, %c1_55] : memref<2x8x4xf32, #tpu.memory_space<vmem>>, vector<2x1x1xf32>
    %76 = vector.shape_cast %75 : vector<2x1x1xf32> to vector<2x1xf32>
    %c1_56 = arith.constant 1 : index
    %c0_57 = arith.constant 0 : index
    %77 = vector.load %arg1[%c1_56, %c0_57] : memref<4x512xf32, #tpu.memory_space<vmem>>, vector<1x512xf32>
    %78 = vector.broadcast %76 : vector<2x1xf32> to vector<2x512xf32>
    %79 = vector.broadcast %77 : vector<1x512xf32> to vector<2x512xf32>
    %80 = arith.mulf %78, %79 : vector<2x512xf32>
    %81 = arith.addf %74, %80 : vector<2x512xf32>
    %c0_58 = arith.constant 0 : index
    %c2_59 = arith.constant 2 : index
    %c2_60 = arith.constant 2 : index
    %82 = vector.load %arg0[%c0_58, %c2_59, %c2_60] : memref<2x8x4xf32, #tpu.memory_space<vmem>>, vector<2x1x1xf32>
    %83 = vector.shape_cast %82 : vector<2x1x1xf32> to vector<2x1xf32>
    %c2_61 = arith.constant 2 : index
    %c0_62 = arith.constant 0 : index
    %84 = vector.load %arg1[%c2_61, %c0_62] : memref<4x512xf32, #tpu.memory_space<vmem>>, vector<1x512xf32>
    %85 = vector.broadcast %83 : vector<2x1xf32> to vector<2x512xf32>
    %86 = vector.broadcast %84 : vector<1x512xf32> to vector<2x512xf32>
    %87 = arith.mulf %85, %86 : vector<2x512xf32>
    %88 = arith.addf %81, %87 : vector<2x512xf32>
    %c0_63 = arith.constant 0 : index
    %c2_64 = arith.constant 2 : index
    %c3_65 = arith.constant 3 : index
    %89 = vector.load %arg0[%c0_63, %c2_64, %c3_65] : memref<2x8x4xf32, #tpu.memory_space<vmem>>, vector<2x1x1xf32>
    %90 = vector.shape_cast %89 : vector<2x1x1xf32> to vector<2x1xf32>
    %c3_66 = arith.constant 3 : index
    %c0_67 = arith.constant 0 : index
    %91 = vector.load %arg1[%c3_66, %c0_67] : memref<4x512xf32, #tpu.memory_space<vmem>>, vector<1x512xf32>
    %92 = vector.broadcast %90 : vector<2x1xf32> to vector<2x512xf32>
    %93 = vector.broadcast %91 : vector<1x512xf32> to vector<2x512xf32>
    %94 = arith.mulf %92, %93 : vector<2x512xf32>
    %95 = arith.addf %88, %94 : vector<2x512xf32>
    %c2_68 = arith.constant 2 : index
    %c0_69 = arith.constant 0 : index
    %c0_70 = arith.constant 0 : index
    %96 = vector.load %arg7[%c2_68, %c0_69, %c0_70] : memref<8x2x512xf32, #tpu.memory_space<vmem>>, vector<1x2x512xf32>
    %97 = vector.shape_cast %96 : vector<1x2x512xf32> to vector<2x512xf32>
    %98 = vector.shape_cast %95 : vector<2x512xf32> to vector<1x2x512xf32>
    tpu.vector_store %arg7[%c2_68, %c0_69, %c0_70], %98 {strides = array<i32>} : memref<8x2x512xf32, #tpu.memory_space<vmem>>, vector<1x2x512xf32>,
    %c0_71 = arith.constant 0 : index
    %c0_72 = arith.constant 0 : index
    %99 = vector.load %arg3[%c0_71, %c0_72] : memref<1x512xf32, #tpu.memory_space<vmem>>, vector<1x512xf32>
    %c0_73 = arith.constant 0 : index
    %c3_74 = arith.constant 3 : index
    %c0_75 = arith.constant 0 : index
    %100 = vector.load %arg0[%c0_73, %c3_74, %c0_75] : memref<2x8x4xf32, #tpu.memory_space<vmem>>, vector<2x1x1xf32>
    %101 = vector.shape_cast %100 : vector<2x1x1xf32> to vector<2x1xf32>
    %c0_76 = arith.constant 0 : index
    %c0_77 = arith.constant 0 : index
    %102 = vector.load %arg1[%c0_76, %c0_77] : memref<4x512xf32, #tpu.memory_space<vmem>>, vector<1x512xf32>
    %103 = vector.broadcast %101 : vector<2x1xf32> to vector<2x512xf32>
    %104 = vector.broadcast %102 : vector<1x512xf32> to vector<2x512xf32>
    %105 = arith.mulf %103, %104 : vector<2x512xf32>
    %106 = vector.broadcast %99 : vector<1x512xf32> to vector<2x512xf32>
    %107 = arith.addf %106, %105 : vector<2x512xf32>
    %c0_78 = arith.constant 0 : index
    %c3_79 = arith.constant 3 : index
    %c1_80 = arith.constant 1 : index
    %108 = vector.load %arg0[%c0_78, %c3_79, %c1_80] : memref<2x8x4xf32, #tpu.memory_space<vmem>>, vector<2x1x1xf32>
    %109 = vector.shape_cast %108 : vector<2x1x1xf32> to vector<2x1xf32>
    %c1_81 = arith.constant 1 : index
    %c0_82 = arith.constant 0 : index
    %110 = vector.load %arg1[%c1_81, %c0_82] : memref<4x512xf32, #tpu.memory_space<vmem>>, vector<1x512xf32>
    %111 = vector.broadcast %109 : vector<2x1xf32> to vector<2x512xf32>
    %112 = vector.broadcast %110 : vector<1x512xf32> to vector<2x512xf32>
    %113 = arith.mulf %111, %112 : vector<2x512xf32>
    %114 = arith.addf %107, %113 : vector<2x512xf32>
    %c0_83 = arith.constant 0 : index
    %c3_84 = arith.constant 3 : index
    %c2_85 = arith.constant 2 : index
    %115 = vector.load %arg0[%c0_83, %c3_84, %c2_85] : memref<2x8x4xf32, #tpu.memory_space<vmem>>, vector<2x1x1xf32>
    %116 = vector.shape_cast %115 : vector<2x1x1xf32> to vector<2x1xf32>
    %c2_86 = arith.constant 2 : index
    %c0_87 = arith.constant 0 : index
    %117 = vector.load %arg1[%c2_86, %c0_87] : memref<4x512xf32, #tpu.memory_space<vmem>>, vector<1x512xf32>
    %118 = vector.broadcast %116 : vector<2x1xf32> to vector<2x512xf32>
    %119 = vector.broadcast %117 : vector<1x512xf32> to vector<2x512xf32>
    %120 = arith.mulf %118, %119 : vector<2x512xf32>
    %121 = arith.addf %114, %120 : vector<2x512xf32>
    %c0_88 = arith.constant 0 : index
    %c3_89 = arith.constant 3 : index
    %c3_90 = arith.constant 3 : index
    %122 = vector.load %arg0[%c0_88, %c3_89, %c3_90] : memref<2x8x4xf32, #tpu.memory_space<vmem>>, vector<2x1x1xf32>
    %123 = vector.shape_cast %122 : vector<2x1x1xf32> to vector<2x1xf32>
    %c3_91 = arith.constant 3 : index
    %c0_92 = arith.constant 0 : index
    %124 = vector.load %arg1[%c3_91, %c0_92] : memref<4x512xf32, #tpu.memory_space<vmem>>, vector<1x512xf32>
    %125 = vector.broadcast %123 : vector<2x1xf32> to vector<2x512xf32>
    %126 = vector.broadcast %124 : vector<1x512xf32> to vector<2x512xf32>
    %127 = arith.mulf %125, %126 : vector<2x512xf32>
    %128 = arith.addf %121, %127 : vector<2x512xf32>
    %c3_93 = arith.constant 3 : index
    %c0_94 = arith.constant 0 : index
    %c0_95 = arith.constant 0 : index
    %129 = vector.load %arg7[%c3_93, %c0_94, %c0_95] : memref<8x2x512xf32, #tpu.memory_space<vmem>>, vector<1x2x512xf32>
    %130 = vector.shape_cast %129 : vector<1x2x512xf32> to vector<2x512xf32>
    %131 = vector.shape_cast %128 : vector<2x512xf32> to vector<1x2x512xf32>
    tpu.vector_store %arg7[%c3_93, %c0_94, %c0_95], %131 {strides = array<i32>} : memref<8x2x512xf32, #tpu.memory_space<vmem>>, vector<1x2x512xf32>,
    %c0_96 = arith.constant 0 : index
    %c0_97 = arith.constant 0 : index
    %132 = vector.load %arg3[%c0_96, %c0_97] : memref<1x512xf32, #tpu.memory_space<vmem>>, vector<1x512xf32>
    %c0_98 = arith.constant 0 : index
    %c4 = arith.constant 4 : index
    %c0_99 = arith.constant 0 : index
    %133 = vector.load %arg0[%c0_98, %c4, %c0_99] : memref<2x8x4xf32, #tpu.memory_space<vmem>>, vector<2x1x1xf32>
    %134 = vector.shape_cast %133 : vector<2x1x1xf32> to vector<2x1xf32>
    %c0_100 = arith.constant 0 : index
    %c0_101 = arith.constant 0 : index
    %135 = vector.load %arg1[%c0_100, %c0_101] : memref<4x512xf32, #tpu.memory_space<vmem>>, vector<1x512xf32>
    %136 = vector.broadcast %134 : vector<2x1xf32> to vector<2x512xf32>
    %137 = vector.broadcast %135 : vector<1x512xf32> to vector<2x512xf32>
    %138 = arith.mulf %136, %137 : vector<2x512xf32>
    %139 = vector.broadcast %132 : vector<1x512xf32> to vector<2x512xf32>
    %140 = arith.addf %139, %138 : vector<2x512xf32>
    %c0_102 = arith.constant 0 : index
    %c4_103 = arith.constant 4 : index
    %c1_104 = arith.constant 1 : index
    %141 = vector.load %arg0[%c0_102, %c4_103, %c1_104] : memref<2x8x4xf32, #tpu.memory_space<vmem>>, vector<2x1x1xf32>
    %142 = vector.shape_cast %141 : vector<2x1x1xf32> to vector<2x1xf32>
    %c1_105 = arith.constant 1 : index
    %c0_106 = arith.constant 0 : index
    %143 = vector.load %arg1[%c1_105, %c0_106] : memref<4x512xf32, #tpu.memory_space<vmem>>, vector<1x512xf32>
    %144 = vector.broadcast %142 : vector<2x1xf32> to vector<2x512xf32>
    %145 = vector.broadcast %143 : vector<1x512xf32> to vector<2x512xf32>
    %146 = arith.mulf %144, %145 : vector<2x512xf32>
    %147 = arith.addf %140, %146 : vector<2x512xf32>
    %c0_107 = arith.constant 0 : index
    %c4_108 = arith.constant 4 : index
    %c2_109 = arith.constant 2 : index
    %148 = vector.load %arg0[%c0_107, %c4_108, %c2_109] : memref<2x8x4xf32, #tpu.memory_space<vmem>>, vector<2x1x1xf32>
    %149 = vector.shape_cast %148 : vector<2x1x1xf32> to vector<2x1xf32>
    %c2_110 = arith.constant 2 : index
    %c0_111 = arith.constant 0 : index
    %150 = vector.load %arg1[%c2_110, %c0_111] : memref<4x512xf32, #tpu.memory_space<vmem>>, vector<1x512xf32>
    %151 = vector.broadcast %149 : vector<2x1xf32> to vector<2x512xf32>
    %152 = vector.broadcast %150 : vector<1x512xf32> to vector<2x512xf32>
    %153 = arith.mulf %151, %152 : vector<2x512xf32>
    %154 = arith.addf %147, %153 : vector<2x512xf32>
    %c0_112 = arith.constant 0 : index
    %c4_113 = arith.constant 4 : index
    %c3_114 = arith.constant 3 : index
    %155 = vector.load %arg0[%c0_112, %c4_113, %c3_114] : memref<2x8x4xf32, #tpu.memory_space<vmem>>, vector<2x1x1xf32>
    %156 = vector.shape_cast %155 : vector<2x1x1xf32> to vector<2x1xf32>
    %c3_115 = arith.constant 3 : index
    %c0_116 = arith.constant 0 : index
    %157 = vector.load %arg1[%c3_115, %c0_116] : memref<4x512xf32, #tpu.memory_space<vmem>>, vector<1x512xf32>
    %158 = vector.broadcast %156 : vector<2x1xf32> to vector<2x512xf32>
    %159 = vector.broadcast %157 : vector<1x512xf32> to vector<2x512xf32>
    %160 = arith.mulf %158, %159 : vector<2x512xf32>
    %161 = arith.addf %154, %160 : vector<2x512xf32>
    %c4_117 = arith.constant 4 : index
    %c0_118 = arith.constant 0 : index
    %c0_119 = arith.constant 0 : index
    %162 = vector.load %arg7[%c4_117, %c0_118, %c0_119] : memref<8x2x512xf32, #tpu.memory_space<vmem>>, vector<1x2x512xf32>
    %163 = vector.shape_cast %162 : vector<1x2x512xf32> to vector<2x512xf32>
    %164 = vector.shape_cast %161 : vector<2x512xf32> to vector<1x2x512xf32>
    tpu.vector_store %arg7[%c4_117, %c0_118, %c0_119], %164 {strides = array<i32>} : memref<8x2x512xf32, #tpu.memory_space<vmem>>, vector<1x2x512xf32>,
    %c0_120 = arith.constant 0 : index
    %c0_121 = arith.constant 0 : index
    %165 = vector.load %arg3[%c0_120, %c0_121] : memref<1x512xf32, #tpu.memory_space<vmem>>, vector<1x512xf32>
    %c0_122 = arith.constant 0 : index
    %c5 = arith.constant 5 : index
    %c0_123 = arith.constant 0 : index
    %166 = vector.load %arg0[%c0_122, %c5, %c0_123] : memref<2x8x4xf32, #tpu.memory_space<vmem>>, vector<2x1x1xf32>
    %167 = vector.shape_cast %166 : vector<2x1x1xf32> to vector<2x1xf32>
    %c0_124 = arith.constant 0 : index
    %c0_125 = arith.constant 0 : index
    %168 = vector.load %arg1[%c0_124, %c0_125] : memref<4x512xf32, #tpu.memory_space<vmem>>, vector<1x512xf32>
    %169 = vector.broadcast %167 : vector<2x1xf32> to vector<2x512xf32>
    %170 = vector.broadcast %168 : vector<1x512xf32> to vector<2x512xf32>
    %171 = arith.mulf %169, %170 : vector<2x512xf32>
    %172 = vector.broadcast %165 : vector<1x512xf32> to vector<2x512xf32>
    %173 = arith.addf %172, %171 : vector<2x512xf32>
    %c0_126 = arith.constant 0 : index
    %c5_127 = arith.constant 5 : index
    %c1_128 = arith.constant 1 : index
    %174 = vector.load %arg0[%c0_126, %c5_127, %c1_128] : memref<2x8x4xf32, #tpu.memory_space<vmem>>, vector<2x1x1xf32>
    %175 = vector.shape_cast %174 : vector<2x1x1xf32> to vector<2x1xf32>
    %c1_129 = arith.constant 1 : index
    %c0_130 = arith.constant 0 : index
    %176 = vector.load %arg1[%c1_129, %c0_130] : memref<4x512xf32, #tpu.memory_space<vmem>>, vector<1x512xf32>
    %177 = vector.broadcast %175 : vector<2x1xf32> to vector<2x512xf32>
    %178 = vector.broadcast %176 : vector<1x512xf32> to vector<2x512xf32>
    %179 = arith.mulf %177, %178 : vector<2x512xf32>
    %180 = arith.addf %173, %179 : vector<2x512xf32>
    %c0_131 = arith.constant 0 : index
    %c5_132 = arith.constant 5 : index
    %c2_133 = arith.constant 2 : index
    %181 = vector.load %arg0[%c0_131, %c5_132, %c2_133] : memref<2x8x4xf32, #tpu.memory_space<vmem>>, vector<2x1x1xf32>
    %182 = vector.shape_cast %181 : vector<2x1x1xf32> to vector<2x1xf32>
    %c2_134 = arith.constant 2 : index
    %c0_135 = arith.constant 0 : index
    %183 = vector.load %arg1[%c2_134, %c0_135] : memref<4x512xf32, #tpu.memory_space<vmem>>, vector<1x512xf32>
    %184 = vector.broadcast %182 : vector<2x1xf32> to vector<2x512xf32>
    %185 = vector.broadcast %183 : vector<1x512xf32> to vector<2x512xf32>
    %186 = arith.mulf %184, %185 : vector<2x512xf32>
    %187 = arith.addf %180, %186 : vector<2x512xf32>
    %c0_136 = arith.constant 0 : index
    %c5_137 = arith.constant 5 : index
    %c3_138 = arith.constant 3 : index
    %188 = vector.load %arg0[%c0_136, %c5_137, %c3_138] : memref<2x8x4xf32, #tpu.memory_space<vmem>>, vector<2x1x1xf32>
    %189 = vector.shape_cast %188 : vector<2x1x1xf32> to vector<2x1xf32>
    %c3_139 = arith.constant 3 : index
    %c0_140 = arith.constant 0 : index
    %190 = vector.load %arg1[%c3_139, %c0_140] : memref<4x512xf32, #tpu.memory_space<vmem>>, vector<1x512xf32>
    %191 = vector.broadcast %189 : vector<2x1xf32> to vector<2x512xf32>
    %192 = vector.broadcast %190 : vector<1x512xf32> to vector<2x512xf32>
    %193 = arith.mulf %191, %192 : vector<2x512xf32>
    %194 = arith.addf %187, %193 : vector<2x512xf32>
    %c5_141 = arith.constant 5 : index
    %c0_142 = arith.constant 0 : index
    %c0_143 = arith.constant 0 : index
    %195 = vector.load %arg7[%c5_141, %c0_142, %c0_143] : memref<8x2x512xf32, #tpu.memory_space<vmem>>, vector<1x2x512xf32>
    %196 = vector.shape_cast %195 : vector<1x2x512xf32> to vector<2x512xf32>
    %197 = vector.shape_cast %194 : vector<2x512xf32> to vector<1x2x512xf32>
    tpu.vector_store %arg7[%c5_141, %c0_142, %c0_143], %197 {strides = array<i32>} : memref<8x2x512xf32, #tpu.memory_space<vmem>>, vector<1x2x512xf32>,
    %c0_144 = arith.constant 0 : index
    %c0_145 = arith.constant 0 : index
    %198 = vector.load %arg3[%c0_144, %c0_145] : memref<1x512xf32, #tpu.memory_space<vmem>>, vector<1x512xf32>
    %c0_146 = arith.constant 0 : index
    %c6 = arith.constant 6 : index
    %c0_147 = arith.constant 0 : index
    %199 = vector.load %arg0[%c0_146, %c6, %c0_147] : memref<2x8x4xf32, #tpu.memory_space<vmem>>, vector<2x1x1xf32>
    %200 = vector.shape_cast %199 : vector<2x1x1xf32> to vector<2x1xf32>
    %c0_148 = arith.constant 0 : index
    %c0_149 = arith.constant 0 : index
    %201 = vector.load %arg1[%c0_148, %c0_149] : memref<4x512xf32, #tpu.memory_space<vmem>>, vector<1x512xf32>
    %202 = vector.broadcast %200 : vector<2x1xf32> to vector<2x512xf32>
    %203 = vector.broadcast %201 : vector<1x512xf32> to vector<2x512xf32>
    %204 = arith.mulf %202, %203 : vector<2x512xf32>
    %205 = vector.broadcast %198 : vector<1x512xf32> to vector<2x512xf32>
    %206 = arith.addf %205, %204 : vector<2x512xf32>
    %c0_150 = arith.constant 0 : index
    %c6_151 = arith.constant 6 : index
    %c1_152 = arith.constant 1 : index
    %207 = vector.load %arg0[%c0_150, %c6_151, %c1_152] : memref<2x8x4xf32, #tpu.memory_space<vmem>>, vector<2x1x1xf32>
    %208 = vector.shape_cast %207 : vector<2x1x1xf32> to vector<2x1xf32>
    %c1_153 = arith.constant 1 : index
    %c0_154 = arith.constant 0 : index
    %209 = vector.load %arg1[%c1_153, %c0_154] : memref<4x512xf32, #tpu.memory_space<vmem>>, vector<1x512xf32>
    %210 = vector.broadcast %208 : vector<2x1xf32> to vector<2x512xf32>
    %211 = vector.broadcast %209 : vector<1x512xf32> to vector<2x512xf32>
    %212 = arith.mulf %210, %211 : vector<2x512xf32>
    %213 = arith.addf %206, %212 : vector<2x512xf32>
    %c0_155 = arith.constant 0 : index
    %c6_156 = arith.constant 6 : index
    %c2_157 = arith.constant 2 : index
    %214 = vector.load %arg0[%c0_155, %c6_156, %c2_157] : memref<2x8x4xf32, #tpu.memory_space<vmem>>, vector<2x1x1xf32>
    %215 = vector.shape_cast %214 : vector<2x1x1xf32> to vector<2x1xf32>
    %c2_158 = arith.constant 2 : index
    %c0_159 = arith.constant 0 : index
    %216 = vector.load %arg1[%c2_158, %c0_159] : memref<4x512xf32, #tpu.memory_space<vmem>>, vector<1x512xf32>
    %217 = vector.broadcast %215 : vector<2x1xf32> to vector<2x512xf32>
    %218 = vector.broadcast %216 : vector<1x512xf32> to vector<2x512xf32>
    %219 = arith.mulf %217, %218 : vector<2x512xf32>
    %220 = arith.addf %213, %219 : vector<2x512xf32>
    %c0_160 = arith.constant 0 : index
    %c6_161 = arith.constant 6 : index
    %c3_162 = arith.constant 3 : index
    %221 = vector.load %arg0[%c0_160, %c6_161, %c3_162] : memref<2x8x4xf32, #tpu.memory_space<vmem>>, vector<2x1x1xf32>
    %222 = vector.shape_cast %221 : vector<2x1x1xf32> to vector<2x1xf32>
    %c3_163 = arith.constant 3 : index
    %c0_164 = arith.constant 0 : index
    %223 = vector.load %arg1[%c3_163, %c0_164] : memref<4x512xf32, #tpu.memory_space<vmem>>, vector<1x512xf32>
    %224 = vector.broadcast %222 : vector<2x1xf32> to vector<2x512xf32>
    %225 = vector.broadcast %223 : vector<1x512xf32> to vector<2x512xf32>
    %226 = arith.mulf %224, %225 : vector<2x512xf32>
    %227 = arith.addf %220, %226 : vector<2x512xf32>
    %c6_165 = arith.constant 6 : index
    %c0_166 = arith.constant 0 : index
    %c0_167 = arith.constant 0 : index
    %228 = vector.load %arg7[%c6_165, %c0_166, %c0_167] : memref<8x2x512xf32, #tpu.memory_space<vmem>>, vector<1x2x512xf32>
    %229 = vector.shape_cast %228 : vector<1x2x512xf32> to vector<2x512xf32>
    %230 = vector.shape_cast %227 : vector<2x512xf32> to vector<1x2x512xf32>
    tpu.vector_store %arg7[%c6_165, %c0_166, %c0_167], %230 {strides = array<i32>} : memref<8x2x512xf32, #tpu.memory_space<vmem>>, vector<1x2x512xf32>,
    %c0_168 = arith.constant 0 : index
    %c0_169 = arith.constant 0 : index
    %231 = vector.load %arg3[%c0_168, %c0_169] : memref<1x512xf32, #tpu.memory_space<vmem>>, vector<1x512xf32>
    %c0_170 = arith.constant 0 : index
    %c7 = arith.constant 7 : index
    %c0_171 = arith.constant 0 : index
    %232 = vector.load %arg0[%c0_170, %c7, %c0_171] : memref<2x8x4xf32, #tpu.memory_space<vmem>>, vector<2x1x1xf32>
    %233 = vector.shape_cast %232 : vector<2x1x1xf32> to vector<2x1xf32>
    %c0_172 = arith.constant 0 : index
    %c0_173 = arith.constant 0 : index
    %234 = vector.load %arg1[%c0_172, %c0_173] : memref<4x512xf32, #tpu.memory_space<vmem>>, vector<1x512xf32>
    %235 = vector.broadcast %233 : vector<2x1xf32> to vector<2x512xf32>
    %236 = vector.broadcast %234 : vector<1x512xf32> to vector<2x512xf32>
    %237 = arith.mulf %235, %236 : vector<2x512xf32>
    %238 = vector.broadcast %231 : vector<1x512xf32> to vector<2x512xf32>
    %239 = arith.addf %238, %237 : vector<2x512xf32>
    %c0_174 = arith.constant 0 : index
    %c7_175 = arith.constant 7 : index
    %c1_176 = arith.constant 1 : index
    %240 = vector.load %arg0[%c0_174, %c7_175, %c1_176] : memref<2x8x4xf32, #tpu.memory_space<vmem>>, vector<2x1x1xf32>
    %241 = vector.shape_cast %240 : vector<2x1x1xf32> to vector<2x1xf32>
    %c1_177 = arith.constant 1 : index
    %c0_178 = arith.constant 0 : index
    %242 = vector.load %arg1[%c1_177, %c0_178] : memref<4x512xf32, #tpu.memory_space<vmem>>, vector<1x512xf32>
    %243 = vector.broadcast %241 : vector<2x1xf32> to vector<2x512xf32>
    %244 = vector.broadcast %242 : vector<1x512xf32> to vector<2x512xf32>
    %245 = arith.mulf %243, %244 : vector<2x512xf32>
    %246 = arith.addf %239, %245 : vector<2x512xf32>
    %c0_179 = arith.constant 0 : index
    %c7_180 = arith.constant 7 : index
    %c2_181 = arith.constant 2 : index
    %247 = vector.load %arg0[%c0_179, %c7_180, %c2_181] : memref<2x8x4xf32, #tpu.memory_space<vmem>>, vector<2x1x1xf32>
    %248 = vector.shape_cast %247 : vector<2x1x1xf32> to vector<2x1xf32>
    %c2_182 = arith.constant 2 : index
    %c0_183 = arith.constant 0 : index
    %249 = vector.load %arg1[%c2_182, %c0_183] : memref<4x512xf32, #tpu.memory_space<vmem>>, vector<1x512xf32>
    %250 = vector.broadcast %248 : vector<2x1xf32> to vector<2x512xf32>
    %251 = vector.broadcast %249 : vector<1x512xf32> to vector<2x512xf32>
    %252 = arith.mulf %250, %251 : vector<2x512xf32>
    %253 = arith.addf %246, %252 : vector<2x512xf32>
    %c0_184 = arith.constant 0 : index
    %c7_185 = arith.constant 7 : index
    %c3_186 = arith.constant 3 : index
    %254 = vector.load %arg0[%c0_184, %c7_185, %c3_186] : memref<2x8x4xf32, #tpu.memory_space<vmem>>, vector<2x1x1xf32>
    %255 = vector.shape_cast %254 : vector<2x1x1xf32> to vector<2x1xf32>
    %c3_187 = arith.constant 3 : index
    %c0_188 = arith.constant 0 : index
    %256 = vector.load %arg1[%c3_187, %c0_188] : memref<4x512xf32, #tpu.memory_space<vmem>>, vector<1x512xf32>
    %257 = vector.broadcast %255 : vector<2x1xf32> to vector<2x512xf32>
    %258 = vector.broadcast %256 : vector<1x512xf32> to vector<2x512xf32>
    %259 = arith.mulf %257, %258 : vector<2x512xf32>
    %260 = arith.addf %253, %259 : vector<2x512xf32>
    %c7_189 = arith.constant 7 : index
    %c0_190 = arith.constant 0 : index
    %c0_191 = arith.constant 0 : index
    %261 = vector.load %arg7[%c7_189, %c0_190, %c0_191] : memref<8x2x512xf32, #tpu.memory_space<vmem>>, vector<1x2x512xf32>
    %262 = vector.shape_cast %261 : vector<1x2x512xf32> to vector<2x512xf32>
    %263 = vector.shape_cast %260 : vector<2x512xf32> to vector<1x2x512xf32>
    tpu.vector_store %arg7[%c7_189, %c0_190, %c0_191], %263 {strides = array<i32>} : memref<8x2x512xf32, #tpu.memory_space<vmem>>, vector<1x2x512xf32>,
    %cst = arith.constant 0.000000e+00 : f32
    %264 = vector.broadcast %cst : f32 to vector<2x128xf32>
    %cst_192 = arith.constant 0.000000e+00 : f32
    %265 = vector.broadcast %cst_192 : f32 to vector<2x128xf32>
    %c0_i32 = arith.constant 0 : i32
    %266 = arith.index_cast %c0_i32 : i32 to index
    %c0_193 = arith.constant 0 : index
    %c0_194 = arith.constant 0 : index
    %267 = vector.load %arg7[%266, %c0_193, %c0_194] : memref<8x2x512xf32, #tpu.memory_space<vmem>>, vector<1x2x512xf32>
    %268 = vector.shape_cast %267 : vector<1x2x512xf32> to vector<2x512xf32>
    %c0_195 = arith.constant 0 : index
    %c0_196 = arith.constant 0 : index
    %269 = vector.load %arg2[%c0_195, %c0_196] : memref<128x512xf32, #tpu.memory_space<vmem>>, vector<128x512xf32>
    %cst_197 = arith.constant dense<0.000000e+00> : vector<2x512xf32>
    %270 = tpu.matmul %264, %269, %cst_197 {dimension_numbers = #tpu.dot_dimension_numbers<[1], [0], [0], [1], [0, 0, 1, 1], [], []>} : vector<2x128xf32>, vector<128x512xf32>, vector<2x512xf32> -> vector<2x512xf32>
    %271 = arith.addf %268, %270 : vector<2x512xf32>
    %272 = vector.extract_strided_slice %271 {offsets = [0, 0], sizes = [2, 128], strides = [1, 1]} : vector<2x512xf32> to vector<2x128xf32>
    %cst_198 = arith.constant 5.000000e-01 : f32
    %273 = vector.broadcast %cst_198 : f32 to vector<2x128xf32>
    %274 = arith.mulf %273, %272 : vector<2x128xf32>
    %275 = math.tanh %274 : vector<2x128xf32>
    %cst_199 = arith.constant 5.000000e-01 : f32
    %276 = vector.broadcast %cst_199 : f32 to vector<2x128xf32>
    %277 = arith.mulf %276, %275 : vector<2x128xf32>
    %cst_200 = arith.constant 5.000000e-01 : f32
    %278 = vector.broadcast %cst_200 : f32 to vector<2x128xf32>
    %279 = arith.addf %277, %278 : vector<2x128xf32>
    %280 = vector.extract_strided_slice %271 {offsets = [0, 128], sizes = [2, 128], strides = [1, 1]} : vector<2x512xf32> to vector<2x128xf32>
    %cst_201 = arith.constant 5.000000e-01 : f32
    %281 = vector.broadcast %cst_201 : f32 to vector<2x128xf32>
    %282 = arith.mulf %281, %280 : vector<2x128xf32>
    %283 = math.tanh %282 : vector<2x128xf32>
    %cst_202 = arith.constant 5.000000e-01 : f32
    %284 = vector.broadcast %cst_202 : f32 to vector<2x128xf32>
    %285 = arith.mulf %284, %283 : vector<2x128xf32>
    %cst_203 = arith.constant 5.000000e-01 : f32
    %286 = vector.broadcast %cst_203 : f32 to vector<2x128xf32>
    %287 = arith.addf %285, %286 : vector<2x128xf32>
    %288 = vector.extract_strided_slice %271 {offsets = [0, 256], sizes = [2, 128], strides = [1, 1]} : vector<2x512xf32> to vector<2x128xf32>
    %289 = math.tanh %288 : vector<2x128xf32>
    %290 = vector.extract_strided_slice %271 {offsets = [0, 384], sizes = [2, 128], strides = [1, 1]} : vector<2x512xf32> to vector<2x128xf32>
    %cst_204 = arith.constant 5.000000e-01 : f32
    %291 = vector.broadcast %cst_204 : f32 to vector<2x128xf32>
    %292 = arith.mulf %291, %290 : vector<2x128xf32>
    %293 = math.tanh %292 : vector<2x128xf32>
    %cst_205 = arith.constant 5.000000e-01 : f32
    %294 = vector.broadcast %cst_205 : f32 to vector<2x128xf32>
    %295 = arith.mulf %294, %293 : vector<2x128xf32>
    %cst_206 = arith.constant 5.000000e-01 : f32
    %296 = vector.broadcast %cst_206 : f32 to vector<2x128xf32>
    %297 = arith.addf %295, %296 : vector<2x128xf32>
    %298 = arith.mulf %287, %265 : vector<2x128xf32>
    %299 = arith.mulf %279, %289 : vector<2x128xf32>
    %300 = arith.addf %298, %299 : vector<2x128xf32>
    %301 = math.tanh %300 : vector<2x128xf32>
    %302 = arith.mulf %297, %301 : vector<2x128xf32>
    %c1_i32 = arith.constant 1 : i32
    %303 = arith.index_cast %c1_i32 : i32 to index
    %c0_207 = arith.constant 0 : index
    %c0_208 = arith.constant 0 : index
    %304 = vector.load %arg7[%303, %c0_207, %c0_208] : memref<8x2x512xf32, #tpu.memory_space<vmem>>, vector<1x2x512xf32>
    %305 = vector.shape_cast %304 : vector<1x2x512xf32> to vector<2x512xf32>
    %c0_209 = arith.constant 0 : index
    %c0_210 = arith.constant 0 : index
    %306 = vector.load %arg2[%c0_209, %c0_210] : memref<128x512xf32, #tpu.memory_space<vmem>>, vector<128x512xf32>
    %cst_211 = arith.constant dense<0.000000e+00> : vector<2x512xf32>
    %307 = tpu.matmul %302, %306, %cst_211 {dimension_numbers = #tpu.dot_dimension_numbers<[1], [0], [0], [1], [0, 0, 1, 1], [], []>} : vector<2x128xf32>, vector<128x512xf32>, vector<2x512xf32> -> vector<2x512xf32>
    %308 = arith.addf %305, %307 : vector<2x512xf32>
    %309 = vector.extract_strided_slice %308 {offsets = [0, 0], sizes = [2, 128], strides = [1, 1]} : vector<2x512xf32> to vector<2x128xf32>
    %cst_212 = arith.constant 5.000000e-01 : f32
    %310 = vector.broadcast %cst_212 : f32 to vector<2x128xf32>
    %311 = arith.mulf %310, %309 : vector<2x128xf32>
    %312 = math.tanh %311 : vector<2x128xf32>
    %cst_213 = arith.constant 5.000000e-01 : f32
    %313 = vector.broadcast %cst_213 : f32 to vector<2x128xf32>
    %314 = arith.mulf %313, %312 : vector<2x128xf32>
    %cst_214 = arith.constant 5.000000e-01 : f32
    %315 = vector.broadcast %cst_214 : f32 to vector<2x128xf32>
    %316 = arith.addf %314, %315 : vector<2x128xf32>
    %317 = vector.extract_strided_slice %308 {offsets = [0, 128], sizes = [2, 128], strides = [1, 1]} : vector<2x512xf32> to vector<2x128xf32>
    %cst_215 = arith.constant 5.000000e-01 : f32
    %318 = vector.broadcast %cst_215 : f32 to vector<2x128xf32>
    %319 = arith.mulf %318, %317 : vector<2x128xf32>
    %320 = math.tanh %319 : vector<2x128xf32>
    %cst_216 = arith.constant 5.000000e-01 : f32
    %321 = vector.broadcast %cst_216 : f32 to vector<2x128xf32>
    %322 = arith.mulf %321, %320 : vector<2x128xf32>
    %cst_217 = arith.constant 5.000000e-01 : f32
    %323 = vector.broadcast %cst_217 : f32 to vector<2x128xf32>
    %324 = arith.addf %322, %323 : vector<2x128xf32>
    %325 = vector.extract_strided_slice %308 {offsets = [0, 256], sizes = [2, 128], strides = [1, 1]} : vector<2x512xf32> to vector<2x128xf32>
    %326 = math.tanh %325 : vector<2x128xf32>
    %327 = vector.extract_strided_slice %308 {offsets = [0, 384], sizes = [2, 128], strides = [1, 1]} : vector<2x512xf32> to vector<2x128xf32>
    %cst_218 = arith.constant 5.000000e-01 : f32
    %328 = vector.broadcast %cst_218 : f32 to vector<2x128xf32>
    %329 = arith.mulf %328, %327 : vector<2x128xf32>
    %330 = math.tanh %329 : vector<2x128xf32>
    %cst_219 = arith.constant 5.000000e-01 : f32
    %331 = vector.broadcast %cst_219 : f32 to vector<2x128xf32>
    %332 = arith.mulf %331, %330 : vector<2x128xf32>
    %cst_220 = arith.constant 5.000000e-01 : f32
    %333 = vector.broadcast %cst_220 : f32 to vector<2x128xf32>
    %334 = arith.addf %332, %333 : vector<2x128xf32>
    %335 = arith.mulf %324, %300 : vector<2x128xf32>
    %336 = arith.mulf %316, %326 : vector<2x128xf32>
    %337 = arith.addf %335, %336 : vector<2x128xf32>
    %338 = math.tanh %337 : vector<2x128xf32>
    %339 = arith.mulf %334, %338 : vector<2x128xf32>
    %c2_i32 = arith.constant 2 : i32
    %340 = arith.index_cast %c2_i32 : i32 to index
    %c0_221 = arith.constant 0 : index
    %c0_222 = arith.constant 0 : index
    %341 = vector.load %arg7[%340, %c0_221, %c0_222] : memref<8x2x512xf32, #tpu.memory_space<vmem>>, vector<1x2x512xf32>
    %342 = vector.shape_cast %341 : vector<1x2x512xf32> to vector<2x512xf32>
    %c0_223 = arith.constant 0 : index
    %c0_224 = arith.constant 0 : index
    %343 = vector.load %arg2[%c0_223, %c0_224] : memref<128x512xf32, #tpu.memory_space<vmem>>, vector<128x512xf32>
    %cst_225 = arith.constant dense<0.000000e+00> : vector<2x512xf32>
    %344 = tpu.matmul %339, %343, %cst_225 {dimension_numbers = #tpu.dot_dimension_numbers<[1], [0], [0], [1], [0, 0, 1, 1], [], []>} : vector<2x128xf32>, vector<128x512xf32>, vector<2x512xf32> -> vector<2x512xf32>
    %345 = arith.addf %342, %344 : vector<2x512xf32>
    %346 = vector.extract_strided_slice %345 {offsets = [0, 0], sizes = [2, 128], strides = [1, 1]} : vector<2x512xf32> to vector<2x128xf32>
    %cst_226 = arith.constant 5.000000e-01 : f32
    %347 = vector.broadcast %cst_226 : f32 to vector<2x128xf32>
    %348 = arith.mulf %347, %346 : vector<2x128xf32>
    %349 = math.tanh %348 : vector<2x128xf32>
    %cst_227 = arith.constant 5.000000e-01 : f32
    %350 = vector.broadcast %cst_227 : f32 to vector<2x128xf32>
    %351 = arith.mulf %350, %349 : vector<2x128xf32>
    %cst_228 = arith.constant 5.000000e-01 : f32
    %352 = vector.broadcast %cst_228 : f32 to vector<2x128xf32>
    %353 = arith.addf %351, %352 : vector<2x128xf32>
    %354 = vector.extract_strided_slice %345 {offsets = [0, 128], sizes = [2, 128], strides = [1, 1]} : vector<2x512xf32> to vector<2x128xf32>
    %cst_229 = arith.constant 5.000000e-01 : f32
    %355 = vector.broadcast %cst_229 : f32 to vector<2x128xf32>
    %356 = arith.mulf %355, %354 : vector<2x128xf32>
    %357 = math.tanh %356 : vector<2x128xf32>
    %cst_230 = arith.constant 5.000000e-01 : f32
    %358 = vector.broadcast %cst_230 : f32 to vector<2x128xf32>
    %359 = arith.mulf %358, %357 : vector<2x128xf32>
    %cst_231 = arith.constant 5.000000e-01 : f32
    %360 = vector.broadcast %cst_231 : f32 to vector<2x128xf32>
    %361 = arith.addf %359, %360 : vector<2x128xf32>
    %362 = vector.extract_strided_slice %345 {offsets = [0, 256], sizes = [2, 128], strides = [1, 1]} : vector<2x512xf32> to vector<2x128xf32>
    %363 = math.tanh %362 : vector<2x128xf32>
    %364 = vector.extract_strided_slice %345 {offsets = [0, 384], sizes = [2, 128], strides = [1, 1]} : vector<2x512xf32> to vector<2x128xf32>
    %cst_232 = arith.constant 5.000000e-01 : f32
    %365 = vector.broadcast %cst_232 : f32 to vector<2x128xf32>
    %366 = arith.mulf %365, %364 : vector<2x128xf32>
    %367 = math.tanh %366 : vector<2x128xf32>
    %cst_233 = arith.constant 5.000000e-01 : f32
    %368 = vector.broadcast %cst_233 : f32 to vector<2x128xf32>
    %369 = arith.mulf %368, %367 : vector<2x128xf32>
    %cst_234 = arith.constant 5.000000e-01 : f32
    %370 = vector.broadcast %cst_234 : f32 to vector<2x128xf32>
    %371 = arith.addf %369, %370 : vector<2x128xf32>
    %372 = arith.mulf %361, %337 : vector<2x128xf32>
    %373 = arith.mulf %353, %363 : vector<2x128xf32>
    %374 = arith.addf %372, %373 : vector<2x128xf32>
    %375 = math.tanh %374 : vector<2x128xf32>
    %376 = arith.mulf %371, %375 : vector<2x128xf32>
    %c3_i32 = arith.constant 3 : i32
    %377 = arith.index_cast %c3_i32 : i32 to index
    %c0_235 = arith.constant 0 : index
    %c0_236 = arith.constant 0 : index
    %378 = vector.load %arg7[%377, %c0_235, %c0_236] : memref<8x2x512xf32, #tpu.memory_space<vmem>>, vector<1x2x512xf32>
    %379 = vector.shape_cast %378 : vector<1x2x512xf32> to vector<2x512xf32>
    %c0_237 = arith.constant 0 : index
    %c0_238 = arith.constant 0 : index
    %380 = vector.load %arg2[%c0_237, %c0_238] : memref<128x512xf32, #tpu.memory_space<vmem>>, vector<128x512xf32>
    %cst_239 = arith.constant dense<0.000000e+00> : vector<2x512xf32>
    %381 = tpu.matmul %376, %380, %cst_239 {dimension_numbers = #tpu.dot_dimension_numbers<[1], [0], [0], [1], [0, 0, 1, 1], [], []>} : vector<2x128xf32>, vector<128x512xf32>, vector<2x512xf32> -> vector<2x512xf32>
    %382 = arith.addf %379, %381 : vector<2x512xf32>
    %383 = vector.extract_strided_slice %382 {offsets = [0, 0], sizes = [2, 128], strides = [1, 1]} : vector<2x512xf32> to vector<2x128xf32>
    %cst_240 = arith.constant 5.000000e-01 : f32
    %384 = vector.broadcast %cst_240 : f32 to vector<2x128xf32>
    %385 = arith.mulf %384, %383 : vector<2x128xf32>
    %386 = math.tanh %385 : vector<2x128xf32>
    %cst_241 = arith.constant 5.000000e-01 : f32
    %387 = vector.broadcast %cst_241 : f32 to vector<2x128xf32>
    %388 = arith.mulf %387, %386 : vector<2x128xf32>
    %cst_242 = arith.constant 5.000000e-01 : f32
    %389 = vector.broadcast %cst_242 : f32 to vector<2x128xf32>
    %390 = arith.addf %388, %389 : vector<2x128xf32>
    %391 = vector.extract_strided_slice %382 {offsets = [0, 128], sizes = [2, 128], strides = [1, 1]} : vector<2x512xf32> to vector<2x128xf32>
    %cst_243 = arith.constant 5.000000e-01 : f32
    %392 = vector.broadcast %cst_243 : f32 to vector<2x128xf32>
    %393 = arith.mulf %392, %391 : vector<2x128xf32>
    %394 = math.tanh %393 : vector<2x128xf32>
    %cst_244 = arith.constant 5.000000e-01 : f32
    %395 = vector.broadcast %cst_244 : f32 to vector<2x128xf32>
    %396 = arith.mulf %395, %394 : vector<2x128xf32>
    %cst_245 = arith.constant 5.000000e-01 : f32
    %397 = vector.broadcast %cst_245 : f32 to vector<2x128xf32>
    %398 = arith.addf %396, %397 : vector<2x128xf32>
    %399 = vector.extract_strided_slice %382 {offsets = [0, 256], sizes = [2, 128], strides = [1, 1]} : vector<2x512xf32> to vector<2x128xf32>
    %400 = math.tanh %399 : vector<2x128xf32>
    %401 = vector.extract_strided_slice %382 {offsets = [0, 384], sizes = [2, 128], strides = [1, 1]} : vector<2x512xf32> to vector<2x128xf32>
    %cst_246 = arith.constant 5.000000e-01 : f32
    %402 = vector.broadcast %cst_246 : f32 to vector<2x128xf32>
    %403 = arith.mulf %402, %401 : vector<2x128xf32>
    %404 = math.tanh %403 : vector<2x128xf32>
    %cst_247 = arith.constant 5.000000e-01 : f32
    %405 = vector.broadcast %cst_247 : f32 to vector<2x128xf32>
    %406 = arith.mulf %405, %404 : vector<2x128xf32>
    %cst_248 = arith.constant 5.000000e-01 : f32
    %407 = vector.broadcast %cst_248 : f32 to vector<2x128xf32>
    %408 = arith.addf %406, %407 : vector<2x128xf32>
    %409 = arith.mulf %398, %374 : vector<2x128xf32>
    %410 = arith.mulf %390, %400 : vector<2x128xf32>
    %411 = arith.addf %409, %410 : vector<2x128xf32>
    %412 = math.tanh %411 : vector<2x128xf32>
    %413 = arith.mulf %408, %412 : vector<2x128xf32>
    %c4_i32 = arith.constant 4 : i32
    %414 = arith.index_cast %c4_i32 : i32 to index
    %c0_249 = arith.constant 0 : index
    %c0_250 = arith.constant 0 : index
    %415 = vector.load %arg7[%414, %c0_249, %c0_250] : memref<8x2x512xf32, #tpu.memory_space<vmem>>, vector<1x2x512xf32>
    %416 = vector.shape_cast %415 : vector<1x2x512xf32> to vector<2x512xf32>
    %c0_251 = arith.constant 0 : index
    %c0_252 = arith.constant 0 : index
    %417 = vector.load %arg2[%c0_251, %c0_252] : memref<128x512xf32, #tpu.memory_space<vmem>>, vector<128x512xf32>
    %cst_253 = arith.constant dense<0.000000e+00> : vector<2x512xf32>
    %418 = tpu.matmul %413, %417, %cst_253 {dimension_numbers = #tpu.dot_dimension_numbers<[1], [0], [0], [1], [0, 0, 1, 1], [], []>} : vector<2x128xf32>, vector<128x512xf32>, vector<2x512xf32> -> vector<2x512xf32>
    %419 = arith.addf %416, %418 : vector<2x512xf32>
    %420 = vector.extract_strided_slice %419 {offsets = [0, 0], sizes = [2, 128], strides = [1, 1]} : vector<2x512xf32> to vector<2x128xf32>
    %cst_254 = arith.constant 5.000000e-01 : f32
    %421 = vector.broadcast %cst_254 : f32 to vector<2x128xf32>
    %422 = arith.mulf %421, %420 : vector<2x128xf32>
    %423 = math.tanh %422 : vector<2x128xf32>
    %cst_255 = arith.constant 5.000000e-01 : f32
    %424 = vector.broadcast %cst_255 : f32 to vector<2x128xf32>
    %425 = arith.mulf %424, %423 : vector<2x128xf32>
    %cst_256 = arith.constant 5.000000e-01 : f32
    %426 = vector.broadcast %cst_256 : f32 to vector<2x128xf32>
    %427 = arith.addf %425, %426 : vector<2x128xf32>
    %428 = vector.extract_strided_slice %419 {offsets = [0, 128], sizes = [2, 128], strides = [1, 1]} : vector<2x512xf32> to vector<2x128xf32>
    %cst_257 = arith.constant 5.000000e-01 : f32
    %429 = vector.broadcast %cst_257 : f32 to vector<2x128xf32>
    %430 = arith.mulf %429, %428 : vector<2x128xf32>
    %431 = math.tanh %430 : vector<2x128xf32>
    %cst_258 = arith.constant 5.000000e-01 : f32
    %432 = vector.broadcast %cst_258 : f32 to vector<2x128xf32>
    %433 = arith.mulf %432, %431 : vector<2x128xf32>
    %cst_259 = arith.constant 5.000000e-01 : f32
    %434 = vector.broadcast %cst_259 : f32 to vector<2x128xf32>
    %435 = arith.addf %433, %434 : vector<2x128xf32>
    %436 = vector.extract_strided_slice %419 {offsets = [0, 256], sizes = [2, 128], strides = [1, 1]} : vector<2x512xf32> to vector<2x128xf32>
    %437 = math.tanh %436 : vector<2x128xf32>
    %438 = vector.extract_strided_slice %419 {offsets = [0, 384], sizes = [2, 128], strides = [1, 1]} : vector<2x512xf32> to vector<2x128xf32>
    %cst_260 = arith.constant 5.000000e-01 : f32
    %439 = vector.broadcast %cst_260 : f32 to vector<2x128xf32>
    %440 = arith.mulf %439, %438 : vector<2x128xf32>
    %441 = math.tanh %440 : vector<2x128xf32>
    %cst_261 = arith.constant 5.000000e-01 : f32
    %442 = vector.broadcast %cst_261 : f32 to vector<2x128xf32>
    %443 = arith.mulf %442, %441 : vector<2x128xf32>
    %cst_262 = arith.constant 5.000000e-01 : f32
    %444 = vector.broadcast %cst_262 : f32 to vector<2x128xf32>
    %445 = arith.addf %443, %444 : vector<2x128xf32>
    %446 = arith.mulf %435, %411 : vector<2x128xf32>
    %447 = arith.mulf %427, %437 : vector<2x128xf32>
    %448 = arith.addf %446, %447 : vector<2x128xf32>
    %449 = math.tanh %448 : vector<2x128xf32>
    %450 = arith.mulf %445, %449 : vector<2x128xf32>
    %c5_i32 = arith.constant 5 : i32
    %451 = arith.index_cast %c5_i32 : i32 to index
    %c0_263 = arith.constant 0 : index
    %c0_264 = arith.constant 0 : index
    %452 = vector.load %arg7[%451, %c0_263, %c0_264] : memref<8x2x512xf32, #tpu.memory_space<vmem>>, vector<1x2x512xf32>
    %453 = vector.shape_cast %452 : vector<1x2x512xf32> to vector<2x512xf32>
    %c0_265 = arith.constant 0 : index
    %c0_266 = arith.constant 0 : index
    %454 = vector.load %arg2[%c0_265, %c0_266] : memref<128x512xf32, #tpu.memory_space<vmem>>, vector<128x512xf32>
    %cst_267 = arith.constant dense<0.000000e+00> : vector<2x512xf32>
    %455 = tpu.matmul %450, %454, %cst_267 {dimension_numbers = #tpu.dot_dimension_numbers<[1], [0], [0], [1], [0, 0, 1, 1], [], []>} : vector<2x128xf32>, vector<128x512xf32>, vector<2x512xf32> -> vector<2x512xf32>
    %456 = arith.addf %453, %455 : vector<2x512xf32>
    %457 = vector.extract_strided_slice %456 {offsets = [0, 0], sizes = [2, 128], strides = [1, 1]} : vector<2x512xf32> to vector<2x128xf32>
    %cst_268 = arith.constant 5.000000e-01 : f32
    %458 = vector.broadcast %cst_268 : f32 to vector<2x128xf32>
    %459 = arith.mulf %458, %457 : vector<2x128xf32>
    %460 = math.tanh %459 : vector<2x128xf32>
    %cst_269 = arith.constant 5.000000e-01 : f32
    %461 = vector.broadcast %cst_269 : f32 to vector<2x128xf32>
    %462 = arith.mulf %461, %460 : vector<2x128xf32>
    %cst_270 = arith.constant 5.000000e-01 : f32
    %463 = vector.broadcast %cst_270 : f32 to vector<2x128xf32>
    %464 = arith.addf %462, %463 : vector<2x128xf32>
    %465 = vector.extract_strided_slice %456 {offsets = [0, 128], sizes = [2, 128], strides = [1, 1]} : vector<2x512xf32> to vector<2x128xf32>
    %cst_271 = arith.constant 5.000000e-01 : f32
    %466 = vector.broadcast %cst_271 : f32 to vector<2x128xf32>
    %467 = arith.mulf %466, %465 : vector<2x128xf32>
    %468 = math.tanh %467 : vector<2x128xf32>
    %cst_272 = arith.constant 5.000000e-01 : f32
    %469 = vector.broadcast %cst_272 : f32 to vector<2x128xf32>
    %470 = arith.mulf %469, %468 : vector<2x128xf32>
    %cst_273 = arith.constant 5.000000e-01 : f32
    %471 = vector.broadcast %cst_273 : f32 to vector<2x128xf32>
    %472 = arith.addf %470, %471 : vector<2x128xf32>
    %473 = vector.extract_strided_slice %456 {offsets = [0, 256], sizes = [2, 128], strides = [1, 1]} : vector<2x512xf32> to vector<2x128xf32>
    %474 = math.tanh %473 : vector<2x128xf32>
    %475 = vector.extract_strided_slice %456 {offsets = [0, 384], sizes = [2, 128], strides = [1, 1]} : vector<2x512xf32> to vector<2x128xf32>
    %cst_274 = arith.constant 5.000000e-01 : f32
    %476 = vector.broadcast %cst_274 : f32 to vector<2x128xf32>
    %477 = arith.mulf %476, %475 : vector<2x128xf32>
    %478 = math.tanh %477 : vector<2x128xf32>
    %cst_275 = arith.constant 5.000000e-01 : f32
    %479 = vector.broadcast %cst_275 : f32 to vector<2x128xf32>
    %480 = arith.mulf %479, %478 : vector<2x128xf32>
    %cst_276 = arith.constant 5.000000e-01 : f32
    %481 = vector.broadcast %cst_276 : f32 to vector<2x128xf32>
    %482 = arith.addf %480, %481 : vector<2x128xf32>
    %483 = arith.mulf %472, %448 : vector<2x128xf32>
    %484 = arith.mulf %464, %474 : vector<2x128xf32>
    %485 = arith.addf %483, %484 : vector<2x128xf32>
    %486 = math.tanh %485 : vector<2x128xf32>
    %487 = arith.mulf %482, %486 : vector<2x128xf32>
    %c6_i32 = arith.constant 6 : i32
    %488 = arith.index_cast %c6_i32 : i32 to index
    %c0_277 = arith.constant 0 : index
    %c0_278 = arith.constant 0 : index
    %489 = vector.load %arg7[%488, %c0_277, %c0_278] : memref<8x2x512xf32, #tpu.memory_space<vmem>>, vector<1x2x512xf32>
    %490 = vector.shape_cast %489 : vector<1x2x512xf32> to vector<2x512xf32>
    %c0_279 = arith.constant 0 : index
    %c0_280 = arith.constant 0 : index
    %491 = vector.load %arg2[%c0_279, %c0_280] : memref<128x512xf32, #tpu.memory_space<vmem>>, vector<128x512xf32>
    %cst_281 = arith.constant dense<0.000000e+00> : vector<2x512xf32>
    %492 = tpu.matmul %487, %491, %cst_281 {dimension_numbers = #tpu.dot_dimension_numbers<[1], [0], [0], [1], [0, 0, 1, 1], [], []>} : vector<2x128xf32>, vector<128x512xf32>, vector<2x512xf32> -> vector<2x512xf32>
    %493 = arith.addf %490, %492 : vector<2x512xf32>
    %494 = vector.extract_strided_slice %493 {offsets = [0, 0], sizes = [2, 128], strides = [1, 1]} : vector<2x512xf32> to vector<2x128xf32>
    %cst_282 = arith.constant 5.000000e-01 : f32
    %495 = vector.broadcast %cst_282 : f32 to vector<2x128xf32>
    %496 = arith.mulf %495, %494 : vector<2x128xf32>
    %497 = math.tanh %496 : vector<2x128xf32>
    %cst_283 = arith.constant 5.000000e-01 : f32
    %498 = vector.broadcast %cst_283 : f32 to vector<2x128xf32>
    %499 = arith.mulf %498, %497 : vector<2x128xf32>
    %cst_284 = arith.constant 5.000000e-01 : f32
    %500 = vector.broadcast %cst_284 : f32 to vector<2x128xf32>
    %501 = arith.addf %499, %500 : vector<2x128xf32>
    %502 = vector.extract_strided_slice %493 {offsets = [0, 128], sizes = [2, 128], strides = [1, 1]} : vector<2x512xf32> to vector<2x128xf32>
    %cst_285 = arith.constant 5.000000e-01 : f32
    %503 = vector.broadcast %cst_285 : f32 to vector<2x128xf32>
    %504 = arith.mulf %503, %502 : vector<2x128xf32>
    %505 = math.tanh %504 : vector<2x128xf32>
    %cst_286 = arith.constant 5.000000e-01 : f32
    %506 = vector.broadcast %cst_286 : f32 to vector<2x128xf32>
    %507 = arith.mulf %506, %505 : vector<2x128xf32>
    %cst_287 = arith.constant 5.000000e-01 : f32
    %508 = vector.broadcast %cst_287 : f32 to vector<2x128xf32>
    %509 = arith.addf %507, %508 : vector<2x128xf32>
    %510 = vector.extract_strided_slice %493 {offsets = [0, 256], sizes = [2, 128], strides = [1, 1]} : vector<2x512xf32> to vector<2x128xf32>
    %511 = math.tanh %510 : vector<2x128xf32>
    %512 = vector.extract_strided_slice %493 {offsets = [0, 384], sizes = [2, 128], strides = [1, 1]} : vector<2x512xf32> to vector<2x128xf32>
    %cst_288 = arith.constant 5.000000e-01 : f32
    %513 = vector.broadcast %cst_288 : f32 to vector<2x128xf32>
    %514 = arith.mulf %513, %512 : vector<2x128xf32>
    %515 = math.tanh %514 : vector<2x128xf32>
    %cst_289 = arith.constant 5.000000e-01 : f32
    %516 = vector.broadcast %cst_289 : f32 to vector<2x128xf32>
    %517 = arith.mulf %516, %515 : vector<2x128xf32>
    %cst_290 = arith.constant 5.000000e-01 : f32
    %518 = vector.broadcast %cst_290 : f32 to vector<2x128xf32>
    %519 = arith.addf %517, %518 : vector<2x128xf32>
    %520 = arith.mulf %509, %485 : vector<2x128xf32>
    %521 = arith.mulf %501, %511 : vector<2x128xf32>
    %522 = arith.addf %520, %521 : vector<2x128xf32>
    %523 = math.tanh %522 : vector<2x128xf32>
    %524 = arith.mulf %519, %523 : vector<2x128xf32>
    %c7_i32 = arith.constant 7 : i32
    %525 = arith.index_cast %c7_i32 : i32 to index
    %c0_291 = arith.constant 0 : index
    %c0_292 = arith.constant 0 : index
    %526 = vector.load %arg7[%525, %c0_291, %c0_292] : memref<8x2x512xf32, #tpu.memory_space<vmem>>, vector<1x2x512xf32>
    %527 = vector.shape_cast %526 : vector<1x2x512xf32> to vector<2x512xf32>
    %c0_293 = arith.constant 0 : index
    %c0_294 = arith.constant 0 : index
    %528 = vector.load %arg2[%c0_293, %c0_294] : memref<128x512xf32, #tpu.memory_space<vmem>>, vector<128x512xf32>
    %cst_295 = arith.constant dense<0.000000e+00> : vector<2x512xf32>
    %529 = tpu.matmul %524, %528, %cst_295 {dimension_numbers = #tpu.dot_dimension_numbers<[1], [0], [0], [1], [0, 0, 1, 1], [], []>} : vector<2x128xf32>, vector<128x512xf32>, vector<2x512xf32> -> vector<2x512xf32>
    %530 = arith.addf %527, %529 : vector<2x512xf32>
    %531 = vector.extract_strided_slice %530 {offsets = [0, 0], sizes = [2, 128], strides = [1, 1]} : vector<2x512xf32> to vector<2x128xf32>
    %cst_296 = arith.constant 5.000000e-01 : f32
    %532 = vector.broadcast %cst_296 : f32 to vector<2x128xf32>
    %533 = arith.mulf %532, %531 : vector<2x128xf32>
    %534 = math.tanh %533 : vector<2x128xf32>
    %cst_297 = arith.constant 5.000000e-01 : f32
    %535 = vector.broadcast %cst_297 : f32 to vector<2x128xf32>
    %536 = arith.mulf %535, %534 : vector<2x128xf32>
    %cst_298 = arith.constant 5.000000e-01 : f32
    %537 = vector.broadcast %cst_298 : f32 to vector<2x128xf32>
    %538 = arith.addf %536, %537 : vector<2x128xf32>
    %539 = vector.extract_strided_slice %530 {offsets = [0, 128], sizes = [2, 128], strides = [1, 1]} : vector<2x512xf32> to vector<2x128xf32>
    %cst_299 = arith.constant 5.000000e-01 : f32
    %540 = vector.broadcast %cst_299 : f32 to vector<2x128xf32>
    %541 = arith.mulf %540, %539 : vector<2x128xf32>
    %542 = math.tanh %541 : vector<2x128xf32>
    %cst_300 = arith.constant 5.000000e-01 : f32
    %543 = vector.broadcast %cst_300 : f32 to vector<2x128xf32>
    %544 = arith.mulf %543, %542 : vector<2x128xf32>
    %cst_301 = arith.constant 5.000000e-01 : f32
    %545 = vector.broadcast %cst_301 : f32 to vector<2x128xf32>
    %546 = arith.addf %544, %545 : vector<2x128xf32>
    %547 = vector.extract_strided_slice %530 {offsets = [0, 256], sizes = [2, 128], strides = [1, 1]} : vector<2x512xf32> to vector<2x128xf32>
    %548 = math.tanh %547 : vector<2x128xf32>
    %549 = vector.extract_strided_slice %530 {offsets = [0, 384], sizes = [2, 128], strides = [1, 1]} : vector<2x512xf32> to vector<2x128xf32>
    %cst_302 = arith.constant 5.000000e-01 : f32
    %550 = vector.broadcast %cst_302 : f32 to vector<2x128xf32>
    %551 = arith.mulf %550, %549 : vector<2x128xf32>
    %552 = math.tanh %551 : vector<2x128xf32>
    %cst_303 = arith.constant 5.000000e-01 : f32
    %553 = vector.broadcast %cst_303 : f32 to vector<2x128xf32>
    %554 = arith.mulf %553, %552 : vector<2x128xf32>
    %cst_304 = arith.constant 5.000000e-01 : f32
    %555 = vector.broadcast %cst_304 : f32 to vector<2x128xf32>
    %556 = arith.addf %554, %555 : vector<2x128xf32>
    %557 = arith.mulf %546, %522 : vector<2x128xf32>
    %558 = arith.mulf %538, %548 : vector<2x128xf32>
    %559 = arith.addf %557, %558 : vector<2x128xf32>
    %560 = math.tanh %559 : vector<2x128xf32>
    %561 = arith.mulf %556, %560 : vector<2x128xf32>
    %c8_i32 = arith.constant 8 : i32
    %c0_305 = arith.constant 0 : index
    %c0_306 = arith.constant 0 : index
    %562 = vector.load %arg4[%c0_305, %c0_306] : memref<128x128xf32, #tpu.memory_space<vmem>>, vector<128x128xf32>
    %cst_307 = arith.constant dense<0.000000e+00> : vector<2x128xf32>
    %563 = tpu.matmul %561, %562, %cst_307 {dimension_numbers = #tpu.dot_dimension_numbers<[1], [0], [0], [1], [0, 0, 1, 1], [], []>} : vector<2x128xf32>, vector<128x128xf32>, vector<2x128xf32> -> vector<2x128xf32>
    %c0_308 = arith.constant 0 : index
    %c0_309 = arith.constant 0 : index
    %564 = vector.load %arg5[%c0_308, %c0_309] : memref<1x128xf32, #tpu.memory_space<vmem>>, vector<1x128xf32>
    %565 = vector.broadcast %564 : vector<1x128xf32> to vector<2x128xf32>
    %566 = arith.addf %563, %565 : vector<2x128xf32>
    %cst_310 = arith.constant 5.000000e-01 : f32
    %567 = vector.broadcast %cst_310 : f32 to vector<2x128xf32>
    %568 = arith.mulf %567, %566 : vector<2x128xf32>
    %569 = math.tanh %568 : vector<2x128xf32>
    %cst_311 = arith.constant 5.000000e-01 : f32
    %570 = vector.broadcast %cst_311 : f32 to vector<2x128xf32>
    %571 = arith.mulf %570, %569 : vector<2x128xf32>
    %cst_312 = arith.constant 5.000000e-01 : f32
    %572 = vector.broadcast %cst_312 : f32 to vector<2x128xf32>
    %573 = arith.addf %571, %572 : vector<2x128xf32>
    %c0_313 = arith.constant 0 : index
    %c0_314 = arith.constant 0 : index
    %574 = vector.load %arg6[%c0_313, %c0_314] : memref<2x128xf32, #tpu.memory_space<vmem>>, vector<2x128xf32>
    tpu.vector_store %arg6[%c0_313, %c0_314], %573 {strides = array<i32>} : memref<2x128xf32, #tpu.memory_space<vmem>>, vector<2x128xf32>,
    return
  }
}

</mosaic_0001>

<llo_original>
// kernel: lstm_model_forward.1
$region0: #{lstm_model_forward.1}
  #allocation0 [shape = 'u32[]', space=smem, size = 0x4, offset = 0x4, fixed_abs, tag = 'smem constant byte address 0x4 - core index']
  #allocation1 [shape = 'u32[72,128]{1,0:T(1,128)}', space=vmem, size = 0x9000, scoped, tag = 'internal scratch']
  #allocation2 [shape = 'f32[8,2,512]{2,1,0:T(2,128)}', space=vmem, size = 0x8000, scoped, tag = 'scratch operand']
  %s0 = inlined_call_operand.vmem [shape: f32[2,8,4], index: 0, kind: input, shape index: {}]
  %s1 = inlined_call_operand.vmem [shape: f32[4,512], index: 1, kind: input, shape index: {}]
  %s2 = inlined_call_operand.hbm [shape: f32[128,512], index: 2, kind: input, shape index: {}]
  %s3 = inlined_call_operand.vmem [shape: f32[1,512], index: 3, kind: input, shape index: {}]
  %s4 = inlined_call_operand.hbm [shape: f32[128,128], index: 4, kind: input, shape index: {}]
  %s5 = inlined_call_operand.vmem [shape: f32[1,128], index: 5, kind: input, shape index: {}]
  %s6 = inlined_call_operand.vmem [shape: f32[2,128], index: 6, kind: output, shape index: {}]
  %s7 = sld [smem:[#allocation0]]
  $region42: #{lstm_model_forward.1} parent=0
    _
  %s9 = ssub.s32 1, %s7
  %s10 = scalar_select 0, %s9, %s7
  $region1: #{lstm_model_forward.1} parent=0
    #allocation3 [shape = 'u8[262144]{0}', space=vmem, size = 0x40000, scoped, tag = 'input window, operand 2, single buffered']
    #allocation4 [shape = 's32[1]{0}', space=sflag, size = 0x4, scoped, tag = 'scoped memory for lstm_model_forward.1']
    #allocation5 [shape = 'u8[65536]{0}', space=vmem, size = 0x10000, scoped, tag = 'input window, operand 4, single buffered']
    #allocation6 [shape = 's32[1]{0}', space=sflag, size = 0x4, scoped, tag = 'scoped memory for lstm_model_forward.1']
    %11 = vsyncpa [#allocation4], 0
    %12 = vsyncpa [#allocation6], 0
    // Predicated region
    $region2: #{lstm_model_forward.1} parent=1 // pred_check
      _
    $region3: #{lstm_model_forward.1} parent=1 // pred_check_branch
      %14 = sbr.rel (0) target = $region5
    $region4: #{lstm_model_forward.1} parent=1 // pred_region
      _
    $region5: #{lstm_model_forward.1} parent=1 // pred_fallthru
      _
    // Predicated region
    $region6: #{lstm_model_forward.1} parent=1 // pred_check
      _
    $region7: #{lstm_model_forward.1} parent=1 // pred_check_branch
      %16 = sbr.rel (0) target = $region9
    $region8: #{lstm_model_forward.1} parent=1 // pred_region
      _
    $region9: #{lstm_model_forward.1} parent=1 // pred_fallthru
      _
    // Predicated region
    $region10: #{lstm_model_forward.1} parent=1 // pred_check
      _
    $region11: #{lstm_model_forward.1} parent=1 // pred_check_branch
      %18 = sbr.rel (0) target = $region13
    $region12: #{lstm_model_forward.1} parent=1 // pred_region
      %20 = vsyncadd [#allocation4], 0
      %s21 = sshll.u32 %s2, 4
      %s22 = int_to_ptr.hbm [resolvable:$true] %s21
      %s23 = sshll.u32 [#allocation3], 4
      %s24 = int_to_ptr.vmem [resolvable:$true] %s23
      %29 = dma.hbm_to_vmem [thread:$0]  %s22, 8192, %s24, [#allocation4], 512, 512, 32
    $region13: #{lstm_model_forward.1} parent=1 // pred_fallthru
      _
    // Predicated region
    $region14: #{lstm_model_forward.1} parent=1 // pred_check
      _
    $region15: #{lstm_model_forward.1} parent=1 // pred_check_branch
      %31 = sbr.rel (0) target = $region17
    $region16: #{lstm_model_forward.1} parent=1 // pred_region
      _
    $region17: #{lstm_model_forward.1} parent=1 // pred_fallthru
      _
    // Predicated region
    $region18: #{lstm_model_forward.1} parent=1 // pred_check
      _
    $region19: #{lstm_model_forward.1} parent=1 // pred_check_branch
      %33 = sbr.rel (0) target = $region21
    $region20: #{lstm_model_forward.1} parent=1 // pred_region
      %35 = vsyncadd [#allocation6], 0
      %s36 = sshll.u32 %s4, 4
      %s37 = int_to_ptr.hbm [resolvable:$true] %s36
      %s38 = sshll.u32 [#allocation5], 4
      %s39 = int_to_ptr.vmem [resolvable:$true] %s38
      %44 = dma.hbm_to_vmem [thread:$0]  %s37, 2048, %s39, [#allocation6], 128, 128, 8
    $region21: #{lstm_model_forward.1} parent=1 // pred_fallthru
      _
    // Predicated region
    $region22: #{lstm_model_forward.1} parent=1 // pred_check
      _
    $region23: #{lstm_model_forward.1} parent=1 // pred_check_branch
      %46 = sbr.rel (0) target = $region25
    $region24: #{lstm_model_forward.1} parent=1 // pred_region
      _
    $region25: #{lstm_model_forward.1} parent=1 // pred_fallthru
      _
    // Predicated region
    $region26: #{lstm_model_forward.1} parent=1 // pred_check
      _
    $region27: #{lstm_model_forward.1} parent=1 // pred_check_branch
      %48 = sbr.rel (0) target = $region29
    $region28: #{lstm_model_forward.1} parent=1 // pred_region
      %50 = dma.done [#allocation4], 8192
    $region29: #{lstm_model_forward.1} parent=1 // pred_fallthru
      _
    // Predicated region
    $region30: #{lstm_model_forward.1} parent=1 // pred_check
      _
    $region31: #{lstm_model_forward.1} parent=1 // pred_check_branch
      %52 = sbr.rel (0) target = $region33
    $region32: #{lstm_model_forward.1} parent=1 // pred_region
      %54 = dma.done [#allocation6], 2048
    $region33: #{lstm_model_forward.1} parent=1 // pred_fallthru
      _
    %v55 = vld [vmem:[%s3] sm:$0xf]
    %v56 = vld [vmem:[%s0] sm:$0x1]
    %v57 = vld [vmem:[%s0 + $0x8] sm:$0x1]
    %v58 = vld [vmem:[%s1] ss:$4 sm:$0xf]
    %60 = vset.pattern.permute.xlu0 0
    %61 = vperm.xlu0 %60, %v56
    %v62 = vpop.permute.xlu0 %61
    %65 = vset.pattern.permute.xlu0 0
    %66 = vperm.xlu0 %65, %v57
    %v67 = vpop.permute.xlu0 %66
    %v70 = vperm.slane %v58, 0
    %v71 = vperm.slane %v58, 1
    %v72 = vperm.slane %v58, 2
    %v73 = vperm.slane %v58, 3
    %v78 = vmul.f32 %v62, %v70
    %v79 = vmul.f32 %v62, %v71
    %v80 = vmul.f32 %v62, %v72
    %v81 = vmul.f32 %v62, %v73
    %v82 = vmul.f32 %v67, %v70
    %v83 = vmul.f32 %v67, %v71
    %v84 = vmul.f32 %v67, %v72
    %v85 = vmul.f32 %v67, %v73
    %v87 = vperm.slane %v55, 0
    %v88 = vperm.slane %v55, 1
    %v89 = vperm.slane %v55, 2
    %v90 = vperm.slane %v55, 3
    %v103 = vrot.slane %v82, 7
    %vm104 = vcmask 1041409
    %v105 = vsel %vm104, %v103, %v78
    %v106 = vrot.slane %v83, 7
    %v107 = vsel %vm104, %v106, %v79
    %v108 = vrot.slane %v84, 7
    %v109 = vsel %vm104, %v108, %v80
    %v110 = vrot.slane %v85, 7
    %v111 = vsel %vm104, %v110, %v81
    %v116 = vadd.f32 %v87, %v105
    %v117 = vadd.f32 %v88, %v107
    %v118 = vadd.f32 %v89, %v109
    %v119 = vadd.f32 %v90, %v111
    %s120 = scalar_lea.vmem %s1, 1
    %v121 = vld [vmem:[%s120] ss:$4 sm:$0xf]
    %122 = vset.pattern.permute.xlu0 1
    %123 = vperm.xlu0 %122, %v56
    %v124 = vpop.permute.xlu0 %123
    %126 = vset.pattern.permute.xlu0 1
    %127 = vperm.xlu0 %126, %v57
    %v128 = vpop.permute.xlu0 %127
    %v131 = vperm.slane %v121, 0
    %v132 = vperm.slane %v121, 1
    %v133 = vperm.slane %v121, 2
    %v134 = vperm.slane %v121, 3
    %v139 = vmul.f32 %v124, %v131
    %v140 = vmul.f32 %v124, %v132
    %v141 = vmul.f32 %v124, %v133
    %v142 = vmul.f32 %v124, %v134
    %v143 = vmul.f32 %v128, %v131
    %v144 = vmul.f32 %v128, %v132
    %v145 = vmul.f32 %v128, %v133
    %v146 = vmul.f32 %v128, %v134
    %v155 = vrot.slane %v143, 7
    %v156 = vsel %vm104, %v155, %v139
    %v157 = vrot.slane %v144, 7
    %v158 = vsel %vm104, %v157, %v140
    %v159 = vrot.slane %v145, 7
    %v160 = vsel %vm104, %v159, %v141
    %v161 = vrot.slane %v146, 7
    %v162 = vsel %vm104, %v161, %v142
    %v167 = vadd.f32 %v116, %v156
    %v168 = vadd.f32 %v117, %v158
    %v169 = vadd.f32 %v118, %v160
    %v170 = vadd.f32 %v119, %v162
    %s171 = scalar_lea.vmem %s1, 2
    %v172 = vld [vmem:[%s171] ss:$4 sm:$0xf]
    %173 = vset.pattern.permute.xlu0 2
    %174 = vperm.xlu0 %173, %v56
    %v175 = vpop.permute.xlu0 %174
    %177 = vset.pattern.permute.xlu0 2
    %178 = vperm.xlu0 %177, %v57
    %v179 = vpop.permute.xlu0 %178
    %v182 = vperm.slane %v172, 0
    %v183 = vperm.slane %v172, 1
    %v184 = vperm.slane %v172, 2
    %v185 = vperm.slane %v172, 3
    %v190 = vmul.f32 %v175, %v182
    %v191 = vmul.f32 %v175, %v183
    %v192 = vmul.f32 %v175, %v184
    %v193 = vmul.f32 %v175, %v185
    %v194 = vmul.f32 %v179, %v182
    %v195 = vmul.f32 %v179, %v183
    %v196 = vmul.f32 %v179, %v184
    %v197 = vmul.f32 %v179, %v185
    %v206 = vrot.slane %v194, 7
    %v207 = vsel %vm104, %v206, %v190
    %v208 = vrot.slane %v195, 7
    %v209 = vsel %vm104, %v208, %v191
    %v210 = vrot.slane %v196, 7
    %v211 = vsel %vm104, %v210, %v192
    %v212 = vrot.slane %v197, 7
    %v213 = vsel %vm104, %v212, %v193
    %v218 = vadd.f32 %v167, %v207
    %v219 = vadd.f32 %v168, %v209
    %v220 = vadd.f32 %v169, %v211
    %v221 = vadd.f32 %v170, %v213
    %s222 = scalar_lea.vmem %s1, 3
    %v223 = vld [vmem:[%s222] ss:$4 sm:$0xf]
    %224 = vset.pattern.permute.xlu0 3
    %225 = vperm.xlu0 %224, %v56
    %v226 = vpop.permute.xlu0 %225
    %228 = vset.pattern.permute.xlu0 3
    %229 = vperm.xlu0 %228, %v57
    %v230 = vpop.permute.xlu0 %229
    %v233 = vperm.slane %v223, 0
    %v234 = vperm.slane %v223, 1
    %v235 = vperm.slane %v223, 2
    %v236 = vperm.slane %v223, 3
    %v241 = vmul.f32 %v226, %v233
    %v242 = vmul.f32 %v226, %v234
    %v243 = vmul.f32 %v226, %v235
    %v244 = vmul.f32 %v226, %v236
    %v245 = vmul.f32 %v230, %v233
    %v246 = vmul.f32 %v230, %v234
    %v247 = vmul.f32 %v230, %v235
    %v248 = vmul.f32 %v230, %v236
    %v257 = vrot.slane %v245, 7
    %v258 = vsel %vm104, %v257, %v241
    %v259 = vrot.slane %v246, 7
    %v260 = vsel %vm104, %v259, %v242
    %v261 = vrot.slane %v247, 7
    %v262 = vsel %vm104, %v261, %v243
    %v263 = vrot.slane %v248, 7
    %v264 = vsel %vm104, %v263, %v244
    %v269 = vadd.f32 %v218, %v258
    %v270 = vadd.f32 %v219, %v260
    %v271 = vadd.f32 %v220, %v262
    %v272 = vadd.f32 %v221, %v264
    %v277 = vrot.slane %v270, 6
    %v278 = vrot.slane %v271, 4
    %v279 = vrot.slane %v272, 2
    %vm280 = vcmask 1041408
    %v281 = vsel %vm280, %v269, %v277
    %vm282 = vcmask 1045508
    %v283 = vsel %vm282, %v278, %v279
    %vm284 = vcmask 1043456
    %v285 = vsel %vm284, %v281, %v283
    %287 = vst [vmem:[#allocation2] sm:$0xff] %v285
    %v288 = vld [vmem:[%s3] sm:$0xf]
    %v289 = vld [vmem:[%s0 + $0x1] sm:$0x1]
    %v290 = vld [vmem:[%s0 + $0x9] sm:$0x1]
    %v291 = vld [vmem:[%s1] ss:$4 sm:$0xf]
    %293 = vset.pattern.permute.xlu0 0
    %294 = vperm.xlu0 %293, %v289
    %v295 = vpop.permute.xlu0 %294
    %298 = vset.pattern.permute.xlu0 0
    %299 = vperm.xlu0 %298, %v290
    %v300 = vpop.permute.xlu0 %299
    %v303 = vperm.slane %v291, 0
    %v304 = vperm.slane %v291, 1
    %v305 = vperm.slane %v291, 2
    %v306 = vperm.slane %v291, 3
    %v311 = vmul.f32 %v295, %v303
    %v312 = vmul.f32 %v295, %v304
    %v313 = vmul.f32 %v295, %v305
    %v314 = vmul.f32 %v295, %v306
    %v315 = vmul.f32 %v300, %v303
    %v316 = vmul.f32 %v300, %v304
    %v317 = vmul.f32 %v300, %v305
    %v318 = vmul.f32 %v300, %v306
    %v320 = vperm.slane %v288, 0
    %v321 = vperm.slane %v288, 1
    %v322 = vperm.slane %v288, 2
    %v323 = vperm.slane %v288, 3
    %v336 = vrot.slane %v315, 7
    %v337 = vsel %vm104, %v336, %v311
    %v338 = vrot.slane %v316, 7
    %v339 = vsel %vm104, %v338, %v312
    %v340 = vrot.slane %v317, 7
    %v341 = vsel %vm104, %v340, %v313
    %v342 = vrot.slane %v318, 7
    %v343 = vsel %vm104, %v342, %v314
    %v348 = vadd.f32 %v320, %v337
    %v349 = vadd.f32 %v321, %v339
    %v350 = vadd.f32 %v322, %v341
    %v351 = vadd.f32 %v323, %v343
    %v352 = vld [vmem:[%s120] ss:$4 sm:$0xf]
    %353 = vset.pattern.permute.xlu0 1
    %354 = vperm.xlu0 %353, %v289
    %v355 = vpop.permute.xlu0 %354
    %357 = vset.pattern.permute.xlu0 1
    %358 = vperm.xlu0 %357, %v290
    %v359 = vpop.permute.xlu0 %358
    %v362 = vperm.slane %v352, 0
    %v363 = vperm.slane %v352, 1
    %v364 = vperm.slane %v352, 2
    %v365 = vperm.slane %v352, 3
    %v370 = vmul.f32 %v355, %v362
    %v371 = vmul.f32 %v355, %v363
    %v372 = vmul.f32 %v355, %v364
    %v373 = vmul.f32 %v355, %v365
    %v374 = vmul.f32 %v359, %v362
    %v375 = vmul.f32 %v359, %v363
    %v376 = vmul.f32 %v359, %v364
    %v377 = vmul.f32 %v359, %v365
    %v386 = vrot.slane %v374, 7
    %v387 = vsel %vm104, %v386, %v370
    %v388 = vrot.slane %v375, 7
    %v389 = vsel %vm104, %v388, %v371
    %v390 = vrot.slane %v376, 7
    %v391 = vsel %vm104, %v390, %v372
    %v392 = vrot.slane %v377, 7
    %v393 = vsel %vm104, %v392, %v373
    %v398 = vadd.f32 %v348, %v387
    %v399 = vadd.f32 %v349, %v389
    %v400 = vadd.f32 %v350, %v391
    %v401 = vadd.f32 %v351, %v393
    %v402 = vld [vmem:[%s171] ss:$4 sm:$0xf]
    %403 = vset.pattern.permute.xlu0 2
    %404 = vperm.xlu0 %403, %v289
    %v405 = vpop.permute.xlu0 %404
    %407 = vset.pattern.permute.xlu0 2
    %408 = vperm.xlu0 %407, %v290
    %v409 = vpop.permute.xlu0 %408
    %v412 = vperm.slane %v402, 0
    %v413 = vperm.slane %v402, 1
    %v414 = vperm.slane %v402, 2
    %v415 = vperm.slane %v402, 3
    %v420 = vmul.f32 %v405, %v412
    %v421 = vmul.f32 %v405, %v413
    %v422 = vmul.f32 %v405, %v414
    %v423 = vmul.f32 %v405, %v415
    %v424 = vmul.f32 %v409, %v412
    %v425 = vmul.f32 %v409, %v413
    %v426 = vmul.f32 %v409, %v414
    %v427 = vmul.f32 %v409, %v415
    %v436 = vrot.slane %v424, 7
    %v437 = vsel %vm104, %v436, %v420
    %v438 = vrot.slane %v425, 7
    %v439 = vsel %vm104, %v438, %v421
    %v440 = vrot.slane %v426, 7
    %v441 = vsel %vm104, %v440, %v422
    %v442 = vrot.slane %v427, 7
    %v443 = vsel %vm104, %v442, %v423
    %v448 = vadd.f32 %v398, %v437
    %v449 = vadd.f32 %v399, %v439
    %v450 = vadd.f32 %v400, %v441
    %v451 = vadd.f32 %v401, %v443
    %v452 = vld [vmem:[%s222] ss:$4 sm:$0xf]
    %453 = vset.pattern.permute.xlu0 3
    %454 = vperm.xlu0 %453, %v289
    %v455 = vpop.permute.xlu0 %454
    %457 = vset.pattern.permute.xlu0 3
    %458 = vperm.xlu0 %457, %v290
    %v459 = vpop.permute.xlu0 %458
    %v462 = vperm.slane %v452, 0
    %v463 = vperm.slane %v452, 1
    %v464 = vperm.slane %v452, 2
    %v465 = vperm.slane %v452, 3
    %v470 = vmul.f32 %v455, %v462
    %v471 = vmul.f32 %v455, %v463
    %v472 = vmul.f32 %v455, %v464
    %v473 = vmul.f32 %v455, %v465
    %v474 = vmul.f32 %v459, %v462
    %v475 = vmul.f32 %v459, %v463
    %v476 = vmul.f32 %v459, %v464
    %v477 = vmul.f32 %v459, %v465
    %v486 = vrot.slane %v474, 7
    %v487 = vsel %vm104, %v486, %v470
    %v488 = vrot.slane %v475, 7
    %v489 = vsel %vm104, %v488, %v471
    %v490 = vrot.slane %v476, 7
    %v491 = vsel %vm104, %v490, %v472
    %v492 = vrot.slane %v477, 7
    %v493 = vsel %vm104, %v492, %v473
    %v498 = vadd.f32 %v448, %v487
    %v499 = vadd.f32 %v449, %v489
    %v500 = vadd.f32 %v450, %v491
    %v501 = vadd.f32 %v451, %v493
    %v506 = vrot.slane %v499, 6
    %v507 = vrot.slane %v500, 4
    %v508 = vrot.slane %v501, 2
    %v509 = vsel %vm280, %v498, %v506
    %v510 = vsel %vm282, %v507, %v508
    %v511 = vsel %vm284, %v509, %v510
    %s513 = scalar_lea.vmem [#allocation2], 8
    %514 = vst [vmem:[%s513] sm:$0xff] %v511
    %v515 = vld [vmem:[%s3] sm:$0xf]
    %v516 = vld [vmem:[%s0 + $0x2] sm:$0x1]
    %v517 = vld [vmem:[%s0 + $0xa] sm:$0x1]
    %v518 = vld [vmem:[%s1] ss:$4 sm:$0xf]
    %520 = vset.pattern.permute.xlu0 0
    %521 = vperm.xlu0 %520, %v516
    %v522 = vpop.permute.xlu0 %521
    %525 = vset.pattern.permute.xlu0 0
    %526 = vperm.xlu0 %525, %v517
    %v527 = vpop.permute.xlu0 %526
    %v530 = vperm.slane %v518, 0
    %v531 = vperm.slane %v518, 1
    %v532 = vperm.slane %v518, 2
    %v533 = vperm.slane %v518, 3
    %v538 = vmul.f32 %v522, %v530
    %v539 = vmul.f32 %v522, %v531
    %v540 = vmul.f32 %v522, %v532
    %v541 = vmul.f32 %v522, %v533
    %v542 = vmul.f32 %v527, %v530
    %v543 = vmul.f32 %v527, %v531
    %v544 = vmul.f32 %v527, %v532
    %v545 = vmul.f32 %v527, %v533
    %v547 = vperm.slane %v515, 0
    %v548 = vperm.slane %v515, 1
    %v549 = vperm.slane %v515, 2
    %v550 = vperm.slane %v515, 3
    %v563 = vrot.slane %v542, 7
    %v564 = vsel %vm104, %v563, %v538
    %v565 = vrot.slane %v543, 7
    %v566 = vsel %vm104, %v565, %v539
    %v567 = vrot.slane %v544, 7
    %v568 = vsel %vm104, %v567, %v540
    %v569 = vrot.slane %v545, 7
    %v570 = vsel %vm104, %v569, %v541
    %v575 = vadd.f32 %v547, %v564
    %v576 = vadd.f32 %v548, %v566
    %v577 = vadd.f32 %v549, %v568
    %v578 = vadd.f32 %v550, %v570
    %v579 = vld [vmem:[%s120] ss:$4 sm:$0xf]
    %580 = vset.pattern.permute.xlu0 1
    %581 = vperm.xlu0 %580, %v516
    %v582 = vpop.permute.xlu0 %581
    %584 = vset.pattern.permute.xlu0 1
    %585 = vperm.xlu0 %584, %v517
    %v586 = vpop.permute.xlu0 %585
    %v589 = vperm.slane %v579, 0
    %v590 = vperm.slane %v579, 1
    %v591 = vperm.slane %v579, 2
    %v592 = vperm.slane %v579, 3
    %v597 = vmul.f32 %v582, %v589
    %v598 = vmul.f32 %v582, %v590
    %v599 = vmul.f32 %v582, %v591
    %v600 = vmul.f32 %v582, %v592
    %v601 = vmul.f32 %v586, %v589
    %v602 = vmul.f32 %v586, %v590
    %v603 = vmul.f32 %v586, %v591
    %v604 = vmul.f32 %v586, %v592
    %v613 = vrot.slane %v601, 7
    %v614 = vsel %vm104, %v613, %v597
    %v615 = vrot.slane %v602, 7
    %v616 = vsel %vm104, %v615, %v598
    %v617 = vrot.slane %v603, 7
    %v618 = vsel %vm104, %v617, %v599
    %v619 = vrot.slane %v604, 7
    %v620 = vsel %vm104, %v619, %v600
    %v625 = vadd.f32 %v575, %v614
    %v626 = vadd.f32 %v576, %v616
    %v627 = vadd.f32 %v577, %v618
    %v628 = vadd.f32 %v578, %v620
    %v629 = vld [vmem:[%s171] ss:$4 sm:$0xf]
    %630 = vset.pattern.permute.xlu0 2
    %631 = vperm.xlu0 %630, %v516
    %v632 = vpop.permute.xlu0 %631
    %634 = vset.pattern.permute.xlu0 2
    %635 = vperm.xlu0 %634, %v517
    %v636 = vpop.permute.xlu0 %635
    %v639 = vperm.slane %v629, 0
    %v640 = vperm.slane %v629, 1
    %v641 = vperm.slane %v629, 2
    %v642 = vperm.slane %v629, 3
    %v647 = vmul.f32 %v632, %v639
    %v648 = vmul.f32 %v632, %v640
    %v649 = vmul.f32 %v632, %v641
    %v650 = vmul.f32 %v632, %v642
    %v651 = vmul.f32 %v636, %v639
    %v652 = vmul.f32 %v636, %v640
    %v653 = vmul.f32 %v636, %v641
    %v654 = vmul.f32 %v636, %v642
    %v663 = vrot.slane %v651, 7
    %v664 = vsel %vm104, %v663, %v647
    %v665 = vrot.slane %v652, 7
    %v666 = vsel %vm104, %v665, %v648
    %v667 = vrot.slane %v653, 7
    %v668 = vsel %vm104, %v667, %v649
    %v669 = vrot.slane %v654, 7
    %v670 = vsel %vm104, %v669, %v650
    %v675 = vadd.f32 %v625, %v664
    %v676 = vadd.f32 %v626, %v666
    %v677 = vadd.f32 %v627, %v668
    %v678 = vadd.f32 %v628, %v670
    %v679 = vld [vmem:[%s222] ss:$4 sm:$0xf]
    %680 = vset.pattern.permute.xlu0 3
    %681 = vperm.xlu0 %680, %v516
    %v682 = vpop.permute.xlu0 %681
    %684 = vset.pattern.permute.xlu0 3
    %685 = vperm.xlu0 %684, %v517
    %v686 = vpop.permute.xlu0 %685
    %v689 = vperm.slane %v679, 0
    %v690 = vperm.slane %v679, 1
    %v691 = vperm.slane %v679, 2
    %v692 = vperm.slane %v679, 3
    %v697 = vmul.f32 %v682, %v689
    %v698 = vmul.f32 %v682, %v690
    %v699 = vmul.f32 %v682, %v691
    %v700 = vmul.f32 %v682, %v692
    %v701 = vmul.f32 %v686, %v689
    %v702 = vmul.f32 %v686, %v690
    %v703 = vmul.f32 %v686, %v691
    %v704 = vmul.f32 %v686, %v692
    %v713 = vrot.slane %v701, 7
    %v714 = vsel %vm104, %v713, %v697
    %v715 = vrot.slane %v702, 7
    %v716 = vsel %vm104, %v715, %v698
    %v717 = vrot.slane %v703, 7
    %v718 = vsel %vm104, %v717, %v699
    %v719 = vrot.slane %v704, 7
    %v720 = vsel %vm104, %v719, %v700
    %v725 = vadd.f32 %v675, %v714
    %v726 = vadd.f32 %v676, %v716
    %v727 = vadd.f32 %v677, %v718
    %v728 = vadd.f32 %v678, %v720
    %v733 = vrot.slane %v726, 6
    %v734 = vrot.slane %v727, 4
    %v735 = vrot.slane %v728, 2
    %v736 = vsel %vm280, %v725, %v733
    %v737 = vsel %vm282, %v734, %v735
    %v738 = vsel %vm284, %v736, %v737
    %s740 = scalar_lea.vmem [#allocation2], 16
    %741 = vst [vmem:[%s740] sm:$0xff] %v738
    %v742 = vld [vmem:[%s3] sm:$0xf]
    %v743 = vld [vmem:[%s0 + $0x3] sm:$0x1]
    %v744 = vld [vmem:[%s0 + $0xb] sm:$0x1]
    %v745 = vld [vmem:[%s1] ss:$4 sm:$0xf]
    %747 = vset.pattern.permute.xlu0 0
    %748 = vperm.xlu0 %747, %v743
    %v749 = vpop.permute.xlu0 %748
    %752 = vset.pattern.permute.xlu0 0
    %753 = vperm.xlu0 %752, %v744
    %v754 = vpop.permute.xlu0 %753
    %v757 = vperm.slane %v745, 0
    %v758 = vperm.slane %v745, 1
    %v759 = vperm.slane %v745, 2
    %v760 = vperm.slane %v745, 3
    %v765 = vmul.f32 %v749, %v757
    %v766 = vmul.f32 %v749, %v758
    %v767 = vmul.f32 %v749, %v759
    %v768 = vmul.f32 %v749, %v760
    %v769 = vmul.f32 %v754, %v757
    %v770 = vmul.f32 %v754, %v758
    %v771 = vmul.f32 %v754, %v759
    %v772 = vmul.f32 %v754, %v760
    %v774 = vperm.slane %v742, 0
    %v775 = vperm.slane %v742, 1
    %v776 = vperm.slane %v742, 2
    %v777 = vperm.slane %v742, 3
    %v790 = vrot.slane %v769, 7
    %v791 = vsel %vm104, %v790, %v765
    %v792 = vrot.slane %v770, 7
    %v793 = vsel %vm104, %v792, %v766
    %v794 = vrot.slane %v771, 7
    %v795 = vsel %vm104, %v794, %v767
    %v796 = vrot.slane %v772, 7
    %v797 = vsel %vm104, %v796, %v768
    %v802 = vadd.f32 %v774, %v791
    %v803 = vadd.f32 %v775, %v793
    %v804 = vadd.f32 %v776, %v795
    %v805 = vadd.f32 %v777, %v797
    %v806 = vld [vmem:[%s120] ss:$4 sm:$0xf]
    %807 = vset.pattern.permute.xlu0 1
    %808 = vperm.xlu0 %807, %v743
    %v809 = vpop.permute.xlu0 %808
    %811 = vset.pattern.permute.xlu0 1
    %812 = vperm.xlu0 %811, %v744
    %v813 = vpop.permute.xlu0 %812
    %v816 = vperm.slane %v806, 0
    %v817 = vperm.slane %v806, 1
    %v818 = vperm.slane %v806, 2
    %v819 = vperm.slane %v806, 3
    %v824 = vmul.f32 %v809, %v816
    %v825 = vmul.f32 %v809, %v817
    %v826 = vmul.f32 %v809, %v818
    %v827 = vmul.f32 %v809, %v819
    %v828 = vmul.f32 %v813, %v816
    %v829 = vmul.f32 %v813, %v817
    %v830 = vmul.f32 %v813, %v818
    %v831 = vmul.f32 %v813, %v819
    %v840 = vrot.slane %v828, 7
    %v841 = vsel %vm104, %v840, %v824
    %v842 = vrot.slane %v829, 7
    %v843 = vsel %vm104, %v842, %v825
    %v844 = vrot.slane %v830, 7
    %v845 = vsel %vm104, %v844, %v826
    %v846 = vrot.slane %v831, 7
    %v847 = vsel %vm104, %v846, %v827
    %v852 = vadd.f32 %v802, %v841
    %v853 = vadd.f32 %v803, %v843
    %v854 = vadd.f32 %v804, %v845
    %v855 = vadd.f32 %v805, %v847
    %v856 = vld [vmem:[%s171] ss:$4 sm:$0xf]
    %857 = vset.pattern.permute.xlu0 2
    %858 = vperm.xlu0 %857, %v743
    %v859 = vpop.permute.xlu0 %858
    %861 = vset.pattern.permute.xlu0 2
    %862 = vperm.xlu0 %861, %v744
    %v863 = vpop.permute.xlu0 %862
    %v866 = vperm.slane %v856, 0
    %v867 = vperm.slane %v856, 1
    %v868 = vperm.slane %v856, 2
    %v869 = vperm.slane %v856, 3
    %v874 = vmul.f32 %v859, %v866
    %v875 = vmul.f32 %v859, %v867
    %v876 = vmul.f32 %v859, %v868
    %v877 = vmul.f32 %v859, %v869
    %v878 = vmul.f32 %v863, %v866
    %v879 = vmul.f32 %v863, %v867
    %v880 = vmul.f32 %v863, %v868
    %v881 = vmul.f32 %v863, %v869
    %v890 = vrot.slane %v878, 7
    %v891 = vsel %vm104, %v890, %v874
    %v892 = vrot.slane %v879, 7
    %v893 = vsel %vm104, %v892, %v875
    %v894 = vrot.slane %v880, 7
    %v895 = vsel %vm104, %v894, %v876
    %v896 = vrot.slane %v881, 7
    %v897 = vsel %vm104, %v896, %v877
    %v902 = vadd.f32 %v852, %v891
    %v903 = vadd.f32 %v853, %v893
    %v904 = vadd.f32 %v854, %v895
    %v905 = vadd.f32 %v855, %v897
    %v906 = vld [vmem:[%s222] ss:$4 sm:$0xf]
    %907 = vset.pattern.permute.xlu0 3
    %908 = vperm.xlu0 %907, %v743
    %v909 = vpop.permute.xlu0 %908
    %911 = vset.pattern.permute.xlu0 3
    %912 = vperm.xlu0 %911, %v744
    %v913 = vpop.permute.xlu0 %912
    %v916 = vperm.slane %v906, 0
    %v917 = vperm.slane %v906, 1
    %v918 = vperm.slane %v906, 2
    %v919 = vperm.slane %v906, 3
    %v924 = vmul.f32 %v909, %v916
    %v925 = vmul.f32 %v909, %v917
    %v926 = vmul.f32 %v909, %v918
    %v927 = vmul.f32 %v909, %v919
    %v928 = vmul.f32 %v913, %v916
    %v929 = vmul.f32 %v913, %v917
    %v930 = vmul.f32 %v913, %v918
    %v931 = vmul.f32 %v913, %v919
    %v940 = vrot.slane %v928, 7
    %v941 = vsel %vm104, %v940, %v924
    %v942 = vrot.slane %v929, 7
    %v943 = vsel %vm104, %v942, %v925
    %v944 = vrot.slane %v930, 7
    %v945 = vsel %vm104, %v944, %v926
    %v946 = vrot.slane %v931, 7
    %v947 = vsel %vm104, %v946, %v927
    %v952 = vadd.f32 %v902, %v941
    %v953 = vadd.f32 %v903, %v943
    %v954 = vadd.f32 %v904, %v945
    %v955 = vadd.f32 %v905, %v947
    %v960 = vrot.slane %v953, 6
    %v961 = vrot.slane %v954, 4
    %v962 = vrot.slane %v955, 2
    %v963 = vsel %vm280, %v952, %v960
    %v964 = vsel %vm282, %v961, %v962
    %v965 = vsel %vm284, %v963, %v964
    %s967 = scalar_lea.vmem [#allocation2], 24
    %968 = vst [vmem:[%s967] sm:$0xff] %v965
    %v969 = vld [vmem:[%s3] sm:$0xf]
    %v970 = vld [vmem:[%s0 + $0x4] sm:$0x1]
    %v971 = vld [vmem:[%s0 + $0xc] sm:$0x1]
    %v972 = vld [vmem:[%s1] ss:$4 sm:$0xf]
    %974 = vset.pattern.permute.xlu0 0
    %975 = vperm.xlu0 %974, %v970
    %v976 = vpop.permute.xlu0 %975
    %979 = vset.pattern.permute.xlu0 0
    %980 = vperm.xlu0 %979, %v971
    %v981 = vpop.permute.xlu0 %980
    %v984 = vperm.slane %v972, 0
    %v985 = vperm.slane %v972, 1
    %v986 = vperm.slane %v972, 2
    %v987 = vperm.slane %v972, 3
    %v992 = vmul.f32 %v976, %v984
    %v993 = vmul.f32 %v976, %v985
    %v994 = vmul.f32 %v976, %v986
    %v995 = vmul.f32 %v976, %v987
    %v996 = vmul.f32 %v981, %v984
    %v997 = vmul.f32 %v981, %v985
    %v998 = vmul.f32 %v981, %v986
    %v999 = vmul.f32 %v981, %v987
    %v1001 = vperm.slane %v969, 0
    %v1002 = vperm.slane %v969, 1
    %v1003 = vperm.slane %v969, 2
    %v1004 = vperm.slane %v969, 3
    %v1017 = vrot.slane %v996, 7
    %v1018 = vsel %vm104, %v1017, %v992
    %v1019 = vrot.slane %v997, 7
    %v1020 = vsel %vm104, %v1019, %v993
    %v1021 = vrot.slane %v998, 7
    %v1022 = vsel %vm104, %v1021, %v994
    %v1023 = vrot.slane %v999, 7
    %v1024 = vsel %vm104, %v1023, %v995
    %v1029 = vadd.f32 %v1001, %v1018
    %v1030 = vadd.f32 %v1002, %v1020
    %v1031 = vadd.f32 %v1003, %v1022
    %v1032 = vadd.f32 %v1004, %v1024
    %v1033 = vld [vmem:[%s120] ss:$4 sm:$0xf]
    %1034 = vset.pattern.permute.xlu0 1
    %1035 = vperm.xlu0 %1034, %v970
    %v1036 = vpop.permute.xlu0 %1035
    %1038 = vset.pattern.permute.xlu0 1
    %1039 = vperm.xlu0 %1038, %v971
    %v1040 = vpop.permute.xlu0 %1039
    %v1043 = vperm.slane %v1033, 0
    %v1044 = vperm.slane %v1033, 1
    %v1045 = vperm.slane %v1033, 2
    %v1046 = vperm.slane %v1033, 3
    %v1051 = vmul.f32 %v1036, %v1043
    %v1052 = vmul.f32 %v1036, %v1044
    %v1053 = vmul.f32 %v1036, %v1045
    %v1054 = vmul.f32 %v1036, %v1046
    %v1055 = vmul.f32 %v1040, %v1043
    %v1056 = vmul.f32 %v1040, %v1044
    %v1057 = vmul.f32 %v1040, %v1045
    %v1058 = vmul.f32 %v1040, %v1046
    %v1067 = vrot.slane %v1055, 7
    %v1068 = vsel %vm104, %v1067, %v1051
    %v1069 = vrot.slane %v1056, 7
    %v1070 = vsel %vm104, %v1069, %v1052
    %v1071 = vrot.slane %v1057, 7
    %v1072 = vsel %vm104, %v1071, %v1053
    %v1073 = vrot.slane %v1058, 7
    %v1074 = vsel %vm104, %v1073, %v1054
    %v1079 = vadd.f32 %v1029, %v1068
    %v1080 = vadd.f32 %v1030, %v1070
    %v1081 = vadd.f32 %v1031, %v1072
    %v1082 = vadd.f32 %v1032, %v1074
    %v1083 = vld [vmem:[%s171] ss:$4 sm:$0xf]
    %1084 = vset.pattern.permute.xlu0 2
    %1085 = vperm.xlu0 %1084, %v970
    %v1086 = vpop.permute.xlu0 %1085
    %1088 = vset.pattern.permute.xlu0 2
    %1089 = vperm.xlu0 %1088, %v971
    %v1090 = vpop.permute.xlu0 %1089
    %v1093 = vperm.slane %v1083, 0
    %v1094 = vperm.slane %v1083, 1
    %v1095 = vperm.slane %v1083, 2
    %v1096 = vperm.slane %v1083, 3
    %v1101 = vmul.f32 %v1086, %v1093
    %v1102 = vmul.f32 %v1086, %v1094
    %v1103 = vmul.f32 %v1086, %v1095
    %v1104 = vmul.f32 %v1086, %v1096
    %v1105 = vmul.f32 %v1090, %v1093
    %v1106 = vmul.f32 %v1090, %v1094
    %v1107 = vmul.f32 %v1090, %v1095
    %v1108 = vmul.f32 %v1090, %v1096
    %v1117 = vrot.slane %v1105, 7
    %v1118 = vsel %vm104, %v1117, %v1101
    %v1119 = vrot.slane %v1106, 7
    %v1120 = vsel %vm104, %v1119, %v1102
    %v1121 = vrot.slane %v1107, 7
    %v1122 = vsel %vm104, %v1121, %v1103
    %v1123 = vrot.slane %v1108, 7
    %v1124 = vsel %vm104, %v1123, %v1104
    %v1129 = vadd.f32 %v1079, %v1118
    %v1130 = vadd.f32 %v1080, %v1120
    %v1131 = vadd.f32 %v1081, %v1122
    %v1132 = vadd.f32 %v1082, %v1124
    %v1133 = vld [vmem:[%s222] ss:$4 sm:$0xf]
    %1134 = vset.pattern.permute.xlu0 3
    %1135 = vperm.xlu0 %1134, %v970
    %v1136 = vpop.permute.xlu0 %1135
    %1138 = vset.pattern.permute.xlu0 3
    %1139 = vperm.xlu0 %1138, %v971
    %v1140 = vpop.permute.xlu0 %1139
    %v1143 = vperm.slane %v1133, 0
    %v1144 = vperm.slane %v1133, 1
    %v1145 = vperm.slane %v1133, 2
    %v1146 = vperm.slane %v1133, 3
    %v1151 = vmul.f32 %v1136, %v1143
    %v1152 = vmul.f32 %v1136, %v1144
    %v1153 = vmul.f32 %v1136, %v1145
    %v1154 = vmul.f32 %v1136, %v1146
    %v1155 = vmul.f32 %v1140, %v1143
    %v1156 = vmul.f32 %v1140, %v1144
    %v1157 = vmul.f32 %v1140, %v1145
    %v1158 = vmul.f32 %v1140, %v1146
    %v1167 = vrot.slane %v1155, 7
    %v1168 = vsel %vm104, %v1167, %v1151
    %v1169 = vrot.slane %v1156, 7
    %v1170 = vsel %vm104, %v1169, %v1152
    %v1171 = vrot.slane %v1157, 7
    %v1172 = vsel %vm104, %v1171, %v1153
    %v1173 = vrot.slane %v1158, 7
    %v1174 = vsel %vm104, %v1173, %v1154
    %v1179 = vadd.f32 %v1129, %v1168
    %v1180 = vadd.f32 %v1130, %v1170
    %v1181 = vadd.f32 %v1131, %v1172
    %v1182 = vadd.f32 %v1132, %v1174
    %v1187 = vrot.slane %v1180, 6
    %v1188 = vrot.slane %v1181, 4
    %v1189 = vrot.slane %v1182, 2
    %v1190 = vsel %vm280, %v1179, %v1187
    %v1191 = vsel %vm282, %v1188, %v1189
    %v1192 = vsel %vm284, %v1190, %v1191
    %s1194 = scalar_lea.vmem [#allocation2], 32
    %1195 = vst [vmem:[%s1194] sm:$0xff] %v1192
    %v1196 = vld [vmem:[%s3] sm:$0xf]
    %v1197 = vld [vmem:[%s0 + $0x5] sm:$0x1]
    %v1198 = vld [vmem:[%s0 + $0xd] sm:$0x1]
    %v1199 = vld [vmem:[%s1] ss:$4 sm:$0xf]
    %1201 = vset.pattern.permute.xlu0 0
    %1202 = vperm.xlu0 %1201, %v1197
    %v1203 = vpop.permute.xlu0 %1202
    %1206 = vset.pattern.permute.xlu0 0
    %1207 = vperm.xlu0 %1206, %v1198
    %v1208 = vpop.permute.xlu0 %1207
    %v1211 = vperm.slane %v1199, 0
    %v1212 = vperm.slane %v1199, 1
    %v1213 = vperm.slane %v1199, 2
    %v1214 = vperm.slane %v1199, 3
    %v1219 = vmul.f32 %v1203, %v1211
    %v1220 = vmul.f32 %v1203, %v1212
    %v1221 = vmul.f32 %v1203, %v1213
    %v1222 = vmul.f32 %v1203, %v1214
    %v1223 = vmul.f32 %v1208, %v1211
    %v1224 = vmul.f32 %v1208, %v1212
    %v1225 = vmul.f32 %v1208, %v1213
    %v1226 = vmul.f32 %v1208, %v1214
    %v1228 = vperm.slane %v1196, 0
    %v1229 = vperm.slane %v1196, 1
    %v1230 = vperm.slane %v1196, 2
    %v1231 = vperm.slane %v1196, 3
    %v1244 = vrot.slane %v1223, 7
    %v1245 = vsel %vm104, %v1244, %v1219
    %v1246 = vrot.slane %v1224, 7
    %v1247 = vsel %vm104, %v1246, %v1220
    %v1248 = vrot.slane %v1225, 7
    %v1249 = vsel %vm104, %v1248, %v1221
    %v1250 = vrot.slane %v1226, 7
    %v1251 = vsel %vm104, %v1250, %v1222
    %v1256 = vadd.f32 %v1228, %v1245
    %v1257 = vadd.f32 %v1229, %v1247
    %v1258 = vadd.f32 %v1230, %v1249
    %v1259 = vadd.f32 %v1231, %v1251
    %v1260 = vld [vmem:[%s120] ss:$4 sm:$0xf]
    %1261 = vset.pattern.permute.xlu0 1
    %1262 = vperm.xlu0 %1261, %v1197
    %v1263 = vpop.permute.xlu0 %1262
    %1265 = vset.pattern.permute.xlu0 1
    %1266 = vperm.xlu0 %1265, %v1198
    %v1267 = vpop.permute.xlu0 %1266
    %v1270 = vperm.slane %v1260, 0
    %v1271 = vperm.slane %v1260, 1
    %v1272 = vperm.slane %v1260, 2
    %v1273 = vperm.slane %v1260, 3
    %v1278 = vmul.f32 %v1263, %v1270
    %v1279 = vmul.f32 %v1263, %v1271
    %v1280 = vmul.f32 %v1263, %v1272
    %v1281 = vmul.f32 %v1263, %v1273
    %v1282 = vmul.f32 %v1267, %v1270
    %v1283 = vmul.f32 %v1267, %v1271
    %v1284 = vmul.f32 %v1267, %v1272
    %v1285 = vmul.f32 %v1267, %v1273
    %v1294 = vrot.slane %v1282, 7
    %v1295 = vsel %vm104, %v1294, %v1278
    %v1296 = vrot.slane %v1283, 7
    %v1297 = vsel %vm104, %v1296, %v1279
    %v1298 = vrot.slane %v1284, 7
    %v1299 = vsel %vm104, %v1298, %v1280
    %v1300 = vrot.slane %v1285, 7
    %v1301 = vsel %vm104, %v1300, %v1281
    %v1306 = vadd.f32 %v1256, %v1295
    %v1307 = vadd.f32 %v1257, %v1297
    %v1308 = vadd.f32 %v1258, %v1299
    %v1309 = vadd.f32 %v1259, %v1301
    %v1310 = vld [vmem:[%s171] ss:$4 sm:$0xf]
    %1311 = vset.pattern.permute.xlu0 2
    %1312 = vperm.xlu0 %1311, %v1197
    %v1313 = vpop.permute.xlu0 %1312
    %1315 = vset.pattern.permute.xlu0 2
    %1316 = vperm.xlu0 %1315, %v1198
    %v1317 = vpop.permute.xlu0 %1316
    %v1320 = vperm.slane %v1310, 0
    %v1321 = vperm.slane %v1310, 1
    %v1322 = vperm.slane %v1310, 2
    %v1323 = vperm.slane %v1310, 3
    %v1328 = vmul.f32 %v1313, %v1320
    %v1329 = vmul.f32 %v1313, %v1321
    %v1330 = vmul.f32 %v1313, %v1322
    %v1331 = vmul.f32 %v1313, %v1323
    %v1332 = vmul.f32 %v1317, %v1320
    %v1333 = vmul.f32 %v1317, %v1321
    %v1334 = vmul.f32 %v1317, %v1322
    %v1335 = vmul.f32 %v1317, %v1323
    %v1344 = vrot.slane %v1332, 7
    %v1345 = vsel %vm104, %v1344, %v1328
    %v1346 = vrot.slane %v1333, 7
    %v1347 = vsel %vm104, %v1346, %v1329
    %v1348 = vrot.slane %v1334, 7
    %v1349 = vsel %vm104, %v1348, %v1330
    %v1350 = vrot.slane %v1335, 7
    %v1351 = vsel %vm104, %v1350, %v1331
    %v1356 = vadd.f32 %v1306, %v1345
    %v1357 = vadd.f32 %v1307, %v1347
    %v1358 = vadd.f32 %v1308, %v1349
    %v1359 = vadd.f32 %v1309, %v1351
    %v1360 = vld [vmem:[%s222] ss:$4 sm:$0xf]
    %1361 = vset.pattern.permute.xlu0 3
    %1362 = vperm.xlu0 %1361, %v1197
    %v1363 = vpop.permute.xlu0 %1362
    %1365 = vset.pattern.permute.xlu0 3
    %1366 = vperm.xlu0 %1365, %v1198
    %v1367 = vpop.permute.xlu0 %1366
    %v1370 = vperm.slane %v1360, 0
    %v1371 = vperm.slane %v1360, 1
    %v1372 = vperm.slane %v1360, 2
    %v1373 = vperm.slane %v1360, 3
    %v1378 = vmul.f32 %v1363, %v1370
    %v1379 = vmul.f32 %v1363, %v1371
    %v1380 = vmul.f32 %v1363, %v1372
    %v1381 = vmul.f32 %v1363, %v1373
    %v1382 = vmul.f32 %v1367, %v1370
    %v1383 = vmul.f32 %v1367, %v1371
    %v1384 = vmul.f32 %v1367, %v1372
    %v1385 = vmul.f32 %v1367, %v1373
    %v1394 = vrot.slane %v1382, 7
    %v1395 = vsel %vm104, %v1394, %v1378
    %v1396 = vrot.slane %v1383, 7
    %v1397 = vsel %vm104, %v1396, %v1379
    %v1398 = vrot.slane %v1384, 7
    %v1399 = vsel %vm104, %v1398, %v1380
    %v1400 = vrot.slane %v1385, 7
    %v1401 = vsel %vm104, %v1400, %v1381
    %v1406 = vadd.f32 %v1356, %v1395
    %v1407 = vadd.f32 %v1357, %v1397
    %v1408 = vadd.f32 %v1358, %v1399
    %v1409 = vadd.f32 %v1359, %v1401
    %v1414 = vrot.slane %v1407, 6
    %v1415 = vrot.slane %v1408, 4
    %v1416 = vrot.slane %v1409, 2
    %v1417 = vsel %vm280, %v1406, %v1414
    %v1418 = vsel %vm282, %v1415, %v1416
    %v1419 = vsel %vm284, %v1417, %v1418
    %s1421 = scalar_lea.vmem [#allocation2], 40
    %1422 = vst [vmem:[%s1421] sm:$0xff] %v1419
    %v1423 = vld [vmem:[%s3] sm:$0xf]
    %v1424 = vld [vmem:[%s0 + $0x6] sm:$0x1]
    %v1425 = vld [vmem:[%s0 + $0xe] sm:$0x1]
    %v1426 = vld [vmem:[%s1] ss:$4 sm:$0xf]
    %1428 = vset.pattern.permute.xlu0 0
    %1429 = vperm.xlu0 %1428, %v1424
    %v1430 = vpop.permute.xlu0 %1429
    %1433 = vset.pattern.permute.xlu0 0
    %1434 = vperm.xlu0 %1433, %v1425
    %v1435 = vpop.permute.xlu0 %1434
    %v1438 = vperm.slane %v1426, 0
    %v1439 = vperm.slane %v1426, 1
    %v1440 = vperm.slane %v1426, 2
    %v1441 = vperm.slane %v1426, 3
    %v1446 = vmul.f32 %v1430, %v1438
    %v1447 = vmul.f32 %v1430, %v1439
    %v1448 = vmul.f32 %v1430, %v1440
    %v1449 = vmul.f32 %v1430, %v1441
    %v1450 = vmul.f32 %v1435, %v1438
    %v1451 = vmul.f32 %v1435, %v1439
    %v1452 = vmul.f32 %v1435, %v1440
    %v1453 = vmul.f32 %v1435, %v1441
    %v1455 = vperm.slane %v1423, 0
    %v1456 = vperm.slane %v1423, 1
    %v1457 = vperm.slane %v1423, 2
    %v1458 = vperm.slane %v1423, 3
    %v1471 = vrot.slane %v1450, 7
    %v1472 = vsel %vm104, %v1471, %v1446
    %v1473 = vrot.slane %v1451, 7
    %v1474 = vsel %vm104, %v1473, %v1447
    %v1475 = vrot.slane %v1452, 7
    %v1476 = vsel %vm104, %v1475, %v1448
    %v1477 = vrot.slane %v1453, 7
    %v1478 = vsel %vm104, %v1477, %v1449
    %v1483 = vadd.f32 %v1455, %v1472
    %v1484 = vadd.f32 %v1456, %v1474
    %v1485 = vadd.f32 %v1457, %v1476
    %v1486 = vadd.f32 %v1458, %v1478
    %v1487 = vld [vmem:[%s120] ss:$4 sm:$0xf]
    %1488 = vset.pattern.permute.xlu0 1
    %1489 = vperm.xlu0 %1488, %v1424
    %v1490 = vpop.permute.xlu0 %1489
    %1492 = vset.pattern.permute.xlu0 1
    %1493 = vperm.xlu0 %1492, %v1425
    %v1494 = vpop.permute.xlu0 %1493
    %v1497 = vperm.slane %v1487, 0
    %v1498 = vperm.slane %v1487, 1
    %v1499 = vperm.slane %v1487, 2
    %v1500 = vperm.slane %v1487, 3
    %v1505 = vmul.f32 %v1490, %v1497
    %v1506 = vmul.f32 %v1490, %v1498
    %v1507 = vmul.f32 %v1490, %v1499
    %v1508 = vmul.f32 %v1490, %v1500
    %v1509 = vmul.f32 %v1494, %v1497
    %v1510 = vmul.f32 %v1494, %v1498
    %v1511 = vmul.f32 %v1494, %v1499
    %v1512 = vmul.f32 %v1494, %v1500
    %v1521 = vrot.slane %v1509, 7
    %v1522 = vsel %vm104, %v1521, %v1505
    %v1523 = vrot.slane %v1510, 7
    %v1524 = vsel %vm104, %v1523, %v1506
    %v1525 = vrot.slane %v1511, 7
    %v1526 = vsel %vm104, %v1525, %v1507
    %v1527 = vrot.slane %v1512, 7
    %v1528 = vsel %vm104, %v1527, %v1508
    %v1533 = vadd.f32 %v1483, %v1522
    %v1534 = vadd.f32 %v1484, %v1524
    %v1535 = vadd.f32 %v1485, %v1526
    %v1536 = vadd.f32 %v1486, %v1528
    %v1537 = vld [vmem:[%s171] ss:$4 sm:$0xf]
    %1538 = vset.pattern.permute.xlu0 2
    %1539 = vperm.xlu0 %1538, %v1424
    %v1540 = vpop.permute.xlu0 %1539
    %1542 = vset.pattern.permute.xlu0 2
    %1543 = vperm.xlu0 %1542, %v1425
    %v1544 = vpop.permute.xlu0 %1543
    %v1547 = vperm.slane %v1537, 0
    %v1548 = vperm.slane %v1537, 1
    %v1549 = vperm.slane %v1537, 2
    %v1550 = vperm.slane %v1537, 3
    %v1555 = vmul.f32 %v1540, %v1547
    %v1556 = vmul.f32 %v1540, %v1548
    %v1557 = vmul.f32 %v1540, %v1549
    %v1558 = vmul.f32 %v1540, %v1550
    %v1559 = vmul.f32 %v1544, %v1547
    %v1560 = vmul.f32 %v1544, %v1548
    %v1561 = vmul.f32 %v1544, %v1549
    %v1562 = vmul.f32 %v1544, %v1550
    %v1571 = vrot.slane %v1559, 7
    %v1572 = vsel %vm104, %v1571, %v1555
    %v1573 = vrot.slane %v1560, 7
    %v1574 = vsel %vm104, %v1573, %v1556
    %v1575 = vrot.slane %v1561, 7
    %v1576 = vsel %vm104, %v1575, %v1557
    %v1577 = vrot.slane %v1562, 7
    %v1578 = vsel %vm104, %v1577, %v1558
    %v1583 = vadd.f32 %v1533, %v1572
    %v1584 = vadd.f32 %v1534, %v1574
    %v1585 = vadd.f32 %v1535, %v1576
    %v1586 = vadd.f32 %v1536, %v1578
    %v1587 = vld [vmem:[%s222] ss:$4 sm:$0xf]
    %1588 = vset.pattern.permute.xlu0 3
    %1589 = vperm.xlu0 %1588, %v1424
    %v1590 = vpop.permute.xlu0 %1589
    %1592 = vset.pattern.permute.xlu0 3
    %1593 = vperm.xlu0 %1592, %v1425
    %v1594 = vpop.permute.xlu0 %1593
    %v1597 = vperm.slane %v1587, 0
    %v1598 = vperm.slane %v1587, 1
    %v1599 = vperm.slane %v1587, 2
    %v1600 = vperm.slane %v1587, 3
    %v1605 = vmul.f32 %v1590, %v1597
    %v1606 = vmul.f32 %v1590, %v1598
    %v1607 = vmul.f32 %v1590, %v1599
    %v1608 = vmul.f32 %v1590, %v1600
    %v1609 = vmul.f32 %v1594, %v1597
    %v1610 = vmul.f32 %v1594, %v1598
    %v1611 = vmul.f32 %v1594, %v1599
    %v1612 = vmul.f32 %v1594, %v1600
    %v1621 = vrot.slane %v1609, 7
    %v1622 = vsel %vm104, %v1621, %v1605
    %v1623 = vrot.slane %v1610, 7
    %v1624 = vsel %vm104, %v1623, %v1606
    %v1625 = vrot.slane %v1611, 7
    %v1626 = vsel %vm104, %v1625, %v1607
    %v1627 = vrot.slane %v1612, 7
    %v1628 = vsel %vm104, %v1627, %v1608
    %v1633 = vadd.f32 %v1583, %v1622
    %v1634 = vadd.f32 %v1584, %v1624
    %v1635 = vadd.f32 %v1585, %v1626
    %v1636 = vadd.f32 %v1586, %v1628
    %v1641 = vrot.slane %v1634, 6
    %v1642 = vrot.slane %v1635, 4
    %v1643 = vrot.slane %v1636, 2
    %v1644 = vsel %vm280, %v1633, %v1641
    %v1645 = vsel %vm282, %v1642, %v1643
    %v1646 = vsel %vm284, %v1644, %v1645
    %s1648 = scalar_lea.vmem [#allocation2], 48
    %1649 = vst [vmem:[%s1648] sm:$0xff] %v1646
    %v1650 = vld [vmem:[%s3] sm:$0xf]
    %v1651 = vld [vmem:[%s0 + $0x7] sm:$0x1]
    %v1652 = vld [vmem:[%s0 + $0xf] sm:$0x1]
    %v1653 = vld [vmem:[%s1] ss:$4 sm:$0xf]
    %1655 = vset.pattern.permute.xlu0 0
    %1656 = vperm.xlu0 %1655, %v1651
    %v1657 = vpop.permute.xlu0 %1656
    %1660 = vset.pattern.permute.xlu0 0
    %1661 = vperm.xlu0 %1660, %v1652
    %v1662 = vpop.permute.xlu0 %1661
    %v1665 = vperm.slane %v1653, 0
    %v1666 = vperm.slane %v1653, 1
    %v1667 = vperm.slane %v1653, 2
    %v1668 = vperm.slane %v1653, 3
    %v1673 = vmul.f32 %v1657, %v1665
    %v1674 = vmul.f32 %v1657, %v1666
    %v1675 = vmul.f32 %v1657, %v1667
    %v1676 = vmul.f32 %v1657, %v1668
    %v1677 = vmul.f32 %v1662, %v1665
    %v1678 = vmul.f32 %v1662, %v1666
    %v1679 = vmul.f32 %v1662, %v1667
    %v1680 = vmul.f32 %v1662, %v1668
    %v1682 = vperm.slane %v1650, 0
    %v1683 = vperm.slane %v1650, 1
    %v1684 = vperm.slane %v1650, 2
    %v1685 = vperm.slane %v1650, 3
    %v1698 = vrot.slane %v1677, 7
    %v1699 = vsel %vm104, %v1698, %v1673
    %v1700 = vrot.slane %v1678, 7
    %v1701 = vsel %vm104, %v1700, %v1674
    %v1702 = vrot.slane %v1679, 7
    %v1703 = vsel %vm104, %v1702, %v1675
    %v1704 = vrot.slane %v1680, 7
    %v1705 = vsel %vm104, %v1704, %v1676
    %v1710 = vadd.f32 %v1682, %v1699
    %v1711 = vadd.f32 %v1683, %v1701
    %v1712 = vadd.f32 %v1684, %v1703
    %v1713 = vadd.f32 %v1685, %v1705
    %v1714 = vld [vmem:[%s120] ss:$4 sm:$0xf]
    %1715 = vset.pattern.permute.xlu0 1
    %1716 = vperm.xlu0 %1715, %v1651
    %v1717 = vpop.permute.xlu0 %1716
    %1719 = vset.pattern.permute.xlu0 1
    %1720 = vperm.xlu0 %1719, %v1652
    %v1721 = vpop.permute.xlu0 %1720
    %v1724 = vperm.slane %v1714, 0
    %v1725 = vperm.slane %v1714, 1
    %v1726 = vperm.slane %v1714, 2
    %v1727 = vperm.slane %v1714, 3
    %v1732 = vmul.f32 %v1717, %v1724
    %v1733 = vmul.f32 %v1717, %v1725
    %v1734 = vmul.f32 %v1717, %v1726
    %v1735 = vmul.f32 %v1717, %v1727
    %v1736 = vmul.f32 %v1721, %v1724
    %v1737 = vmul.f32 %v1721, %v1725
    %v1738 = vmul.f32 %v1721, %v1726
    %v1739 = vmul.f32 %v1721, %v1727
    %v1748 = vrot.slane %v1736, 7
    %v1749 = vsel %vm104, %v1748, %v1732
    %v1750 = vrot.slane %v1737, 7
    %v1751 = vsel %vm104, %v1750, %v1733
    %v1752 = vrot.slane %v1738, 7
    %v1753 = vsel %vm104, %v1752, %v1734
    %v1754 = vrot.slane %v1739, 7
    %v1755 = vsel %vm104, %v1754, %v1735
    %v1760 = vadd.f32 %v1710, %v1749
    %v1761 = vadd.f32 %v1711, %v1751
    %v1762 = vadd.f32 %v1712, %v1753
    %v1763 = vadd.f32 %v1713, %v1755
    %v1764 = vld [vmem:[%s171] ss:$4 sm:$0xf]
    %1765 = vset.pattern.permute.xlu0 2
    %1766 = vperm.xlu0 %1765, %v1651
    %v1767 = vpop.permute.xlu0 %1766
    %1769 = vset.pattern.permute.xlu0 2
    %1770 = vperm.xlu0 %1769, %v1652
    %v1771 = vpop.permute.xlu0 %1770
    %v1774 = vperm.slane %v1764, 0
    %v1775 = vperm.slane %v1764, 1
    %v1776 = vperm.slane %v1764, 2
    %v1777 = vperm.slane %v1764, 3
    %v1782 = vmul.f32 %v1767, %v1774
    %v1783 = vmul.f32 %v1767, %v1775
    %v1784 = vmul.f32 %v1767, %v1776
    %v1785 = vmul.f32 %v1767, %v1777
    %v1786 = vmul.f32 %v1771, %v1774
    %v1787 = vmul.f32 %v1771, %v1775
    %v1788 = vmul.f32 %v1771, %v1776
    %v1789 = vmul.f32 %v1771, %v1777
    %v1798 = vrot.slane %v1786, 7
    %v1799 = vsel %vm104, %v1798, %v1782
    %v1800 = vrot.slane %v1787, 7
    %v1801 = vsel %vm104, %v1800, %v1783
    %v1802 = vrot.slane %v1788, 7
    %v1803 = vsel %vm104, %v1802, %v1784
    %v1804 = vrot.slane %v1789, 7
    %v1805 = vsel %vm104, %v1804, %v1785
    %v1810 = vadd.f32 %v1760, %v1799
    %v1811 = vadd.f32 %v1761, %v1801
    %v1812 = vadd.f32 %v1762, %v1803
    %v1813 = vadd.f32 %v1763, %v1805
    %v1814 = vld [vmem:[%s222] ss:$4 sm:$0xf]
    %1815 = vset.pattern.permute.xlu0 3
    %1816 = vperm.xlu0 %1815, %v1651
    %v1817 = vpop.permute.xlu0 %1816
    %1819 = vset.pattern.permute.xlu0 3
    %1820 = vperm.xlu0 %1819, %v1652
    %v1821 = vpop.permute.xlu0 %1820
    %v1824 = vperm.slane %v1814, 0
    %v1825 = vperm.slane %v1814, 1
    %v1826 = vperm.slane %v1814, 2
    %v1827 = vperm.slane %v1814, 3
    %v1832 = vmul.f32 %v1817, %v1824
    %v1833 = vmul.f32 %v1817, %v1825
    %v1834 = vmul.f32 %v1817, %v1826
    %v1835 = vmul.f32 %v1817, %v1827
    %v1836 = vmul.f32 %v1821, %v1824
    %v1837 = vmul.f32 %v1821, %v1825
    %v1838 = vmul.f32 %v1821, %v1826
    %v1839 = vmul.f32 %v1821, %v1827
    %v1848 = vrot.slane %v1836, 7
    %v1849 = vsel %vm104, %v1848, %v1832
    %v1850 = vrot.slane %v1837, 7
    %v1851 = vsel %vm104, %v1850, %v1833
    %v1852 = vrot.slane %v1838, 7
    %v1853 = vsel %vm104, %v1852, %v1834
    %v1854 = vrot.slane %v1839, 7
    %v1855 = vsel %vm104, %v1854, %v1835
    %v1860 = vadd.f32 %v1810, %v1849
    %v1861 = vadd.f32 %v1811, %v1851
    %v1862 = vadd.f32 %v1812, %v1853
    %v1863 = vadd.f32 %v1813, %v1855
    %v1868 = vrot.slane %v1861, 6
    %v1869 = vrot.slane %v1862, 4
    %v1870 = vrot.slane %v1863, 2
    %v1871 = vsel %vm280, %v1860, %v1868
    %v1872 = vsel %vm282, %v1869, %v1870
    %v1873 = vsel %vm284, %v1871, %v1872
    %s1875 = scalar_lea.vmem [#allocation2], 56
    %1876 = vst [vmem:[%s1875] sm:$0xff] %v1873
    %v1877 = vld [vmem:[#allocation2] sm:$0xff]
    %v1878 = vld [vmem:[#allocation3] sm:$0xff]
    %v1879 = vld [vmem:[#allocation3 + $0x8] sm:$0xff]
    %v1880 = vld [vmem:[#allocation3 + $0x10] sm:$0xff]
    %v1881 = vld [vmem:[#allocation3 + $0x18] sm:$0xff]
    %v1882 = vld [vmem:[#allocation3 + $0x20] sm:$0xff]
    %v1883 = vld [vmem:[#allocation3 + $0x28] sm:$0xff]
    %v1884 = vld [vmem:[#allocation3 + $0x30] sm:$0xff]
    %v1885 = vld [vmem:[#allocation3 + $0x38] sm:$0xff]
    %v1886 = vld [vmem:[#allocation3 + $0x40] sm:$0xff]
    %v1887 = vld [vmem:[#allocation3 + $0x48] sm:$0xff]
    %v1888 = vld [vmem:[#allocation3 + $0x50] sm:$0xff]
    %v1889 = vld [vmem:[#allocation3 + $0x58] sm:$0xff]
    %v1890 = vld [vmem:[#allocation3 + $0x60] sm:$0xff]
    %v1891 = vld [vmem:[#allocation3 + $0x68] sm:$0xff]
    %v1892 = vld [vmem:[#allocation3 + $0x70] sm:$0xff]
    %v1893 = vld [vmem:[#allocation3 + $0x78] sm:$0xff]
    %v1894 = vld [vmem:[#allocation3 + $0x80] sm:$0xff]
    %v1895 = vld [vmem:[#allocation3 + $0x88] sm:$0xff]
    %v1896 = vld [vmem:[#allocation3 + $0x90] sm:$0xff]
    %v1897 = vld [vmem:[#allocation3 + $0x98] sm:$0xff]
    %v1898 = vld [vmem:[#allocation3 + $0xa0] sm:$0xff]
    %v1899 = vld [vmem:[#allocation3 + $0xa8] sm:$0xff]
    %v1900 = vld [vmem:[#allocation3 + $0xb0] sm:$0xff]
    %v1901 = vld [vmem:[#allocation3 + $0xb8] sm:$0xff]
    %v1902 = vld [vmem:[#allocation3 + $0xc0] sm:$0xff]
    %v1903 = vld [vmem:[#allocation3 + $0xc8] sm:$0xff]
    %v1904 = vld [vmem:[#allocation3 + $0xd0] sm:$0xff]
    %v1905 = vld [vmem:[#allocation3 + $0xd8] sm:$0xff]
    %v1906 = vld [vmem:[#allocation3 + $0xe0] sm:$0xff]
    %v1907 = vld [vmem:[#allocation3 + $0xe8] sm:$0xff]
    %v1908 = vld [vmem:[#allocation3 + $0xf0] sm:$0xff]
    %v1909 = vld [vmem:[#allocation3 + $0xf8] sm:$0xff]
    %v1910 = vld [vmem:[#allocation3 + $0x100] sm:$0xff]
    %v1911 = vld [vmem:[#allocation3 + $0x108] sm:$0xff]
    %v1912 = vld [vmem:[#allocation3 + $0x110] sm:$0xff]
    %v1913 = vld [vmem:[#allocation3 + $0x118] sm:$0xff]
    %v1914 = vld [vmem:[#allocation3 + $0x120] sm:$0xff]
    %v1915 = vld [vmem:[#allocation3 + $0x128] sm:$0xff]
    %v1916 = vld [vmem:[#allocation3 + $0x130] sm:$0xff]
    %v1917 = vld [vmem:[#allocation3 + $0x138] sm:$0xff]
    %v1918 = vld [vmem:[#allocation3 + $0x140] sm:$0xff]
    %v1919 = vld [vmem:[#allocation3 + $0x148] sm:$0xff]
    %v1920 = vld [vmem:[#allocation3 + $0x150] sm:$0xff]
    %v1921 = vld [vmem:[#allocation3 + $0x158] sm:$0xff]
    %v1922 = vld [vmem:[#allocation3 + $0x160] sm:$0xff]
    %v1923 = vld [vmem:[#allocation3 + $0x168] sm:$0xff]
    %v1924 = vld [vmem:[#allocation3 + $0x170] sm:$0xff]
    %v1925 = vld [vmem:[#allocation3 + $0x178] sm:$0xff]
    %v1926 = vld [vmem:[#allocation3 + $0x180] sm:$0xff]
    %v1927 = vld [vmem:[#allocation3 + $0x188] sm:$0xff]
    %v1928 = vld [vmem:[#allocation3 + $0x190] sm:$0xff]
    %v1929 = vld [vmem:[#allocation3 + $0x198] sm:$0xff]
    %v1930 = vld [vmem:[#allocation3 + $0x1a0] sm:$0xff]
    %v1931 = vld [vmem:[#allocation3 + $0x1a8] sm:$0xff]
    %v1932 = vld [vmem:[#allocation3 + $0x1b0] sm:$0xff]
    %v1933 = vld [vmem:[#allocation3 + $0x1b8] sm:$0xff]
    %v1934 = vld [vmem:[#allocation3 + $0x1c0] sm:$0xff]
    %v1935 = vld [vmem:[#allocation3 + $0x1c8] sm:$0xff]
    %v1936 = vld [vmem:[#allocation3 + $0x1d0] sm:$0xff]
    %v1937 = vld [vmem:[#allocation3 + $0x1d8] sm:$0xff]
    %v1938 = vld [vmem:[#allocation3 + $0x1e0] sm:$0xff]
    %v1939 = vld [vmem:[#allocation3 + $0x1e8] sm:$0xff]
    %v1940 = vld [vmem:[#allocation3 + $0x1f0] sm:$0xff]
    %v1941 = vld [vmem:[#allocation3 + $0x1f8] sm:$0xff]
    %1942 = vmatpush.msra.mxu0 %v1938
    %1943 = vmatpush.msra.mxu0 %v1934
    %1944 = vmatpush.msra.mxu0 %v1930
    %1945 = vmatpush.msra.mxu0 %v1926
    %1946 = vmatpush.msra.mxu0 %v1922
    %1947 = vmatpush.msra.mxu0 %v1918
    %1948 = vmatpush.msra.mxu0 %v1914
    %1949 = vmatpush.msra.mxu0 %v1910
    %1950 = vmatpush.msra.mxu0 %v1906
    %1951 = vmatpush.msra.mxu0 %v1902
    %1952 = vmatpush.msra.mxu0 %v1898
    %1953 = vmatpush.msra.mxu0 %v1894
    %1954 = vmatpush.msra.mxu0 %v1890
    %1955 = vmatpush.msra.mxu0 %v1886
    %1956 = vmatpush.msra.mxu0 %v1882
    %1957 = vmatpush.msra.mxu0 %v1878
    %1958 = vmatmul.f32.gmra.mxu0 0.0
    %v1959 = vpop.f32.mrf.mxu0
    %v1960 = vadd.f32 0.0, %v1959
    %1961 = vdwg.mxu0
    %1962 = vmatpush.msra.mxu0 %v1939
    %1963 = vmatpush.msra.mxu0 %v1935
    %1964 = vmatpush.msra.mxu0 %v1931
    %1965 = vmatpush.msra.mxu0 %v1927
    %1966 = vmatpush.msra.mxu0 %v1923
    %1967 = vmatpush.msra.mxu0 %v1919
    %1968 = vmatpush.msra.mxu0 %v1915
    %1969 = vmatpush.msra.mxu0 %v1911
    %1970 = vmatpush.msra.mxu0 %v1907
    %1971 = vmatpush.msra.mxu0 %v1903
    %1972 = vmatpush.msra.mxu0 %v1899
    %1973 = vmatpush.msra.mxu0 %v1895
    %1974 = vmatpush.msra.mxu0 %v1891
    %1975 = vmatpush.msra.mxu0 %v1887
    %1976 = vmatpush.msra.mxu0 %v1883
    %1977 = vmatpush.msra.mxu0 %v1879
    %1978 = vmatmul.f32.gmra.mxu0 0.0
    %v1979 = vpop.f32.mrf.mxu0
    %v1980 = vadd.f32 0.0, %v1979
    %1981 = vdwg.mxu0
    %1982 = vmatpush.msra.mxu0 %v1940
    %1983 = vmatpush.msra.mxu0 %v1936
    %1984 = vmatpush.msra.mxu0 %v1932
    %1985 = vmatpush.msra.mxu0 %v1928
    %1986 = vmatpush.msra.mxu0 %v1924
    %1987 = vmatpush.msra.mxu0 %v1920
    %1988 = vmatpush.msra.mxu0 %v1916
    %1989 = vmatpush.msra.mxu0 %v1912
    %1990 = vmatpush.msra.mxu0 %v1908
    %1991 = vmatpush.msra.mxu0 %v1904
    %1992 = vmatpush.msra.mxu0 %v1900
    %1993 = vmatpush.msra.mxu0 %v1896
    %1994 = vmatpush.msra.mxu0 %v1892
    %1995 = vmatpush.msra.mxu0 %v1888
    %1996 = vmatpush.msra.mxu0 %v1884
    %1997 = vmatpush.msra.mxu0 %v1880
    %1998 = vmatmul.f32.gmra.mxu0 0.0
    %v1999 = vpop.f32.mrf.mxu0
    %v2000 = vadd.f32 0.0, %v1999
    %2001 = vdwg.mxu0
    %2002 = vmatpush.msra.mxu0 %v1941
    %2003 = vmatpush.msra.mxu0 %v1937
    %2004 = vmatpush.msra.mxu0 %v1933
    %2005 = vmatpush.msra.mxu0 %v1929
    %2006 = vmatpush.msra.mxu0 %v1925
    %2007 = vmatpush.msra.mxu0 %v1921
    %2008 = vmatpush.msra.mxu0 %v1917
    %2009 = vmatpush.msra.mxu0 %v1913
    %2010 = vmatpush.msra.mxu0 %v1909
    %2011 = vmatpush.msra.mxu0 %v1905
    %2012 = vmatpush.msra.mxu0 %v1901
    %2013 = vmatpush.msra.mxu0 %v1897
    %2014 = vmatpush.msra.mxu0 %v1893
    %2015 = vmatpush.msra.mxu0 %v1889
    %2016 = vmatpush.msra.mxu0 %v1885
    %2017 = vmatpush.msra.mxu0 %v1881
    %2018 = vmatmul.f32.gmra.mxu0 0.0
    %v2019 = vpop.f32.mrf.mxu0
    %v2020 = vadd.f32 0.0, %v2019
    %2021 = vdwg.mxu0
    %v2026 = vrot.slane %v1980, 6
    %v2027 = vrot.slane %v2000, 4
    %v2028 = vrot.slane %v2020, 2
    %v2029 = vsel %vm280, %v1960, %v2026
    %v2030 = vsel %vm282, %v2027, %v2028
    %v2031 = vsel %vm284, %v2029, %v2030
    %v2033 = vadd.f32 %v1877, %v2031
    %v2034 = vmul.f32 %v2033, 0.5
    %v2035 = vtanh.pop %v2034
    %v2036 = vmul.f32 %v2035, 0.5
    %v2037 = vadd.f32 %v2036, 0.5
    %v2039 = vrot.slane %v2033, 2
    %v2041 = vmul.f32 %v2039, 0.5
    %v2042 = vtanh.pop %v2041
    %v2043 = vmul.f32 %v2042, 0.5
    %v2044 = vadd.f32 %v2043, 0.5
    %v2045 = vrot.slane %v2033, 4
    %v2047 = vtanh.pop %v2045
    %v2048 = vrot.slane %v2033, 6
    %v2050 = vmul.f32 %v2048, 0.5
    %v2051 = vtanh.pop %v2050
    %v2052 = vmul.f32 %v2051, 0.5
    %v2053 = vadd.f32 %v2052, 0.5
    %v2054 = vmul.f32 %v2044, 0.0
    %v2055 = vmul.f32 %v2037, %v2047
    %v2056 = vadd.f32 %v2054, %v2055
    %v2057 = vtanh.pop %v2056
    %v2058 = vmul.f32 %v2053, %v2057
    %v2059 = vld [vmem:[%s513] sm:$0xff]
    %2060 = vmatpush.msra.mxu0 %v1938
    %2061 = vmatpush.msra.mxu0 %v1934
    %2062 = vmatpush.msra.mxu0 %v1930
    %2063 = vmatpush.msra.mxu0 %v1926
    %2064 = vmatpush.msra.mxu0 %v1922
    %2065 = vmatpush.msra.mxu0 %v1918
    %2066 = vmatpush.msra.mxu0 %v1914
    %2067 = vmatpush.msra.mxu0 %v1910
    %2068 = vmatpush.msra.mxu0 %v1906
    %2069 = vmatpush.msra.mxu0 %v1902
    %2070 = vmatpush.msra.mxu0 %v1898
    %2071 = vmatpush.msra.mxu0 %v1894
    %2072 = vmatpush.msra.mxu0 %v1890
    %2073 = vmatpush.msra.mxu0 %v1886
    %2074 = vmatpush.msra.mxu0 %v1882
    %2075 = vmatpush.msra.mxu0 %v1878
    %2076 = vmatmul.f32.gmra.mxu0 %v2058
    %v2077 = vpop.f32.mrf.mxu0
    %v2078 = vadd.f32 0.0, %v2077
    %2079 = vdwg.mxu0
    %2080 = vmatpush.msra.mxu0 %v1939
    %2081 = vmatpush.msra.mxu0 %v1935
    %2082 = vmatpush.msra.mxu0 %v1931
    %2083 = vmatpush.msra.mxu0 %v1927
    %2084 = vmatpush.msra.mxu0 %v1923
    %2085 = vmatpush.msra.mxu0 %v1919
    %2086 = vmatpush.msra.mxu0 %v1915
    %2087 = vmatpush.msra.mxu0 %v1911
    %2088 = vmatpush.msra.mxu0 %v1907
    %2089 = vmatpush.msra.mxu0 %v1903
    %2090 = vmatpush.msra.mxu0 %v1899
    %2091 = vmatpush.msra.mxu0 %v1895
    %2092 = vmatpush.msra.mxu0 %v1891
    %2093 = vmatpush.msra.mxu0 %v1887
    %2094 = vmatpush.msra.mxu0 %v1883
    %2095 = vmatpush.msra.mxu0 %v1879
    %2096 = vmatmul.f32.gmra.mxu0 %v2058
    %v2097 = vpop.f32.mrf.mxu0
    %v2098 = vadd.f32 0.0, %v2097
    %2099 = vdwg.mxu0
    %2100 = vmatpush.msra.mxu0 %v1940
    %2101 = vmatpush.msra.mxu0 %v1936
    %2102 = vmatpush.msra.mxu0 %v1932
    %2103 = vmatpush.msra.mxu0 %v1928
    %2104 = vmatpush.msra.mxu0 %v1924
    %2105 = vmatpush.msra.mxu0 %v1920
    %2106 = vmatpush.msra.mxu0 %v1916
    %2107 = vmatpush.msra.mxu0 %v1912
    %2108 = vmatpush.msra.mxu0 %v1908
    %2109 = vmatpush.msra.mxu0 %v1904
    %2110 = vmatpush.msra.mxu0 %v1900
    %2111 = vmatpush.msra.mxu0 %v1896
    %2112 = vmatpush.msra.mxu0 %v1892
    %2113 = vmatpush.msra.mxu0 %v1888
    %2114 = vmatpush.msra.mxu0 %v1884
    %2115 = vmatpush.msra.mxu0 %v1880
    %2116 = vmatmul.f32.gmra.mxu0 %v2058
    %v2117 = vpop.f32.mrf.mxu0
    %v2118 = vadd.f32 0.0, %v2117
    %2119 = vdwg.mxu0
    %2120 = vmatpush.msra.mxu0 %v1941
    %2121 = vmatpush.msra.mxu0 %v1937
    %2122 = vmatpush.msra.mxu0 %v1933
    %2123 = vmatpush.msra.mxu0 %v1929
    %2124 = vmatpush.msra.mxu0 %v1925
    %2125 = vmatpush.msra.mxu0 %v1921
    %2126 = vmatpush.msra.mxu0 %v1917
    %2127 = vmatpush.msra.mxu0 %v1913
    %2128 = vmatpush.msra.mxu0 %v1909
    %2129 = vmatpush.msra.mxu0 %v1905
    %2130 = vmatpush.msra.mxu0 %v1901
    %2131 = vmatpush.msra.mxu0 %v1897
    %2132 = vmatpush.msra.mxu0 %v1893
    %2133 = vmatpush.msra.mxu0 %v1889
    %2134 = vmatpush.msra.mxu0 %v1885
    %2135 = vmatpush.msra.mxu0 %v1881
    %2136 = vmatmul.f32.gmra.mxu0 %v2058
    %v2137 = vpop.f32.mrf.mxu0
    %v2138 = vadd.f32 0.0, %v2137
    %2139 = vdwg.mxu0
    %v2144 = vrot.slane %v2098, 6
    %v2145 = vrot.slane %v2118, 4
    %v2146 = vrot.slane %v2138, 2
    %v2147 = vsel %vm280, %v2078, %v2144
    %v2148 = vsel %vm282, %v2145, %v2146
    %v2149 = vsel %vm284, %v2147, %v2148
    %v2151 = vadd.f32 %v2059, %v2149
    %v2152 = vmul.f32 %v2151, 0.5
    %v2153 = vtanh.pop %v2152
    %v2154 = vmul.f32 %v2153, 0.5
    %v2155 = vadd.f32 %v2154, 0.5
    %v2157 = vrot.slane %v2151, 2
    %v2159 = vmul.f32 %v2157, 0.5
    %v2160 = vtanh.pop %v2159
    %v2161 = vmul.f32 %v2160, 0.5
    %v2162 = vadd.f32 %v2161, 0.5
    %v2163 = vrot.slane %v2151, 4
    %v2165 = vtanh.pop %v2163
    %v2166 = vrot.slane %v2151, 6
    %v2168 = vmul.f32 %v2166, 0.5
    %v2169 = vtanh.pop %v2168
    %v2170 = vmul.f32 %v2169, 0.5
    %v2171 = vadd.f32 %v2170, 0.5
    %v2172 = vmul.f32 %v2162, %v2056
    %v2173 = vmul.f32 %v2155, %v2165
    %v2174 = vadd.f32 %v2172, %v2173
    %v2175 = vtanh.pop %v2174
    %v2176 = vmul.f32 %v2171, %v2175
    %v2177 = vld [vmem:[%s740] sm:$0xff]
    %2178 = vmatpush.msra.mxu0 %v1938
    %2179 = vmatpush.msra.mxu0 %v1934
    %2180 = vmatpush.msra.mxu0 %v1930
    %2181 = vmatpush.msra.mxu0 %v1926
    %2182 = vmatpush.msra.mxu0 %v1922
    %2183 = vmatpush.msra.mxu0 %v1918
    %2184 = vmatpush.msra.mxu0 %v1914
    %2185 = vmatpush.msra.mxu0 %v1910
    %2186 = vmatpush.msra.mxu0 %v1906
    %2187 = vmatpush.msra.mxu0 %v1902
    %2188 = vmatpush.msra.mxu0 %v1898
    %2189 = vmatpush.msra.mxu0 %v1894
    %2190 = vmatpush.msra.mxu0 %v1890
    %2191 = vmatpush.msra.mxu0 %v1886
    %2192 = vmatpush.msra.mxu0 %v1882
    %2193 = vmatpush.msra.mxu0 %v1878
    %2194 = vmatmul.f32.gmra.mxu0 %v2176
    %v2195 = vpop.f32.mrf.mxu0
    %v2196 = vadd.f32 0.0, %v2195
    %2197 = vdwg.mxu0
    %2198 = vmatpush.msra.mxu0 %v1939
    %2199 = vmatpush.msra.mxu0 %v1935
    %2200 = vmatpush.msra.mxu0 %v1931
    %2201 = vmatpush.msra.mxu0 %v1927
    %2202 = vmatpush.msra.mxu0 %v1923
    %2203 = vmatpush.msra.mxu0 %v1919
    %2204 = vmatpush.msra.mxu0 %v1915
    %2205 = vmatpush.msra.mxu0 %v1911
    %2206 = vmatpush.msra.mxu0 %v1907
    %2207 = vmatpush.msra.mxu0 %v1903
    %2208 = vmatpush.msra.mxu0 %v1899
    %2209 = vmatpush.msra.mxu0 %v1895
    %2210 = vmatpush.msra.mxu0 %v1891
    %2211 = vmatpush.msra.mxu0 %v1887
    %2212 = vmatpush.msra.mxu0 %v1883
    %2213 = vmatpush.msra.mxu0 %v1879
    %2214 = vmatmul.f32.gmra.mxu0 %v2176
    %v2215 = vpop.f32.mrf.mxu0
    %v2216 = vadd.f32 0.0, %v2215
    %2217 = vdwg.mxu0
    %2218 = vmatpush.msra.mxu0 %v1940
    %2219 = vmatpush.msra.mxu0 %v1936
    %2220 = vmatpush.msra.mxu0 %v1932
    %2221 = vmatpush.msra.mxu0 %v1928
    %2222 = vmatpush.msra.mxu0 %v1924
    %2223 = vmatpush.msra.mxu0 %v1920
    %2224 = vmatpush.msra.mxu0 %v1916
    %2225 = vmatpush.msra.mxu0 %v1912
    %2226 = vmatpush.msra.mxu0 %v1908
    %2227 = vmatpush.msra.mxu0 %v1904
    %2228 = vmatpush.msra.mxu0 %v1900
    %2229 = vmatpush.msra.mxu0 %v1896
    %2230 = vmatpush.msra.mxu0 %v1892
    %2231 = vmatpush.msra.mxu0 %v1888
    %2232 = vmatpush.msra.mxu0 %v1884
    %2233 = vmatpush.msra.mxu0 %v1880
    %2234 = vmatmul.f32.gmra.mxu0 %v2176
    %v2235 = vpop.f32.mrf.mxu0
    %v2236 = vadd.f32 0.0, %v2235
    %2237 = vdwg.mxu0
    %2238 = vmatpush.msra.mxu0 %v1941
    %2239 = vmatpush.msra.mxu0 %v1937
    %2240 = vmatpush.msra.mxu0 %v1933
    %2241 = vmatpush.msra.mxu0 %v1929
    %2242 = vmatpush.msra.mxu0 %v1925
    %2243 = vmatpush.msra.mxu0 %v1921
    %2244 = vmatpush.msra.mxu0 %v1917
    %2245 = vmatpush.msra.mxu0 %v1913
    %2246 = vmatpush.msra.mxu0 %v1909
    %2247 = vmatpush.msra.mxu0 %v1905
    %2248 = vmatpush.msra.mxu0 %v1901
    %2249 = vmatpush.msra.mxu0 %v1897
    %2250 = vmatpush.msra.mxu0 %v1893
    %2251 = vmatpush.msra.mxu0 %v1889
    %2252 = vmatpush.msra.mxu0 %v1885
    %2253 = vmatpush.msra.mxu0 %v1881
    %2254 = vmatmul.f32.gmra.mxu0 %v2176
    %v2255 = vpop.f32.mrf.mxu0
    %v2256 = vadd.f32 0.0, %v2255
    %2257 = vdwg.mxu0
    %v2262 = vrot.slane %v2216, 6
    %v2263 = vrot.slane %v2236, 4
    %v2264 = vrot.slane %v2256, 2
    %v2265 = vsel %vm280, %v2196, %v2262
    %v2266 = vsel %vm282, %v2263, %v2264
    %v2267 = vsel %vm284, %v2265, %v2266
    %v2269 = vadd.f32 %v2177, %v2267
    %v2270 = vmul.f32 %v2269, 0.5
    %v2271 = vtanh.pop %v2270
    %v2272 = vmul.f32 %v2271, 0.5
    %v2273 = vadd.f32 %v2272, 0.5
    %v2275 = vrot.slane %v2269, 2
    %v2277 = vmul.f32 %v2275, 0.5
    %v2278 = vtanh.pop %v2277
    %v2279 = vmul.f32 %v2278, 0.5
    %v2280 = vadd.f32 %v2279, 0.5
    %v2281 = vrot.slane %v2269, 4
    %v2283 = vtanh.pop %v2281
    %v2284 = vrot.slane %v2269, 6
    %v2286 = vmul.f32 %v2284, 0.5
    %v2287 = vtanh.pop %v2286
    %v2288 = vmul.f32 %v2287, 0.5
    %v2289 = vadd.f32 %v2288, 0.5
    %v2290 = vmul.f32 %v2280, %v2174
    %v2291 = vmul.f32 %v2273, %v2283
    %v2292 = vadd.f32 %v2290, %v2291
    %v2293 = vtanh.pop %v2292
    %v2294 = vmul.f32 %v2289, %v2293
    %v2295 = vld [vmem:[%s967] sm:$0xff]
    %2296 = vmatpush.msra.mxu0 %v1938
    %2297 = vmatpush.msra.mxu0 %v1934
    %2298 = vmatpush.msra.mxu0 %v1930
    %2299 = vmatpush.msra.mxu0 %v1926
    %2300 = vmatpush.msra.mxu0 %v1922
    %2301 = vmatpush.msra.mxu0 %v1918
    %2302 = vmatpush.msra.mxu0 %v1914
    %2303 = vmatpush.msra.mxu0 %v1910
    %2304 = vmatpush.msra.mxu0 %v1906
    %2305 = vmatpush.msra.mxu0 %v1902
    %2306 = vmatpush.msra.mxu0 %v1898
    %2307 = vmatpush.msra.mxu0 %v1894
    %2308 = vmatpush.msra.mxu0 %v1890
    %2309 = vmatpush.msra.mxu0 %v1886
    %2310 = vmatpush.msra.mxu0 %v1882
    %2311 = vmatpush.msra.mxu0 %v1878
    %2312 = vmatmul.f32.gmra.mxu0 %v2294
    %v2313 = vpop.f32.mrf.mxu0
    %v2314 = vadd.f32 0.0, %v2313
    %2315 = vdwg.mxu0
    %2316 = vmatpush.msra.mxu0 %v1939
    %2317 = vmatpush.msra.mxu0 %v1935
    %2318 = vmatpush.msra.mxu0 %v1931
    %2319 = vmatpush.msra.mxu0 %v1927
    %2320 = vmatpush.msra.mxu0 %v1923
    %2321 = vmatpush.msra.mxu0 %v1919
    %2322 = vmatpush.msra.mxu0 %v1915
    %2323 = vmatpush.msra.mxu0 %v1911
    %2324 = vmatpush.msra.mxu0 %v1907
    %2325 = vmatpush.msra.mxu0 %v1903
    %2326 = vmatpush.msra.mxu0 %v1899
    %2327 = vmatpush.msra.mxu0 %v1895
    %2328 = vmatpush.msra.mxu0 %v1891
    %2329 = vmatpush.msra.mxu0 %v1887
    %2330 = vmatpush.msra.mxu0 %v1883
    %2331 = vmatpush.msra.mxu0 %v1879
    %2332 = vmatmul.f32.gmra.mxu0 %v2294
    %v2333 = vpop.f32.mrf.mxu0
    %v2334 = vadd.f32 0.0, %v2333
    %2335 = vdwg.mxu0
    %2336 = vmatpush.msra.mxu0 %v1940
    %2337 = vmatpush.msra.mxu0 %v1936
    %2338 = vmatpush.msra.mxu0 %v1932
    %2339 = vmatpush.msra.mxu0 %v1928
    %2340 = vmatpush.msra.mxu0 %v1924
    %2341 = vmatpush.msra.mxu0 %v1920
    %2342 = vmatpush.msra.mxu0 %v1916
    %2343 = vmatpush.msra.mxu0 %v1912
    %2344 = vmatpush.msra.mxu0 %v1908
    %2345 = vmatpush.msra.mxu0 %v1904
    %2346 = vmatpush.msra.mxu0 %v1900
    %2347 = vmatpush.msra.mxu0 %v1896
    %2348 = vmatpush.msra.mxu0 %v1892
    %2349 = vmatpush.msra.mxu0 %v1888
    %2350 = vmatpush.msra.mxu0 %v1884
    %2351 = vmatpush.msra.mxu0 %v1880
    %2352 = vmatmul.f32.gmra.mxu0 %v2294
    %v2353 = vpop.f32.mrf.mxu0
    %v2354 = vadd.f32 0.0, %v2353
    %2355 = vdwg.mxu0
    %2356 = vmatpush.msra.mxu0 %v1941
    %2357 = vmatpush.msra.mxu0 %v1937
    %2358 = vmatpush.msra.mxu0 %v1933
    %2359 = vmatpush.msra.mxu0 %v1929
    %2360 = vmatpush.msra.mxu0 %v1925
    %2361 = vmatpush.msra.mxu0 %v1921
    %2362 = vmatpush.msra.mxu0 %v1917
    %2363 = vmatpush.msra.mxu0 %v1913
    %2364 = vmatpush.msra.mxu0 %v1909
    %2365 = vmatpush.msra.mxu0 %v1905
    %2366 = vmatpush.msra.mxu0 %v1901
    %2367 = vmatpush.msra.mxu0 %v1897
    %2368 = vmatpush.msra.mxu0 %v1893
    %2369 = vmatpush.msra.mxu0 %v1889
    %2370 = vmatpush.msra.mxu0 %v1885
    %2371 = vmatpush.msra.mxu0 %v1881
    %2372 = vmatmul.f32.gmra.mxu0 %v2294
    %v2373 = vpop.f32.mrf.mxu0
    %v2374 = vadd.f32 0.0, %v2373
    %2375 = vdwg.mxu0
    %v2380 = vrot.slane %v2334, 6
    %v2381 = vrot.slane %v2354, 4
    %v2382 = vrot.slane %v2374, 2
    %v2383 = vsel %vm280, %v2314, %v2380
    %v2384 = vsel %vm282, %v2381, %v2382
    %v2385 = vsel %vm284, %v2383, %v2384
    %v2387 = vadd.f32 %v2295, %v2385
    %v2388 = vmul.f32 %v2387, 0.5
    %v2389 = vtanh.pop %v2388
    %v2390 = vmul.f32 %v2389, 0.5
    %v2391 = vadd.f32 %v2390, 0.5
    %v2393 = vrot.slane %v2387, 2
    %v2395 = vmul.f32 %v2393, 0.5
    %v2396 = vtanh.pop %v2395
    %v2397 = vmul.f32 %v2396, 0.5
    %v2398 = vadd.f32 %v2397, 0.5
    %v2399 = vrot.slane %v2387, 4
    %v2401 = vtanh.pop %v2399
    %v2402 = vrot.slane %v2387, 6
    %v2404 = vmul.f32 %v2402, 0.5
    %v2405 = vtanh.pop %v2404
    %v2406 = vmul.f32 %v2405, 0.5
    %v2407 = vadd.f32 %v2406, 0.5
    %v2408 = vmul.f32 %v2398, %v2292
    %v2409 = vmul.f32 %v2391, %v2401
    %v2410 = vadd.f32 %v2408, %v2409
    %v2411 = vtanh.pop %v2410
    %v2412 = vmul.f32 %v2407, %v2411
    %v2413 = vld [vmem:[%s1194] sm:$0xff]
    %2414 = vmatpush.msra.mxu0 %v1938
    %2415 = vmatpush.msra.mxu0 %v1934
    %2416 = vmatpush.msra.mxu0 %v1930
    %2417 = vmatpush.msra.mxu0 %v1926
    %2418 = vmatpush.msra.mxu0 %v1922
    %2419 = vmatpush.msra.mxu0 %v1918
    %2420 = vmatpush.msra.mxu0 %v1914
    %2421 = vmatpush.msra.mxu0 %v1910
    %2422 = vmatpush.msra.mxu0 %v1906
    %2423 = vmatpush.msra.mxu0 %v1902
    %2424 = vmatpush.msra.mxu0 %v1898
    %2425 = vmatpush.msra.mxu0 %v1894
    %2426 = vmatpush.msra.mxu0 %v1890
    %2427 = vmatpush.msra.mxu0 %v1886
    %2428 = vmatpush.msra.mxu0 %v1882
    %2429 = vmatpush.msra.mxu0 %v1878
    %2430 = vmatmul.f32.gmra.mxu0 %v2412
    %v2431 = vpop.f32.mrf.mxu0
    %v2432 = vadd.f32 0.0, %v2431
    %2433 = vdwg.mxu0
    %2434 = vmatpush.msra.mxu0 %v1939
    %2435 = vmatpush.msra.mxu0 %v1935
    %2436 = vmatpush.msra.mxu0 %v1931
    %2437 = vmatpush.msra.mxu0 %v1927
    %2438 = vmatpush.msra.mxu0 %v1923
    %2439 = vmatpush.msra.mxu0 %v1919
    %2440 = vmatpush.msra.mxu0 %v1915
    %2441 = vmatpush.msra.mxu0 %v1911
    %2442 = vmatpush.msra.mxu0 %v1907
    %2443 = vmatpush.msra.mxu0 %v1903
    %2444 = vmatpush.msra.mxu0 %v1899
    %2445 = vmatpush.msra.mxu0 %v1895
    %2446 = vmatpush.msra.mxu0 %v1891
    %2447 = vmatpush.msra.mxu0 %v1887
    %2448 = vmatpush.msra.mxu0 %v1883
    %2449 = vmatpush.msra.mxu0 %v1879
    %2450 = vmatmul.f32.gmra.mxu0 %v2412
    %v2451 = vpop.f32.mrf.mxu0
    %v2452 = vadd.f32 0.0, %v2451
    %2453 = vdwg.mxu0
    %2454 = vmatpush.msra.mxu0 %v1940
    %2455 = vmatpush.msra.mxu0 %v1936
    %2456 = vmatpush.msra.mxu0 %v1932
    %2457 = vmatpush.msra.mxu0 %v1928
    %2458 = vmatpush.msra.mxu0 %v1924
    %2459 = vmatpush.msra.mxu0 %v1920
    %2460 = vmatpush.msra.mxu0 %v1916
    %2461 = vmatpush.msra.mxu0 %v1912
    %2462 = vmatpush.msra.mxu0 %v1908
    %2463 = vmatpush.msra.mxu0 %v1904
    %2464 = vmatpush.msra.mxu0 %v1900
    %2465 = vmatpush.msra.mxu0 %v1896
    %2466 = vmatpush.msra.mxu0 %v1892
    %2467 = vmatpush.msra.mxu0 %v1888
    %2468 = vmatpush.msra.mxu0 %v1884
    %2469 = vmatpush.msra.mxu0 %v1880
    %2470 = vmatmul.f32.gmra.mxu0 %v2412
    %v2471 = vpop.f32.mrf.mxu0
    %v2472 = vadd.f32 0.0, %v2471
    %2473 = vdwg.mxu0
    %2474 = vmatpush.msra.mxu0 %v1941
    %2475 = vmatpush.msra.mxu0 %v1937
    %2476 = vmatpush.msra.mxu0 %v1933
    %2477 = vmatpush.msra.mxu0 %v1929
    %2478 = vmatpush.msra.mxu0 %v1925
    %2479 = vmatpush.msra.mxu0 %v1921
    %2480 = vmatpush.msra.mxu0 %v1917
    %2481 = vmatpush.msra.mxu0 %v1913
    %2482 = vmatpush.msra.mxu0 %v1909
    %2483 = vmatpush.msra.mxu0 %v1905
    %2484 = vmatpush.msra.mxu0 %v1901
    %2485 = vmatpush.msra.mxu0 %v1897
    %2486 = vmatpush.msra.mxu0 %v1893
    %2487 = vmatpush.msra.mxu0 %v1889
    %2488 = vmatpush.msra.mxu0 %v1885
    %2489 = vmatpush.msra.mxu0 %v1881
    %2490 = vmatmul.f32.gmra.mxu0 %v2412
    %v2491 = vpop.f32.mrf.mxu0
    %v2492 = vadd.f32 0.0, %v2491
    %2493 = vdwg.mxu0
    %v2498 = vrot.slane %v2452, 6
    %v2499 = vrot.slane %v2472, 4
    %v2500 = vrot.slane %v2492, 2
    %v2501 = vsel %vm280, %v2432, %v2498
    %v2502 = vsel %vm282, %v2499, %v2500
    %v2503 = vsel %vm284, %v2501, %v2502
    %v2505 = vadd.f32 %v2413, %v2503
    %v2506 = vmul.f32 %v2505, 0.5
    %v2507 = vtanh.pop %v2506
    %v2508 = vmul.f32 %v2507, 0.5
    %v2509 = vadd.f32 %v2508, 0.5
    %v2511 = vrot.slane %v2505, 2
    %v2513 = vmul.f32 %v2511, 0.5
    %v2514 = vtanh.pop %v2513
    %v2515 = vmul.f32 %v2514, 0.5
    %v2516 = vadd.f32 %v2515, 0.5
    %v2517 = vrot.slane %v2505, 4
    %v2519 = vtanh.pop %v2517
    %v2520 = vrot.slane %v2505, 6
    %v2522 = vmul.f32 %v2520, 0.5
    %v2523 = vtanh.pop %v2522
    %v2524 = vmul.f32 %v2523, 0.5
    %v2525 = vadd.f32 %v2524, 0.5
    %v2526 = vmul.f32 %v2516, %v2410
    %v2527 = vmul.f32 %v2509, %v2519
    %v2528 = vadd.f32 %v2526, %v2527
    %v2529 = vtanh.pop %v2528
    %v2530 = vmul.f32 %v2525, %v2529
    %v2531 = vld [vmem:[%s1421] sm:$0xff]
    %2532 = vmatpush.msra.mxu0 %v1938
    %2533 = vmatpush.msra.mxu0 %v1934
    %2534 = vmatpush.msra.mxu0 %v1930
    %2535 = vmatpush.msra.mxu0 %v1926
    %2536 = vmatpush.msra.mxu0 %v1922
    %2537 = vmatpush.msra.mxu0 %v1918
    %2538 = vmatpush.msra.mxu0 %v1914
    %2539 = vmatpush.msra.mxu0 %v1910
    %2540 = vmatpush.msra.mxu0 %v1906
    %2541 = vmatpush.msra.mxu0 %v1902
    %2542 = vmatpush.msra.mxu0 %v1898
    %2543 = vmatpush.msra.mxu0 %v1894
    %2544 = vmatpush.msra.mxu0 %v1890
    %2545 = vmatpush.msra.mxu0 %v1886
    %2546 = vmatpush.msra.mxu0 %v1882
    %2547 = vmatpush.msra.mxu0 %v1878
    %2548 = vmatmul.f32.gmra.mxu0 %v2530
    %v2549 = vpop.f32.mrf.mxu0
    %v2550 = vadd.f32 0.0, %v2549
    %2551 = vdwg.mxu0
    %2552 = vmatpush.msra.mxu0 %v1939
    %2553 = vmatpush.msra.mxu0 %v1935
    %2554 = vmatpush.msra.mxu0 %v1931
    %2555 = vmatpush.msra.mxu0 %v1927
    %2556 = vmatpush.msra.mxu0 %v1923
    %2557 = vmatpush.msra.mxu0 %v1919
    %2558 = vmatpush.msra.mxu0 %v1915
    %2559 = vmatpush.msra.mxu0 %v1911
    %2560 = vmatpush.msra.mxu0 %v1907
    %2561 = vmatpush.msra.mxu0 %v1903
    %2562 = vmatpush.msra.mxu0 %v1899
    %2563 = vmatpush.msra.mxu0 %v1895
    %2564 = vmatpush.msra.mxu0 %v1891
    %2565 = vmatpush.msra.mxu0 %v1887
    %2566 = vmatpush.msra.mxu0 %v1883
    %2567 = vmatpush.msra.mxu0 %v1879
    %2568 = vmatmul.f32.gmra.mxu0 %v2530
    %v2569 = vpop.f32.mrf.mxu0
    %v2570 = vadd.f32 0.0, %v2569
    %2571 = vdwg.mxu0
    %2572 = vmatpush.msra.mxu0 %v1940
    %2573 = vmatpush.msra.mxu0 %v1936
    %2574 = vmatpush.msra.mxu0 %v1932
    %2575 = vmatpush.msra.mxu0 %v1928
    %2576 = vmatpush.msra.mxu0 %v1924
    %2577 = vmatpush.msra.mxu0 %v1920
    %2578 = vmatpush.msra.mxu0 %v1916
    %2579 = vmatpush.msra.mxu0 %v1912
    %2580 = vmatpush.msra.mxu0 %v1908
    %2581 = vmatpush.msra.mxu0 %v1904
    %2582 = vmatpush.msra.mxu0 %v1900
    %2583 = vmatpush.msra.mxu0 %v1896
    %2584 = vmatpush.msra.mxu0 %v1892
    %2585 = vmatpush.msra.mxu0 %v1888
    %2586 = vmatpush.msra.mxu0 %v1884
    %2587 = vmatpush.msra.mxu0 %v1880
    %2588 = vmatmul.f32.gmra.mxu0 %v2530
    %v2589 = vpop.f32.mrf.mxu0
    %v2590 = vadd.f32 0.0, %v2589
    %2591 = vdwg.mxu0
    %2592 = vmatpush.msra.mxu0 %v1941
    %2593 = vmatpush.msra.mxu0 %v1937
    %2594 = vmatpush.msra.mxu0 %v1933
    %2595 = vmatpush.msra.mxu0 %v1929
    %2596 = vmatpush.msra.mxu0 %v1925
    %2597 = vmatpush.msra.mxu0 %v1921
    %2598 = vmatpush.msra.mxu0 %v1917
    %2599 = vmatpush.msra.mxu0 %v1913
    %2600 = vmatpush.msra.mxu0 %v1909
    %2601 = vmatpush.msra.mxu0 %v1905
    %2602 = vmatpush.msra.mxu0 %v1901
    %2603 = vmatpush.msra.mxu0 %v1897
    %2604 = vmatpush.msra.mxu0 %v1893
    %2605 = vmatpush.msra.mxu0 %v1889
    %2606 = vmatpush.msra.mxu0 %v1885
    %2607 = vmatpush.msra.mxu0 %v1881
    %2608 = vmatmul.f32.gmra.mxu0 %v2530
    %v2609 = vpop.f32.mrf.mxu0
    %v2610 = vadd.f32 0.0, %v2609
    %2611 = vdwg.mxu0
    %v2616 = vrot.slane %v2570, 6
    %v2617 = vrot.slane %v2590, 4
    %v2618 = vrot.slane %v2610, 2
    %v2619 = vsel %vm280, %v2550, %v2616
    %v2620 = vsel %vm282, %v2617, %v2618
    %v2621 = vsel %vm284, %v2619, %v2620
    %v2623 = vadd.f32 %v2531, %v2621
    %v2624 = vmul.f32 %v2623, 0.5
    %v2625 = vtanh.pop %v2624
    %v2626 = vmul.f32 %v2625, 0.5
    %v2627 = vadd.f32 %v2626, 0.5
    %v2629 = vrot.slane %v2623, 2
    %v2631 = vmul.f32 %v2629, 0.5
    %v2632 = vtanh.pop %v2631
    %v2633 = vmul.f32 %v2632, 0.5
    %v2634 = vadd.f32 %v2633, 0.5
    %v2635 = vrot.slane %v2623, 4
    %v2637 = vtanh.pop %v2635
    %v2638 = vrot.slane %v2623, 6
    %v2640 = vmul.f32 %v2638, 0.5
    %v2641 = vtanh.pop %v2640
    %v2642 = vmul.f32 %v2641, 0.5
    %v2643 = vadd.f32 %v2642, 0.5
    %v2644 = vmul.f32 %v2634, %v2528
    %v2645 = vmul.f32 %v2627, %v2637
    %v2646 = vadd.f32 %v2644, %v2645
    %v2647 = vtanh.pop %v2646
    %v2648 = vmul.f32 %v2643, %v2647
    %v2649 = vld [vmem:[%s1648] sm:$0xff]
    %2650 = vmatpush.msra.mxu0 %v1938
    %2651 = vmatpush.msra.mxu0 %v1934
    %2652 = vmatpush.msra.mxu0 %v1930
    %2653 = vmatpush.msra.mxu0 %v1926
    %2654 = vmatpush.msra.mxu0 %v1922
    %2655 = vmatpush.msra.mxu0 %v1918
    %2656 = vmatpush.msra.mxu0 %v1914
    %2657 = vmatpush.msra.mxu0 %v1910
    %2658 = vmatpush.msra.mxu0 %v1906
    %2659 = vmatpush.msra.mxu0 %v1902
    %2660 = vmatpush.msra.mxu0 %v1898
    %2661 = vmatpush.msra.mxu0 %v1894
    %2662 = vmatpush.msra.mxu0 %v1890
    %2663 = vmatpush.msra.mxu0 %v1886
    %2664 = vmatpush.msra.mxu0 %v1882
    %2665 = vmatpush.msra.mxu0 %v1878
    %2666 = vmatmul.f32.gmra.mxu0 %v2648
    %v2667 = vpop.f32.mrf.mxu0
    %v2668 = vadd.f32 0.0, %v2667
    %2669 = vdwg.mxu0
    %2670 = vmatpush.msra.mxu0 %v1939
    %2671 = vmatpush.msra.mxu0 %v1935
    %2672 = vmatpush.msra.mxu0 %v1931
    %2673 = vmatpush.msra.mxu0 %v1927
    %2674 = vmatpush.msra.mxu0 %v1923
    %2675 = vmatpush.msra.mxu0 %v1919
    %2676 = vmatpush.msra.mxu0 %v1915
    %2677 = vmatpush.msra.mxu0 %v1911
    %2678 = vmatpush.msra.mxu0 %v1907
    %2679 = vmatpush.msra.mxu0 %v1903
    %2680 = vmatpush.msra.mxu0 %v1899
    %2681 = vmatpush.msra.mxu0 %v1895
    %2682 = vmatpush.msra.mxu0 %v1891
    %2683 = vmatpush.msra.mxu0 %v1887
    %2684 = vmatpush.msra.mxu0 %v1883
    %2685 = vmatpush.msra.mxu0 %v1879
    %2686 = vmatmul.f32.gmra.mxu0 %v2648
    %v2687 = vpop.f32.mrf.mxu0
    %v2688 = vadd.f32 0.0, %v2687
    %2689 = vdwg.mxu0
    %2690 = vmatpush.msra.mxu0 %v1940
    %2691 = vmatpush.msra.mxu0 %v1936
    %2692 = vmatpush.msra.mxu0 %v1932
    %2693 = vmatpush.msra.mxu0 %v1928
    %2694 = vmatpush.msra.mxu0 %v1924
    %2695 = vmatpush.msra.mxu0 %v1920
    %2696 = vmatpush.msra.mxu0 %v1916
    %2697 = vmatpush.msra.mxu0 %v1912
    %2698 = vmatpush.msra.mxu0 %v1908
    %2699 = vmatpush.msra.mxu0 %v1904
    %2700 = vmatpush.msra.mxu0 %v1900
    %2701 = vmatpush.msra.mxu0 %v1896
    %2702 = vmatpush.msra.mxu0 %v1892
    %2703 = vmatpush.msra.mxu0 %v1888
    %2704 = vmatpush.msra.mxu0 %v1884
    %2705 = vmatpush.msra.mxu0 %v1880
    %2706 = vmatmul.f32.gmra.mxu0 %v2648
    %v2707 = vpop.f32.mrf.mxu0
    %v2708 = vadd.f32 0.0, %v2707
    %2709 = vdwg.mxu0
    %2710 = vmatpush.msra.mxu0 %v1941
    %2711 = vmatpush.msra.mxu0 %v1937
    %2712 = vmatpush.msra.mxu0 %v1933
    %2713 = vmatpush.msra.mxu0 %v1929
    %2714 = vmatpush.msra.mxu0 %v1925
    %2715 = vmatpush.msra.mxu0 %v1921
    %2716 = vmatpush.msra.mxu0 %v1917
    %2717 = vmatpush.msra.mxu0 %v1913
    %2718 = vmatpush.msra.mxu0 %v1909
    %2719 = vmatpush.msra.mxu0 %v1905
    %2720 = vmatpush.msra.mxu0 %v1901
    %2721 = vmatpush.msra.mxu0 %v1897
    %2722 = vmatpush.msra.mxu0 %v1893
    %2723 = vmatpush.msra.mxu0 %v1889
    %2724 = vmatpush.msra.mxu0 %v1885
    %2725 = vmatpush.msra.mxu0 %v1881
    %2726 = vmatmul.f32.gmra.mxu0 %v2648
    %v2727 = vpop.f32.mrf.mxu0
    %v2728 = vadd.f32 0.0, %v2727
    %2729 = vdwg.mxu0
    %v2734 = vrot.slane %v2688, 6
    %v2735 = vrot.slane %v2708, 4
    %v2736 = vrot.slane %v2728, 2
    %v2737 = vsel %vm280, %v2668, %v2734
    %v2738 = vsel %vm282, %v2735, %v2736
    %v2739 = vsel %vm284, %v2737, %v2738
    %v2741 = vadd.f32 %v2649, %v2739
    %v2742 = vmul.f32 %v2741, 0.5
    %v2743 = vtanh.pop %v2742
    %v2744 = vmul.f32 %v2743, 0.5
    %v2745 = vadd.f32 %v2744, 0.5
    %v2747 = vrot.slane %v2741, 2
    %v2749 = vmul.f32 %v2747, 0.5
    %v2750 = vtanh.pop %v2749
    %v2751 = vmul.f32 %v2750, 0.5
    %v2752 = vadd.f32 %v2751, 0.5
    %v2753 = vrot.slane %v2741, 4
    %v2755 = vtanh.pop %v2753
    %v2756 = vrot.slane %v2741, 6
    %v2758 = vmul.f32 %v2756, 0.5
    %v2759 = vtanh.pop %v2758
    %v2760 = vmul.f32 %v2759, 0.5
    %v2761 = vadd.f32 %v2760, 0.5
    %v2762 = vmul.f32 %v2752, %v2646
    %v2763 = vmul.f32 %v2745, %v2755
    %v2764 = vadd.f32 %v2762, %v2763
    %v2765 = vtanh.pop %v2764
    %v2766 = vmul.f32 %v2761, %v2765
    %v2767 = vld [vmem:[%s1875] sm:$0xff]
    %2768 = vmatpush.msra.mxu0 %v1938
    %2769 = vmatpush.msra.mxu0 %v1934
    %2770 = vmatpush.msra.mxu0 %v1930
    %2771 = vmatpush.msra.mxu0 %v1926
    %2772 = vmatpush.msra.mxu0 %v1922
    %2773 = vmatpush.msra.mxu0 %v1918
    %2774 = vmatpush.msra.mxu0 %v1914
    %2775 = vmatpush.msra.mxu0 %v1910
    %2776 = vmatpush.msra.mxu0 %v1906
    %2777 = vmatpush.msra.mxu0 %v1902
    %2778 = vmatpush.msra.mxu0 %v1898
    %2779 = vmatpush.msra.mxu0 %v1894
    %2780 = vmatpush.msra.mxu0 %v1890
    %2781 = vmatpush.msra.mxu0 %v1886
    %2782 = vmatpush.msra.mxu0 %v1882
    %2783 = vmatpush.msra.mxu0 %v1878
    %2784 = vmatmul.f32.gmra.mxu0 %v2766
    %v2785 = vpop.f32.mrf.mxu0
    %v2786 = vadd.f32 0.0, %v2785
    %2787 = vdwg.mxu0
    %2788 = vmatpush.msra.mxu0 %v1939
    %2789 = vmatpush.msra.mxu0 %v1935
    %2790 = vmatpush.msra.mxu0 %v1931
    %2791 = vmatpush.msra.mxu0 %v1927
    %2792 = vmatpush.msra.mxu0 %v1923
    %2793 = vmatpush.msra.mxu0 %v1919
    %2794 = vmatpush.msra.mxu0 %v1915
    %2795 = vmatpush.msra.mxu0 %v1911
    %2796 = vmatpush.msra.mxu0 %v1907
    %2797 = vmatpush.msra.mxu0 %v1903
    %2798 = vmatpush.msra.mxu0 %v1899
    %2799 = vmatpush.msra.mxu0 %v1895
    %2800 = vmatpush.msra.mxu0 %v1891
    %2801 = vmatpush.msra.mxu0 %v1887
    %2802 = vmatpush.msra.mxu0 %v1883
    %2803 = vmatpush.msra.mxu0 %v1879
    %2804 = vmatmul.f32.gmra.mxu0 %v2766
    %v2805 = vpop.f32.mrf.mxu0
    %v2806 = vadd.f32 0.0, %v2805
    %2807 = vdwg.mxu0
    %2808 = vmatpush.msra.mxu0 %v1940
    %2809 = vmatpush.msra.mxu0 %v1936
    %2810 = vmatpush.msra.mxu0 %v1932
    %2811 = vmatpush.msra.mxu0 %v1928
    %2812 = vmatpush.msra.mxu0 %v1924
    %2813 = vmatpush.msra.mxu0 %v1920
    %2814 = vmatpush.msra.mxu0 %v1916
    %2815 = vmatpush.msra.mxu0 %v1912
    %2816 = vmatpush.msra.mxu0 %v1908
    %2817 = vmatpush.msra.mxu0 %v1904
    %2818 = vmatpush.msra.mxu0 %v1900
    %2819 = vmatpush.msra.mxu0 %v1896
    %2820 = vmatpush.msra.mxu0 %v1892
    %2821 = vmatpush.msra.mxu0 %v1888
    %2822 = vmatpush.msra.mxu0 %v1884
    %2823 = vmatpush.msra.mxu0 %v1880
    %2824 = vmatmul.f32.gmra.mxu0 %v2766
    %v2825 = vpop.f32.mrf.mxu0
    %v2826 = vadd.f32 0.0, %v2825
    %2827 = vdwg.mxu0
    %2828 = vmatpush.msra.mxu0 %v1941
    %2829 = vmatpush.msra.mxu0 %v1937
    %2830 = vmatpush.msra.mxu0 %v1933
    %2831 = vmatpush.msra.mxu0 %v1929
    %2832 = vmatpush.msra.mxu0 %v1925
    %2833 = vmatpush.msra.mxu0 %v1921
    %2834 = vmatpush.msra.mxu0 %v1917
    %2835 = vmatpush.msra.mxu0 %v1913
    %2836 = vmatpush.msra.mxu0 %v1909
    %2837 = vmatpush.msra.mxu0 %v1905
    %2838 = vmatpush.msra.mxu0 %v1901
    %2839 = vmatpush.msra.mxu0 %v1897
    %2840 = vmatpush.msra.mxu0 %v1893
    %2841 = vmatpush.msra.mxu0 %v1889
    %2842 = vmatpush.msra.mxu0 %v1885
    %2843 = vmatpush.msra.mxu0 %v1881
    %2844 = vmatmul.f32.gmra.mxu0 %v2766
    %v2845 = vpop.f32.mrf.mxu0
    %v2846 = vadd.f32 0.0, %v2845
    %2847 = vdwg.mxu0
    %v2852 = vrot.slane %v2806, 6
    %v2853 = vrot.slane %v2826, 4
    %v2854 = vrot.slane %v2846, 2
    %v2855 = vsel %vm280, %v2786, %v2852
    %v2856 = vsel %vm282, %v2853, %v2854
    %v2857 = vsel %vm284, %v2855, %v2856
    %v2859 = vadd.f32 %v2767, %v2857
    %v2860 = vmul.f32 %v2859, 0.5
    %v2861 = vtanh.pop %v2860
    %v2862 = vmul.f32 %v2861, 0.5
    %v2863 = vadd.f32 %v2862, 0.5
    %v2865 = vrot.slane %v2859, 2
    %v2867 = vmul.f32 %v2865, 0.5
    %v2868 = vtanh.pop %v2867
    %v2869 = vmul.f32 %v2868, 0.5
    %v2870 = vadd.f32 %v2869, 0.5
    %v2871 = vrot.slane %v2859, 4
    %v2873 = vtanh.pop %v2871
    %v2874 = vrot.slane %v2859, 6
    %v2876 = vmul.f32 %v2874, 0.5
    %v2877 = vtanh.pop %v2876
    %v2878 = vmul.f32 %v2877, 0.5
    %v2879 = vadd.f32 %v2878, 0.5
    %v2880 = vmul.f32 %v2870, %v2764
    %v2881 = vmul.f32 %v2863, %v2873
    %v2882 = vadd.f32 %v2880, %v2881
    %v2883 = vtanh.pop %v2882
    %v2884 = vmul.f32 %v2879, %v2883
    %v2885 = vld [vmem:[#allocation5] sm:$0xff]
    %v2886 = vld [vmem:[#allocation5 + $0x8] sm:$0xff]
    %v2887 = vld [vmem:[#allocation5 + $0x10] sm:$0xff]
    %v2888 = vld [vmem:[#allocation5 + $0x18] sm:$0xff]
    %v2889 = vld [vmem:[#allocation5 + $0x20] sm:$0xff]
    %v2890 = vld [vmem:[#allocation5 + $0x28] sm:$0xff]
    %v2891 = vld [vmem:[#allocation5 + $0x30] sm:$0xff]
    %v2892 = vld [vmem:[#allocation5 + $0x38] sm:$0xff]
    %v2893 = vld [vmem:[#allocation5 + $0x40] sm:$0xff]
    %v2894 = vld [vmem:[#allocation5 + $0x48] sm:$0xff]
    %v2895 = vld [vmem:[#allocation5 + $0x50] sm:$0xff]
    %v2896 = vld [vmem:[#allocation5 + $0x58] sm:$0xff]
    %v2897 = vld [vmem:[#allocation5 + $0x60] sm:$0xff]
    %v2898 = vld [vmem:[#allocation5 + $0x68] sm:$0xff]
    %v2899 = vld [vmem:[#allocation5 + $0x70] sm:$0xff]
    %v2900 = vld [vmem:[#allocation5 + $0x78] sm:$0xff]
    %v2901 = vld [vmem:[%s5] sm:$0x1]
    %v2903 = vperm.slane %v2901, 0
    %2905 = vmatpush.msra.mxu0 %v2900
    %2906 = vmatpush.msra.mxu0 %v2899
    %2907 = vmatpush.msra.mxu0 %v2898
    %2908 = vmatpush.msra.mxu0 %v2897
    %2909 = vmatpush.msra.mxu0 %v2896
    %2910 = vmatpush.msra.mxu0 %v2895
    %2911 = vmatpush.msra.mxu0 %v2894
    %2912 = vmatpush.msra.mxu0 %v2893
    %2913 = vmatpush.msra.mxu0 %v2892
    %2914 = vmatpush.msra.mxu0 %v2891
    %2915 = vmatpush.msra.mxu0 %v2890
    %2916 = vmatpush.msra.mxu0 %v2889
    %2917 = vmatpush.msra.mxu0 %v2888
    %2918 = vmatpush.msra.mxu0 %v2887
    %2919 = vmatpush.msra.mxu0 %v2886
    %2920 = vmatpush.msra.mxu0 %v2885
    %2921 = vmatmul.f32.gmra.mxu0 %v2884
    %v2922 = vpop.f32.mrf.mxu0
    %v2923 = vadd.f32 %v2903, %v2922
    %2924 = vdwg.mxu0
    %v2925 = vmul.f32 %v2923, 0.5
    %v2926 = vtanh.pop %v2925
    %v2927 = vmul.f32 %v2926, 0.5
    %v2928 = vadd.f32 %v2927, 0.5
    %2929 = vst [vmem:[%s6] sm:$0x3] %v2928
    // Predicated region
    $region34: #{lstm_model_forward.1} parent=1 // pred_check
      _
    $region35: #{lstm_model_forward.1} parent=1 // pred_check_branch
      %2931 = sbr.rel (0) target = $region37
    $region36: #{lstm_model_forward.1} parent=1 // pred_region
      _
    $region37: #{lstm_model_forward.1} parent=1 // pred_fallthru
      _
    // Predicated region
    $region38: #{lstm_model_forward.1} parent=1 // pred_check
      _
    $region39: #{lstm_model_forward.1} parent=1 // pred_check_branch
      %2933 = sbr.rel (0) target = $region41
    $region40: #{lstm_model_forward.1} parent=1 // pred_region
      _
    $region41: #{lstm_model_forward.1} parent=1 // pred_fallthru
      _
    %2934 = vsyncpa [#allocation4], 1
    %2935 = vsyncpa [#allocation6], 1

</llo_original>
